<compile_context>
chip_gen: v6e
topology: v6e:2x2x1
jax: 0.10.0
libtpu: 0.0.40
codegen_flags: <defaults>
</compile_context>

<pallas_src>
import jax
import jax.numpy as jnp
from jax.experimental import pallas as pl
from jax.experimental.pallas import tpu as pltpu


# ---------------------------------------------------------------------------
# Small constant matrices built in the wrapper (loaded into VMEM once).
# ---------------------------------------------------------------------------
def _interp_matrix(out_size, in_size):
    # PyTorch bilinear, align_corners=False half-pixel source convention.
    i = jnp.arange(out_size, dtype=jnp.float32)
    scale = in_size / out_size
    src = jnp.maximum((i + 0.5) * scale - 0.5, 0.0)
    i0 = jnp.floor(src)
    w1 = src - i0
    i0i = i0.astype(jnp.int32)
    i1i = jnp.minimum(i0i + 1, in_size - 1)
    w0 = 1.0 - w1
    m0 = jax.nn.one_hot(i0i, in_size, dtype=jnp.float32) * w0[:, None]
    m1 = jax.nn.one_hot(i1i, in_size, dtype=jnp.float32) * w1[:, None]
    return m0 + m1                                   # (out_size, in_size)


def _pool_matrix(h, w):
    # AvgPool2d(kernel=2, stride=2) as a per-image (HW, HW/4) matrix.
    hw = h * w
    w2 = w // 2
    p = jnp.arange(hw)
    q = (p // w // 2) * w2 + (p % w) // 2
    return jax.nn.one_hot(q, (h // 2) * (w // 2), dtype=jnp.float32) * 0.25


def _row_select_matrix(h, w):
    # S[y, y'*w + x] = 1 iff y' == y.  Used to "unflatten" the final flat
    # single-channel map into (H, W) via select + matmul (no in-kernel reshape).
    p = jnp.arange(h * w) // w
    return (jnp.arange(h)[:, None] == p[None, :]).astype(jnp.float32)


# ---------------------------------------------------------------------------
# Fused whole-network kernel (one grid step = B images).
# ---------------------------------------------------------------------------
def _make_fused_cnn_kernel(cfgs, b_blk, final_hw, out_size):
    hf, wf = final_hw
    hwf = hf * wf

    def kernel(*refs):
        pos = 0
        x_ref = refs[pos]; pos += 1
        layer_refs = []
        for cfg in cfgs:
            w_ref, b_ref, yx_ref = refs[pos], refs[pos + 1], refs[pos + 2]
            pos += 3
            pm_ref = None
            if cfg["pool"]:
                pm_ref = refs[pos]; pos += 1
            layer_refs.append((w_ref, b_ref, yx_ref, pm_ref))
        ah_ref, awt_ref, rsel_ref = refs[pos], refs[pos + 1], refs[pos + 2]
        pos += 3
        o_ref = refs[pos]

        a = x_ref[...]                                    # (C0, B*H0*W0) f32
        for cfg, (w_ref, b_ref, yx_ref, pm_ref) in zip(cfgs, layer_refs):
            H, W = cfg["H"], cfg["W"]
            hw = H * W
            bhw = b_blk * hw
            cout = cfg["cout"]

            # Per-pixel (y, x) coordinates (tiled over the B packed images).
            ys = yx_ref[0:1, :]                           # (1, B*HW) int32
            xs = yx_ref[1:2, :]
            row_ok = (ys >= 1, None, ys <= H - 2)         # dy = 0, 1, 2
            col_ok = (xs >= 1, None, xs <= W - 2)         # dx = 0, 1, 2

            # Direct 3x3 conv: 9 rolled+masked taps, each a small MXU matmul.
            # The masks both implement the zero-padding halo and block any
            # read that would cross a packed-image boundary.
            a_bf = a.astype(jnp.bfloat16)
            acc = jnp.zeros((cout, bhw), jnp.float32)
            for dy in range(3):
                for dx in range(3):
                    s = (dy - 1) * W + (dx - 1)
                    tap = a_bf if s == 0 else jnp.roll(a_bf, -s, axis=1)
                    m = row_ok[dy]
                    if col_ok[dx] is not None:
                        m = col_ok[dx] if m is None else jnp.logical_and(m, col_ok[dx])
                    if m is not None:
                        tap = jnp.where(m, tap, 0)
                    acc = acc + jnp.dot(w_ref[dy * 3 + dx], tap,
                                        preferred_element_type=jnp.float32)
            a = acc + b_ref[...]                          # (Cout, B*HW)
            if cfg["relu"]:
                a = jnp.maximum(a, 0.0)

            if cfg["pool"]:
                # AvgPool2d(2,2): per packed image, one (C,HW)x(HW,HW/4) matmul.
                a_bf16 = a.astype(jnp.bfloat16)
                pieces = [
                    jnp.dot(a_bf16[:, b * hw:(b + 1) * hw], pm_ref[...],
                            preferred_element_type=jnp.float32)
                    for b in range(b_blk)
                ]
                a = pieces[0] if b_blk == 1 else jnp.concatenate(pieces, axis=1)

        # a: (1, B*Hf*Wf) single-channel maps -> separable bilinear resize.
        ah = ah_ref[...]                                  # (64, Hf)
        awt = awt_ref[...]                                # (Hf*Wf, 64)
        rsel = rsel_ref[...]                              # (Hf, Hf*Wf)
        for b in range(b_blk):
            mb = a[:, b * hwf:(b + 1) * hwf]              # (1, Hf*Wf)
            spread = rsel * mb                            # (Hf, Hf*Wf) unflatten
            z = jnp.dot(spread, awt, preferred_element_type=jnp.float32)   # (Hf,64)
            o_ref[b] = jnp.dot(ah, z, preferred_element_type=jnp.float32)  # (64,64)

    return kernel


# ---------------------------------------------------------------------------
# Wrapper: builds operands / specs and calls the fused kernel once.
# ---------------------------------------------------------------------------
def cnn_forward(x_nchw, conv_params, out_params, out_size=64, max_block=8):
    n, c0, h0, w0 = x_nchw.shape

    layers = [dict(w=p["w"], b=p["b"], pool=p["pool"], relu=True)
              for p in conv_params]
    wo, bo = out_params
    layers.append(dict(w=wo, b=bo, pool=False, relu=False))

    num_pool = sum(1 for l in layers if l["pool"])
    assert h0 % (1 << num_pool) == 0 and w0 % (1 << num_pool) == 0
    hw_final = (h0 >> num_pool) * (w0 >> num_pool)

    # Batch-block B images along lanes so even the smallest feature map spans
    # ~512 lanes; keep >=4 grid steps (2 per TC on v7x) when the batch is big
    # enough to afford it without dropping below one vreg (128 lanes).
    b_blk = max(1, min(n, max_block, max(1, 512 // hw_final)))
    while b_blk > 1 and -(-n // b_blk) < 4 and (b_blk // 2) * hw_final >= 128:
        b_blk //= 2
    n_pad = -(-n // b_blk) * b_blk
    if (b_blk * h0 * w0) % 128 != 0 and b_blk != n_pad:
        b_blk = n_pad = n        # fall back to one full-batch block (legal spec)

    x = x_nchw.astype(jnp.float32)
    if n_pad > n:
        x = jnp.concatenate(
            [x, jnp.zeros((n_pad - n, c0, h0, w0), jnp.float32)], axis=0)
    # Channel-major with batch-then-spatial on lanes: (C0, N_pad*H0*W0).
    x_cm = jnp.transpose(x, (1, 0, 2, 3)).reshape(c0, n_pad * h0 * w0)

    operands = [x_cm]
    in_specs = [pl.BlockSpec((c0, b_blk * h0 * w0), lambda i: (0, i))]
    cfgs = []

    hc, wc = h0, w0
    for layer in layers:
        w, b = layer["w"], layer["b"]
        kh, kw, cin, cout = w.shape
        assert kh == 3 and kw == 3, "kernel only supports kernel_size=3"
        hw = hc * wc

        # (3,3,Cin,Cout) HWIO -> per-tap (9, Cout, Cin) bf16.
        w9 = jnp.transpose(w.reshape(9, cin, cout), (0, 2, 1)).astype(jnp.bfloat16)
        bm = b.reshape(cout, 1).astype(jnp.float32)
        p = jnp.arange(hw, dtype=jnp.int32)
        yx = jnp.tile(jnp.stack([p // wc, p % wc], axis=0), (1, b_blk))  # (2,B*HW)

        operands += [w9, bm, yx]
        in_specs += [pl.BlockSpec(w9.shape, lambda i: (0, 0, 0)),
                     pl.BlockSpec(bm.shape, lambda i: (0, 0)),
                     pl.BlockSpec(yx.shape, lambda i: (0, 0))]
        cfgs.append(dict(H=hc, W=wc, cin=cin, cout=cout,
                         relu=layer["relu"], pool=layer["pool"]))
        if layer["pool"]:
            pm = _pool_matrix(hc, wc).astype(jnp.bfloat16)
            operands.append(pm)
            in_specs.append(pl.BlockSpec(pm.shape, lambda i: (0, 0)))
            hc //= 2
            wc //= 2

    ah = _interp_matrix(out_size, hc)                                      # (64,Hf)
    awt = jnp.tile(jnp.transpose(_interp_matrix(out_size, wc)), (hc, 1))   # (Hf*Wf,64)
    rsel = _row_select_matrix(hc, wc)                                      # (Hf,Hf*Wf)
    operands += [ah, awt, rsel]
    in_specs += [pl.BlockSpec(ah.shape, lambda i: (0, 0)),
                 pl.BlockSpec(awt.shape, lambda i: (0, 0)),
                 pl.BlockSpec(rsel.shape, lambda i: (0, 0))]

    out = pl.pallas_call(
        _make_fused_cnn_kernel(cfgs, b_blk, (hc, wc), out_size),
        out_shape=jax.ShapeDtypeStruct((n_pad, out_size, out_size), jnp.float32),
        grid_spec=pltpu.PrefetchScalarGridSpec(
            num_scalar_prefetch=0,
            grid=(n_pad // b_blk,),
            in_specs=in_specs,
            out_specs=pl.BlockSpec((b_blk, out_size, out_size),
                                   lambda i: (i, 0, 0)),
        ),
        compiler_params=pltpu.CompilerParams(
            dimension_semantics=("parallel",)),
    )(*operands)
    return out[:n].reshape(n, 1, out_size, out_size)      # NCHW (N, 1, 64, 64)


# ---------------------------------------------------------------------------
# Parameter construction mirroring CNN.__init__ (weights in HWIO layout).
# ---------------------------------------------------------------------------
def init_cnn_params(key, input_channels, hidden_channels, num_layers,
                    num_av_pool, kernel_size=3):
    # num_av_pool must be < num_layers for the module's channel bookkeeping to
    # be shape-consistent (same constraint applies to the PyTorch forward).
    assert num_av_pool < num_layers
    params = []
    cin, hc, flag = input_channels, hidden_channels, 0
    for _ in range(num_layers):
        key, kw_, kb_ = jax.random.split(key, 3)
        fan_in = cin * kernel_size * kernel_size
        bound = 1.0 / (fan_in ** 0.5)
        w = jax.random.uniform(kw_, (kernel_size, kernel_size, cin, hc),
                               jnp.float32, -bound, bound)
        b = jax.random.uniform(kb_, (hc,), jnp.float32, -bound, bound)
        pool = flag < num_av_pool
        params.append({"w": w, "b": b, "pool": pool})
        cin = hc
        if pool:
            hc *= 2
            flag += 1
    key, kw_, kb_ = jax.random.split(key, 3)
    fan_in = hc * kernel_size * kernel_size
    bound = 1.0 / (fan_in ** 0.5)
    wo = jax.random.uniform(kw_, (kernel_size, kernel_size, hc, 1),
                            jnp.float32, -bound, bound)
    bo = jax.random.uniform(kb_, (1,), jnp.float32, -bound, bound)
    return params, (wo, bo)


if __name__ == "__main__":
    key = jax.random.PRNGKey(0)
    kx, kp = jax.random.split(key)

    # CNN(input_channels=4, hidden_channels=8, num_layers=2, num_av_pool=1)
    x = jax.random.normal(kx, (2, 4, 16, 16), dtype=jnp.float32)   # NCHW
    conv_params, out_params = init_cnn_params(
        kp, input_channels=4, hidden_channels=8, num_layers=2, num_av_pool=1)

    y = cnn_forward(x, conv_params, out_params)
    jax.block_until_ready(y)
    assert y.shape == (2, 1, 64, 64) and y.dtype == jnp.float32
    print("KERNEL_OK")
</pallas_src>

<mosaic_0001>
module attributes {stable_mosaic.version = 11 : i64} {
  func.func @kernel(%arg0: i32, %arg1: memref<4x512xf32, #tpu.memory_space<vmem>>, %arg2: memref<9x8x4xbf16, #tpu.memory_space<vmem>>, %arg3: memref<8x1xf32, #tpu.memory_space<vmem>>, %arg4: memref<2x512xi32, #tpu.memory_space<vmem>>, %arg5: memref<256x64xbf16, #tpu.memory_space<vmem>>, %arg6: memref<9x16x8xbf16, #tpu.memory_space<vmem>>, %arg7: memref<16x1xf32, #tpu.memory_space<vmem>>, %arg8: memref<2x128xi32, #tpu.memory_space<vmem>>, %arg9: memref<9x1x16xbf16, #tpu.memory_space<vmem>>, %arg10: memref<1x1xf32, #tpu.memory_space<vmem>>, %arg11: memref<2x128xi32, #tpu.memory_space<vmem>>, %arg12: memref<64x8xf32, #tpu.memory_space<vmem>>, %arg13: memref<64x64xf32, #tpu.memory_space<vmem>>, %arg14: memref<8x64xf32, #tpu.memory_space<vmem>>, %arg15: memref<2x64x64xf32, #tpu.memory_space<vmem>>) attributes {dimension_semantics = [#tpu.dimension_semantics<parallel>], iteration_bounds = array<i64: 1>, scalar_prefetch = 0 : i64, scratch_operands = 0 : i64, tpu.core_type = #tpu.core_type<tc>, window_params = [{transform_indices = @transform_0, window_bounds = array<i64: 4, 512>}, {pipeline_mode = #tpu.pipeline_mode<synchronous>, transform_indices = @transform_1, window_bounds = array<i64: 9, 8, 4>}, {pipeline_mode = #tpu.pipeline_mode<synchronous>, transform_indices = @transform_2, window_bounds = array<i64: 8, 1>}, {pipeline_mode = #tpu.pipeline_mode<synchronous>, transform_indices = @transform_3, window_bounds = array<i64: 2, 512>}, {pipeline_mode = #tpu.pipeline_mode<synchronous>, transform_indices = @transform_4, window_bounds = array<i64: 256, 64>}, {pipeline_mode = #tpu.pipeline_mode<synchronous>, transform_indices = @transform_5, window_bounds = array<i64: 9, 16, 8>}, {pipeline_mode = #tpu.pipeline_mode<synchronous>, transform_indices = @transform_6, window_bounds = array<i64: 16, 1>}, {pipeline_mode = #tpu.pipeline_mode<synchronous>, transform_indices = @transform_7, window_bounds = array<i64: 2, 128>}, {pipeline_mode = #tpu.pipeline_mode<synchronous>, transform_indices = @transform_8, window_bounds = array<i64: 9, 1, 16>}, {pipeline_mode = #tpu.pipeline_mode<synchronous>, transform_indices = @transform_9, window_bounds = array<i64: 1, 1>}, {pipeline_mode = #tpu.pipeline_mode<synchronous>, transform_indices = @transform_10, window_bounds = array<i64: 2, 128>}, {pipeline_mode = #tpu.pipeline_mode<synchronous>, transform_indices = @transform_11, window_bounds = array<i64: 64, 8>}, {pipeline_mode = #tpu.pipeline_mode<synchronous>, transform_indices = @transform_12, window_bounds = array<i64: 64, 64>}, {pipeline_mode = #tpu.pipeline_mode<synchronous>, transform_indices = @transform_13, window_bounds = array<i64: 8, 64>}, {transform_indices = @transform_14, window_bounds = array<i64: 2, 64, 64>}]} {
    %c0 = arith.constant 0 : index
    %c0_0 = arith.constant 0 : index
    %0 = vector.load %arg1[%c0, %c0_0] : memref<4x512xf32, #tpu.memory_space<vmem>>, vector<4x512xf32>
    %c0_1 = arith.constant 0 : index
    %c0_2 = arith.constant 0 : index
    %1 = vector.load %arg4[%c0_1, %c0_2] : memref<2x512xi32, #tpu.memory_space<vmem>>, vector<1x512xi32>
    %c1 = arith.constant 1 : index
    %c0_3 = arith.constant 0 : index
    %2 = vector.load %arg4[%c1, %c0_3] : memref<2x512xi32, #tpu.memory_space<vmem>>, vector<1x512xi32>
    %c1_i32 = arith.constant 1 : i32
    %3 = vector.broadcast %c1_i32 : i32 to vector<1x512xi32>
    %4 = arith.cmpi sge, %1, %3 : vector<1x512xi32>
    %c14_i32 = arith.constant 14 : i32
    %5 = vector.broadcast %c14_i32 : i32 to vector<1x512xi32>
    %6 = arith.cmpi sle, %1, %5 : vector<1x512xi32>
    %c1_i32_4 = arith.constant 1 : i32
    %7 = vector.broadcast %c1_i32_4 : i32 to vector<1x512xi32>
    %8 = arith.cmpi sge, %2, %7 : vector<1x512xi32>
    %c14_i32_5 = arith.constant 14 : i32
    %9 = vector.broadcast %c14_i32_5 : i32 to vector<1x512xi32>
    %10 = arith.cmpi sle, %2, %9 : vector<1x512xi32>
    %11 = arith.truncf %0 : vector<4x512xf32> to vector<4x512xbf16>
    %cst = arith.constant 0.000000e+00 : f32
    %12 = vector.broadcast %cst : f32 to vector<8x512xf32>
    %13 = vector.extract_strided_slice %11 {offsets = [0, 495], sizes = [4, 17], strides = [1, 1]} : vector<4x512xbf16> to vector<4x17xbf16>
    %14 = vector.extract_strided_slice %11 {offsets = [0, 0], sizes = [4, 495], strides = [1, 1]} : vector<4x512xbf16> to vector<4x495xbf16>
    %15 = tpu.concatenate %13, %14 in 1 : vector<4x17xbf16>, vector<4x495xbf16> -> vector<4x512xbf16>
    %16 = arith.andi %4, %8 : vector<1x512xi1>
    %c0_i32 = arith.constant 0 : i32
    %17 = arith.sitofp %c0_i32 : i32 to bf16
    %18 = vector.shape_cast %16 : vector<1x512xi1> to vector<1x512xi1>
    %19 = vector.broadcast %18 : vector<1x512xi1> to vector<4x512xi1>
    %20 = vector.broadcast %17 : bf16 to vector<4x512xbf16>
    %21 = arith.select %19, %15, %20 : vector<4x512xi1>, vector<4x512xbf16>
    %c0_6 = arith.constant 0 : index
    %c0_7 = arith.constant 0 : index
    %c0_8 = arith.constant 0 : index
    %22 = vector.load %arg2[%c0_6, %c0_7, %c0_8] : memref<9x8x4xbf16, #tpu.memory_space<vmem>>, vector<1x8x4xbf16>
    %23 = vector.shape_cast %22 : vector<1x8x4xbf16> to vector<8x4xbf16>
    %cst_9 = arith.constant dense<0.000000e+00> : vector<8x512xf32>
    %24 = tpu.matmul %23, %21, %cst_9 {dimension_numbers = #tpu.dot_dimension_numbers<[1], [0], [0], [1], [0, 0, 1, 1], [], []>} : vector<8x4xbf16>, vector<4x512xbf16>, vector<8x512xf32> -> vector<8x512xf32>
    %25 = arith.addf %12, %24 : vector<8x512xf32>
    %26 = vector.extract_strided_slice %11 {offsets = [0, 496], sizes = [4, 16], strides = [1, 1]} : vector<4x512xbf16> to vector<4x16xbf16>
    %27 = vector.extract_strided_slice %11 {offsets = [0, 0], sizes = [4, 496], strides = [1, 1]} : vector<4x512xbf16> to vector<4x496xbf16>
    %28 = tpu.concatenate %26, %27 in 1 : vector<4x16xbf16>, vector<4x496xbf16> -> vector<4x512xbf16>
    %c0_i32_10 = arith.constant 0 : i32
    %29 = arith.sitofp %c0_i32_10 : i32 to bf16
    %30 = vector.shape_cast %4 : vector<1x512xi1> to vector<1x512xi1>
    %31 = vector.broadcast %30 : vector<1x512xi1> to vector<4x512xi1>
    %32 = vector.broadcast %29 : bf16 to vector<4x512xbf16>
    %33 = arith.select %31, %28, %32 : vector<4x512xi1>, vector<4x512xbf16>
    %c1_11 = arith.constant 1 : index
    %c0_12 = arith.constant 0 : index
    %c0_13 = arith.constant 0 : index
    %34 = vector.load %arg2[%c1_11, %c0_12, %c0_13] : memref<9x8x4xbf16, #tpu.memory_space<vmem>>, vector<1x8x4xbf16>
    %35 = vector.shape_cast %34 : vector<1x8x4xbf16> to vector<8x4xbf16>
    %cst_14 = arith.constant dense<0.000000e+00> : vector<8x512xf32>
    %36 = tpu.matmul %35, %33, %cst_14 {dimension_numbers = #tpu.dot_dimension_numbers<[1], [0], [0], [1], [0, 0, 1, 1], [], []>} : vector<8x4xbf16>, vector<4x512xbf16>, vector<8x512xf32> -> vector<8x512xf32>
    %37 = arith.addf %25, %36 : vector<8x512xf32>
    %38 = vector.extract_strided_slice %11 {offsets = [0, 497], sizes = [4, 15], strides = [1, 1]} : vector<4x512xbf16> to vector<4x15xbf16>
    %39 = vector.extract_strided_slice %11 {offsets = [0, 0], sizes = [4, 497], strides = [1, 1]} : vector<4x512xbf16> to vector<4x497xbf16>
    %40 = tpu.concatenate %38, %39 in 1 : vector<4x15xbf16>, vector<4x497xbf16> -> vector<4x512xbf16>
    %41 = arith.andi %4, %10 : vector<1x512xi1>
    %c0_i32_15 = arith.constant 0 : i32
    %42 = arith.sitofp %c0_i32_15 : i32 to bf16
    %43 = vector.shape_cast %41 : vector<1x512xi1> to vector<1x512xi1>
    %44 = vector.broadcast %43 : vector<1x512xi1> to vector<4x512xi1>
    %45 = vector.broadcast %42 : bf16 to vector<4x512xbf16>
    %46 = arith.select %44, %40, %45 : vector<4x512xi1>, vector<4x512xbf16>
    %c2 = arith.constant 2 : index
    %c0_16 = arith.constant 0 : index
    %c0_17 = arith.constant 0 : index
    %47 = vector.load %arg2[%c2, %c0_16, %c0_17] : memref<9x8x4xbf16, #tpu.memory_space<vmem>>, vector<1x8x4xbf16>
    %48 = vector.shape_cast %47 : vector<1x8x4xbf16> to vector<8x4xbf16>
    %cst_18 = arith.constant dense<0.000000e+00> : vector<8x512xf32>
    %49 = tpu.matmul %48, %46, %cst_18 {dimension_numbers = #tpu.dot_dimension_numbers<[1], [0], [0], [1], [0, 0, 1, 1], [], []>} : vector<8x4xbf16>, vector<4x512xbf16>, vector<8x512xf32> -> vector<8x512xf32>
    %50 = arith.addf %37, %49 : vector<8x512xf32>
    %51 = vector.extract_strided_slice %11 {offsets = [0, 511], sizes = [4, 1], strides = [1, 1]} : vector<4x512xbf16> to vector<4x1xbf16>
    %52 = vector.extract_strided_slice %11 {offsets = [0, 0], sizes = [4, 511], strides = [1, 1]} : vector<4x512xbf16> to vector<4x511xbf16>
    %53 = tpu.concatenate %51, %52 in 1 : vector<4x1xbf16>, vector<4x511xbf16> -> vector<4x512xbf16>
    %c0_i32_19 = arith.constant 0 : i32
    %54 = arith.sitofp %c0_i32_19 : i32 to bf16
    %55 = vector.shape_cast %8 : vector<1x512xi1> to vector<1x512xi1>
    %56 = vector.broadcast %55 : vector<1x512xi1> to vector<4x512xi1>
    %57 = vector.broadcast %54 : bf16 to vector<4x512xbf16>
    %58 = arith.select %56, %53, %57 : vector<4x512xi1>, vector<4x512xbf16>
    %c3 = arith.constant 3 : index
    %c0_20 = arith.constant 0 : index
    %c0_21 = arith.constant 0 : index
    %59 = vector.load %arg2[%c3, %c0_20, %c0_21] : memref<9x8x4xbf16, #tpu.memory_space<vmem>>, vector<1x8x4xbf16>
    %60 = vector.shape_cast %59 : vector<1x8x4xbf16> to vector<8x4xbf16>
    %cst_22 = arith.constant dense<0.000000e+00> : vector<8x512xf32>
    %61 = tpu.matmul %60, %58, %cst_22 {dimension_numbers = #tpu.dot_dimension_numbers<[1], [0], [0], [1], [0, 0, 1, 1], [], []>} : vector<8x4xbf16>, vector<4x512xbf16>, vector<8x512xf32> -> vector<8x512xf32>
    %62 = arith.addf %50, %61 : vector<8x512xf32>
    %c4 = arith.constant 4 : index
    %c0_23 = arith.constant 0 : index
    %c0_24 = arith.constant 0 : index
    %63 = vector.load %arg2[%c4, %c0_23, %c0_24] : memref<9x8x4xbf16, #tpu.memory_space<vmem>>, vector<1x8x4xbf16>
    %64 = vector.shape_cast %63 : vector<1x8x4xbf16> to vector<8x4xbf16>
    %cst_25 = arith.constant dense<0.000000e+00> : vector<8x512xf32>
    %65 = tpu.matmul %64, %11, %cst_25 {dimension_numbers = #tpu.dot_dimension_numbers<[1], [0], [0], [1], [0, 0, 1, 1], [], []>} : vector<8x4xbf16>, vector<4x512xbf16>, vector<8x512xf32> -> vector<8x512xf32>
    %66 = arith.addf %62, %65 : vector<8x512xf32>
    %67 = vector.extract_strided_slice %11 {offsets = [0, 1], sizes = [4, 511], strides = [1, 1]} : vector<4x512xbf16> to vector<4x511xbf16>
    %68 = vector.extract_strided_slice %11 {offsets = [0, 0], sizes = [4, 1], strides = [1, 1]} : vector<4x512xbf16> to vector<4x1xbf16>
    %69 = tpu.concatenate %67, %68 in 1 : vector<4x511xbf16>, vector<4x1xbf16> -> vector<4x512xbf16>
    %c0_i32_26 = arith.constant 0 : i32
    %70 = arith.sitofp %c0_i32_26 : i32 to bf16
    %71 = vector.shape_cast %10 : vector<1x512xi1> to vector<1x512xi1>
    %72 = vector.broadcast %71 : vector<1x512xi1> to vector<4x512xi1>
    %73 = vector.broadcast %70 : bf16 to vector<4x512xbf16>
    %74 = arith.select %72, %69, %73 : vector<4x512xi1>, vector<4x512xbf16>
    %c5 = arith.constant 5 : index
    %c0_27 = arith.constant 0 : index
    %c0_28 = arith.constant 0 : index
    %75 = vector.load %arg2[%c5, %c0_27, %c0_28] : memref<9x8x4xbf16, #tpu.memory_space<vmem>>, vector<1x8x4xbf16>
    %76 = vector.shape_cast %75 : vector<1x8x4xbf16> to vector<8x4xbf16>
    %cst_29 = arith.constant dense<0.000000e+00> : vector<8x512xf32>
    %77 = tpu.matmul %76, %74, %cst_29 {dimension_numbers = #tpu.dot_dimension_numbers<[1], [0], [0], [1], [0, 0, 1, 1], [], []>} : vector<8x4xbf16>, vector<4x512xbf16>, vector<8x512xf32> -> vector<8x512xf32>
    %78 = arith.addf %66, %77 : vector<8x512xf32>
    %79 = vector.extract_strided_slice %11 {offsets = [0, 15], sizes = [4, 497], strides = [1, 1]} : vector<4x512xbf16> to vector<4x497xbf16>
    %80 = vector.extract_strided_slice %11 {offsets = [0, 0], sizes = [4, 15], strides = [1, 1]} : vector<4x512xbf16> to vector<4x15xbf16>
    %81 = tpu.concatenate %79, %80 in 1 : vector<4x497xbf16>, vector<4x15xbf16> -> vector<4x512xbf16>
    %82 = arith.andi %6, %8 : vector<1x512xi1>
    %c0_i32_30 = arith.constant 0 : i32
    %83 = arith.sitofp %c0_i32_30 : i32 to bf16
    %84 = vector.shape_cast %82 : vector<1x512xi1> to vector<1x512xi1>
    %85 = vector.broadcast %84 : vector<1x512xi1> to vector<4x512xi1>
    %86 = vector.broadcast %83 : bf16 to vector<4x512xbf16>
    %87 = arith.select %85, %81, %86 : vector<4x512xi1>, vector<4x512xbf16>
    %c6 = arith.constant 6 : index
    %c0_31 = arith.constant 0 : index
    %c0_32 = arith.constant 0 : index
    %88 = vector.load %arg2[%c6, %c0_31, %c0_32] : memref<9x8x4xbf16, #tpu.memory_space<vmem>>, vector<1x8x4xbf16>
    %89 = vector.shape_cast %88 : vector<1x8x4xbf16> to vector<8x4xbf16>
    %cst_33 = arith.constant dense<0.000000e+00> : vector<8x512xf32>
    %90 = tpu.matmul %89, %87, %cst_33 {dimension_numbers = #tpu.dot_dimension_numbers<[1], [0], [0], [1], [0, 0, 1, 1], [], []>} : vector<8x4xbf16>, vector<4x512xbf16>, vector<8x512xf32> -> vector<8x512xf32>
    %91 = arith.addf %78, %90 : vector<8x512xf32>
    %92 = vector.extract_strided_slice %11 {offsets = [0, 16], sizes = [4, 496], strides = [1, 1]} : vector<4x512xbf16> to vector<4x496xbf16>
    %93 = vector.extract_strided_slice %11 {offsets = [0, 0], sizes = [4, 16], strides = [1, 1]} : vector<4x512xbf16> to vector<4x16xbf16>
    %94 = tpu.concatenate %92, %93 in 1 : vector<4x496xbf16>, vector<4x16xbf16> -> vector<4x512xbf16>
    %c0_i32_34 = arith.constant 0 : i32
    %95 = arith.sitofp %c0_i32_34 : i32 to bf16
    %96 = vector.shape_cast %6 : vector<1x512xi1> to vector<1x512xi1>
    %97 = vector.broadcast %96 : vector<1x512xi1> to vector<4x512xi1>
    %98 = vector.broadcast %95 : bf16 to vector<4x512xbf16>
    %99 = arith.select %97, %94, %98 : vector<4x512xi1>, vector<4x512xbf16>
    %c7 = arith.constant 7 : index
    %c0_35 = arith.constant 0 : index
    %c0_36 = arith.constant 0 : index
    %100 = vector.load %arg2[%c7, %c0_35, %c0_36] : memref<9x8x4xbf16, #tpu.memory_space<vmem>>, vector<1x8x4xbf16>
    %101 = vector.shape_cast %100 : vector<1x8x4xbf16> to vector<8x4xbf16>
    %cst_37 = arith.constant dense<0.000000e+00> : vector<8x512xf32>
    %102 = tpu.matmul %101, %99, %cst_37 {dimension_numbers = #tpu.dot_dimension_numbers<[1], [0], [0], [1], [0, 0, 1, 1], [], []>} : vector<8x4xbf16>, vector<4x512xbf16>, vector<8x512xf32> -> vector<8x512xf32>
    %103 = arith.addf %91, %102 : vector<8x512xf32>
    %104 = vector.extract_strided_slice %11 {offsets = [0, 17], sizes = [4, 495], strides = [1, 1]} : vector<4x512xbf16> to vector<4x495xbf16>
    %105 = vector.extract_strided_slice %11 {offsets = [0, 0], sizes = [4, 17], strides = [1, 1]} : vector<4x512xbf16> to vector<4x17xbf16>
    %106 = tpu.concatenate %104, %105 in 1 : vector<4x495xbf16>, vector<4x17xbf16> -> vector<4x512xbf16>
    %107 = arith.andi %6, %10 : vector<1x512xi1>
    %c0_i32_38 = arith.constant 0 : i32
    %108 = arith.sitofp %c0_i32_38 : i32 to bf16
    %109 = vector.shape_cast %107 : vector<1x512xi1> to vector<1x512xi1>
    %110 = vector.broadcast %109 : vector<1x512xi1> to vector<4x512xi1>
    %111 = vector.broadcast %108 : bf16 to vector<4x512xbf16>
    %112 = arith.select %110, %106, %111 : vector<4x512xi1>, vector<4x512xbf16>
    %c8 = arith.constant 8 : index
    %c0_39 = arith.constant 0 : index
    %c0_40 = arith.constant 0 : index
    %113 = vector.load %arg2[%c8, %c0_39, %c0_40] : memref<9x8x4xbf16, #tpu.memory_space<vmem>>, vector<1x8x4xbf16>
    %114 = vector.shape_cast %113 : vector<1x8x4xbf16> to vector<8x4xbf16>
    %cst_41 = arith.constant dense<0.000000e+00> : vector<8x512xf32>
    %115 = tpu.matmul %114, %112, %cst_41 {dimension_numbers = #tpu.dot_dimension_numbers<[1], [0], [0], [1], [0, 0, 1, 1], [], []>} : vector<8x4xbf16>, vector<4x512xbf16>, vector<8x512xf32> -> vector<8x512xf32>
    %116 = arith.addf %103, %115 : vector<8x512xf32>
    %c0_42 = arith.constant 0 : index
    %c0_43 = arith.constant 0 : index
    %117 = vector.load %arg3[%c0_42, %c0_43] : memref<8x1xf32, #tpu.memory_space<vmem>>, vector<8x1xf32>
    %118 = vector.broadcast %117 : vector<8x1xf32> to vector<8x512xf32>
    %119 = arith.addf %116, %118 : vector<8x512xf32>
    %cst_44 = arith.constant 0.000000e+00 : f32
    %120 = vector.broadcast %cst_44 : f32 to vector<8x512xf32>
    %121 = arith.maximumf %119, %120 : vector<8x512xf32>
    %122 = arith.truncf %121 : vector<8x512xf32> to vector<8x512xbf16>
    %123 = vector.extract_strided_slice %122 {offsets = [0, 0], sizes = [8, 256], strides = [1, 1]} : vector<8x512xbf16> to vector<8x256xbf16>
    %c0_45 = arith.constant 0 : index
    %c0_46 = arith.constant 0 : index
    %124 = vector.load %arg5[%c0_45, %c0_46] : memref<256x64xbf16, #tpu.memory_space<vmem>>, vector<256x64xbf16>
    %cst_47 = arith.constant dense<0.000000e+00> : vector<8x64xf32>
    %125 = tpu.matmul %123, %124, %cst_47 {dimension_numbers = #tpu.dot_dimension_numbers<[1], [0], [0], [1], [0, 0, 1, 1], [], []>} : vector<8x256xbf16>, vector<256x64xbf16>, vector<8x64xf32> -> vector<8x64xf32>
    %126 = vector.extract_strided_slice %122 {offsets = [0, 256], sizes = [8, 256], strides = [1, 1]} : vector<8x512xbf16> to vector<8x256xbf16>
    %c0_48 = arith.constant 0 : index
    %c0_49 = arith.constant 0 : index
    %127 = vector.load %arg5[%c0_48, %c0_49] : memref<256x64xbf16, #tpu.memory_space<vmem>>, vector<256x64xbf16>
    %cst_50 = arith.constant dense<0.000000e+00> : vector<8x64xf32>
    %128 = tpu.matmul %126, %127, %cst_50 {dimension_numbers = #tpu.dot_dimension_numbers<[1], [0], [0], [1], [0, 0, 1, 1], [], []>} : vector<8x256xbf16>, vector<256x64xbf16>, vector<8x64xf32> -> vector<8x64xf32>
    %129 = tpu.concatenate %125, %128 in 1 : vector<8x64xf32>, vector<8x64xf32> -> vector<8x128xf32>
    %c0_51 = arith.constant 0 : index
    %c0_52 = arith.constant 0 : index
    %130 = vector.load %arg8[%c0_51, %c0_52] : memref<2x128xi32, #tpu.memory_space<vmem>>, vector<1x128xi32>
    %c1_53 = arith.constant 1 : index
    %c0_54 = arith.constant 0 : index
    %131 = vector.load %arg8[%c1_53, %c0_54] : memref<2x128xi32, #tpu.memory_space<vmem>>, vector<1x128xi32>
    %c1_i32_55 = arith.constant 1 : i32
    %132 = vector.broadcast %c1_i32_55 : i32 to vector<1x128xi32>
    %133 = arith.cmpi sge, %130, %132 : vector<1x128xi32>
    %c6_i32 = arith.constant 6 : i32
    %134 = vector.broadcast %c6_i32 : i32 to vector<1x128xi32>
    %135 = arith.cmpi sle, %130, %134 : vector<1x128xi32>
    %c1_i32_56 = arith.constant 1 : i32
    %136 = vector.broadcast %c1_i32_56 : i32 to vector<1x128xi32>
    %137 = arith.cmpi sge, %131, %136 : vector<1x128xi32>
    %c6_i32_57 = arith.constant 6 : i32
    %138 = vector.broadcast %c6_i32_57 : i32 to vector<1x128xi32>
    %139 = arith.cmpi sle, %131, %138 : vector<1x128xi32>
    %140 = arith.truncf %129 : vector<8x128xf32> to vector<8x128xbf16>
    %cst_58 = arith.constant 0.000000e+00 : f32
    %141 = vector.broadcast %cst_58 : f32 to vector<16x128xf32>
    %142 = vector.extract_strided_slice %140 {offsets = [0, 119], sizes = [8, 9], strides = [1, 1]} : vector<8x128xbf16> to vector<8x9xbf16>
    %143 = vector.extract_strided_slice %140 {offsets = [0, 0], sizes = [8, 119], strides = [1, 1]} : vector<8x128xbf16> to vector<8x119xbf16>
    %144 = tpu.concatenate %142, %143 in 1 : vector<8x9xbf16>, vector<8x119xbf16> -> vector<8x128xbf16>
    %145 = arith.andi %133, %137 : vector<1x128xi1>
    %c0_i32_59 = arith.constant 0 : i32
    %146 = arith.sitofp %c0_i32_59 : i32 to bf16
    %147 = vector.shape_cast %145 : vector<1x128xi1> to vector<1x128xi1>
    %148 = vector.broadcast %147 : vector<1x128xi1> to vector<8x128xi1>
    %149 = vector.broadcast %146 : bf16 to vector<8x128xbf16>
    %150 = arith.select %148, %144, %149 : vector<8x128xi1>, vector<8x128xbf16>
    %c0_60 = arith.constant 0 : index
    %c0_61 = arith.constant 0 : index
    %c0_62 = arith.constant 0 : index
    %151 = vector.load %arg6[%c0_60, %c0_61, %c0_62] : memref<9x16x8xbf16, #tpu.memory_space<vmem>>, vector<1x16x8xbf16>
    %152 = vector.shape_cast %151 : vector<1x16x8xbf16> to vector<16x8xbf16>
    %cst_63 = arith.constant dense<0.000000e+00> : vector<16x128xf32>
    %153 = tpu.matmul %152, %150, %cst_63 {dimension_numbers = #tpu.dot_dimension_numbers<[1], [0], [0], [1], [0, 0, 1, 1], [], []>} : vector<16x8xbf16>, vector<8x128xbf16>, vector<16x128xf32> -> vector<16x128xf32>
    %154 = arith.addf %141, %153 : vector<16x128xf32>
    %155 = vector.extract_strided_slice %140 {offsets = [0, 120], sizes = [8, 8], strides = [1, 1]} : vector<8x128xbf16> to vector<8x8xbf16>
    %156 = vector.extract_strided_slice %140 {offsets = [0, 0], sizes = [8, 120], strides = [1, 1]} : vector<8x128xbf16> to vector<8x120xbf16>
    %157 = tpu.concatenate %155, %156 in 1 : vector<8x8xbf16>, vector<8x120xbf16> -> vector<8x128xbf16>
    %c0_i32_64 = arith.constant 0 : i32
    %158 = arith.sitofp %c0_i32_64 : i32 to bf16
    %159 = vector.shape_cast %133 : vector<1x128xi1> to vector<1x128xi1>
    %160 = vector.broadcast %159 : vector<1x128xi1> to vector<8x128xi1>
    %161 = vector.broadcast %158 : bf16 to vector<8x128xbf16>
    %162 = arith.select %160, %157, %161 : vector<8x128xi1>, vector<8x128xbf16>
    %c1_65 = arith.constant 1 : index
    %c0_66 = arith.constant 0 : index
    %c0_67 = arith.constant 0 : index
    %163 = vector.load %arg6[%c1_65, %c0_66, %c0_67] : memref<9x16x8xbf16, #tpu.memory_space<vmem>>, vector<1x16x8xbf16>
    %164 = vector.shape_cast %163 : vector<1x16x8xbf16> to vector<16x8xbf16>
    %cst_68 = arith.constant dense<0.000000e+00> : vector<16x128xf32>
    %165 = tpu.matmul %164, %162, %cst_68 {dimension_numbers = #tpu.dot_dimension_numbers<[1], [0], [0], [1], [0, 0, 1, 1], [], []>} : vector<16x8xbf16>, vector<8x128xbf16>, vector<16x128xf32> -> vector<16x128xf32>
    %166 = arith.addf %154, %165 : vector<16x128xf32>
    %167 = vector.extract_strided_slice %140 {offsets = [0, 121], sizes = [8, 7], strides = [1, 1]} : vector<8x128xbf16> to vector<8x7xbf16>
    %168 = vector.extract_strided_slice %140 {offsets = [0, 0], sizes = [8, 121], strides = [1, 1]} : vector<8x128xbf16> to vector<8x121xbf16>
    %169 = tpu.concatenate %167, %168 in 1 : vector<8x7xbf16>, vector<8x121xbf16> -> vector<8x128xbf16>
    %170 = arith.andi %133, %139 : vector<1x128xi1>
    %c0_i32_69 = arith.constant 0 : i32
    %171 = arith.sitofp %c0_i32_69 : i32 to bf16
    %172 = vector.shape_cast %170 : vector<1x128xi1> to vector<1x128xi1>
    %173 = vector.broadcast %172 : vector<1x128xi1> to vector<8x128xi1>
    %174 = vector.broadcast %171 : bf16 to vector<8x128xbf16>
    %175 = arith.select %173, %169, %174 : vector<8x128xi1>, vector<8x128xbf16>
    %c2_70 = arith.constant 2 : index
    %c0_71 = arith.constant 0 : index
    %c0_72 = arith.constant 0 : index
    %176 = vector.load %arg6[%c2_70, %c0_71, %c0_72] : memref<9x16x8xbf16, #tpu.memory_space<vmem>>, vector<1x16x8xbf16>
    %177 = vector.shape_cast %176 : vector<1x16x8xbf16> to vector<16x8xbf16>
    %cst_73 = arith.constant dense<0.000000e+00> : vector<16x128xf32>
    %178 = tpu.matmul %177, %175, %cst_73 {dimension_numbers = #tpu.dot_dimension_numbers<[1], [0], [0], [1], [0, 0, 1, 1], [], []>} : vector<16x8xbf16>, vector<8x128xbf16>, vector<16x128xf32> -> vector<16x128xf32>
    %179 = arith.addf %166, %178 : vector<16x128xf32>
    %180 = vector.extract_strided_slice %140 {offsets = [0, 127], sizes = [8, 1], strides = [1, 1]} : vector<8x128xbf16> to vector<8x1xbf16>
    %181 = vector.extract_strided_slice %140 {offsets = [0, 0], sizes = [8, 127], strides = [1, 1]} : vector<8x128xbf16> to vector<8x127xbf16>
    %182 = tpu.concatenate %180, %181 in 1 : vector<8x1xbf16>, vector<8x127xbf16> -> vector<8x128xbf16>
    %c0_i32_74 = arith.constant 0 : i32
    %183 = arith.sitofp %c0_i32_74 : i32 to bf16
    %184 = vector.shape_cast %137 : vector<1x128xi1> to vector<1x128xi1>
    %185 = vector.broadcast %184 : vector<1x128xi1> to vector<8x128xi1>
    %186 = vector.broadcast %183 : bf16 to vector<8x128xbf16>
    %187 = arith.select %185, %182, %186 : vector<8x128xi1>, vector<8x128xbf16>
    %c3_75 = arith.constant 3 : index
    %c0_76 = arith.constant 0 : index
    %c0_77 = arith.constant 0 : index
    %188 = vector.load %arg6[%c3_75, %c0_76, %c0_77] : memref<9x16x8xbf16, #tpu.memory_space<vmem>>, vector<1x16x8xbf16>
    %189 = vector.shape_cast %188 : vector<1x16x8xbf16> to vector<16x8xbf16>
    %cst_78 = arith.constant dense<0.000000e+00> : vector<16x128xf32>
    %190 = tpu.matmul %189, %187, %cst_78 {dimension_numbers = #tpu.dot_dimension_numbers<[1], [0], [0], [1], [0, 0, 1, 1], [], []>} : vector<16x8xbf16>, vector<8x128xbf16>, vector<16x128xf32> -> vector<16x128xf32>
    %191 = arith.addf %179, %190 : vector<16x128xf32>
    %c4_79 = arith.constant 4 : index
    %c0_80 = arith.constant 0 : index
    %c0_81 = arith.constant 0 : index
    %192 = vector.load %arg6[%c4_79, %c0_80, %c0_81] : memref<9x16x8xbf16, #tpu.memory_space<vmem>>, vector<1x16x8xbf16>
    %193 = vector.shape_cast %192 : vector<1x16x8xbf16> to vector<16x8xbf16>
    %cst_82 = arith.constant dense<0.000000e+00> : vector<16x128xf32>
    %194 = tpu.matmul %193, %140, %cst_82 {dimension_numbers = #tpu.dot_dimension_numbers<[1], [0], [0], [1], [0, 0, 1, 1], [], []>} : vector<16x8xbf16>, vector<8x128xbf16>, vector<16x128xf32> -> vector<16x128xf32>
    %195 = arith.addf %191, %194 : vector<16x128xf32>
    %196 = vector.extract_strided_slice %140 {offsets = [0, 1], sizes = [8, 127], strides = [1, 1]} : vector<8x128xbf16> to vector<8x127xbf16>
    %197 = vector.extract_strided_slice %140 {offsets = [0, 0], sizes = [8, 1], strides = [1, 1]} : vector<8x128xbf16> to vector<8x1xbf16>
    %198 = tpu.concatenate %196, %197 in 1 : vector<8x127xbf16>, vector<8x1xbf16> -> vector<8x128xbf16>
    %c0_i32_83 = arith.constant 0 : i32
    %199 = arith.sitofp %c0_i32_83 : i32 to bf16
    %200 = vector.shape_cast %139 : vector<1x128xi1> to vector<1x128xi1>
    %201 = vector.broadcast %200 : vector<1x128xi1> to vector<8x128xi1>
    %202 = vector.broadcast %199 : bf16 to vector<8x128xbf16>
    %203 = arith.select %201, %198, %202 : vector<8x128xi1>, vector<8x128xbf16>
    %c5_84 = arith.constant 5 : index
    %c0_85 = arith.constant 0 : index
    %c0_86 = arith.constant 0 : index
    %204 = vector.load %arg6[%c5_84, %c0_85, %c0_86] : memref<9x16x8xbf16, #tpu.memory_space<vmem>>, vector<1x16x8xbf16>
    %205 = vector.shape_cast %204 : vector<1x16x8xbf16> to vector<16x8xbf16>
    %cst_87 = arith.constant dense<0.000000e+00> : vector<16x128xf32>
    %206 = tpu.matmul %205, %203, %cst_87 {dimension_numbers = #tpu.dot_dimension_numbers<[1], [0], [0], [1], [0, 0, 1, 1], [], []>} : vector<16x8xbf16>, vector<8x128xbf16>, vector<16x128xf32> -> vector<16x128xf32>
    %207 = arith.addf %195, %206 : vector<16x128xf32>
    %208 = vector.extract_strided_slice %140 {offsets = [0, 7], sizes = [8, 121], strides = [1, 1]} : vector<8x128xbf16> to vector<8x121xbf16>
    %209 = vector.extract_strided_slice %140 {offsets = [0, 0], sizes = [8, 7], strides = [1, 1]} : vector<8x128xbf16> to vector<8x7xbf16>
    %210 = tpu.concatenate %208, %209 in 1 : vector<8x121xbf16>, vector<8x7xbf16> -> vector<8x128xbf16>
    %211 = arith.andi %135, %137 : vector<1x128xi1>
    %c0_i32_88 = arith.constant 0 : i32
    %212 = arith.sitofp %c0_i32_88 : i32 to bf16
    %213 = vector.shape_cast %211 : vector<1x128xi1> to vector<1x128xi1>
    %214 = vector.broadcast %213 : vector<1x128xi1> to vector<8x128xi1>
    %215 = vector.broadcast %212 : bf16 to vector<8x128xbf16>
    %216 = arith.select %214, %210, %215 : vector<8x128xi1>, vector<8x128xbf16>
    %c6_89 = arith.constant 6 : index
    %c0_90 = arith.constant 0 : index
    %c0_91 = arith.constant 0 : index
    %217 = vector.load %arg6[%c6_89, %c0_90, %c0_91] : memref<9x16x8xbf16, #tpu.memory_space<vmem>>, vector<1x16x8xbf16>
    %218 = vector.shape_cast %217 : vector<1x16x8xbf16> to vector<16x8xbf16>
    %cst_92 = arith.constant dense<0.000000e+00> : vector<16x128xf32>
    %219 = tpu.matmul %218, %216, %cst_92 {dimension_numbers = #tpu.dot_dimension_numbers<[1], [0], [0], [1], [0, 0, 1, 1], [], []>} : vector<16x8xbf16>, vector<8x128xbf16>, vector<16x128xf32> -> vector<16x128xf32>
    %220 = arith.addf %207, %219 : vector<16x128xf32>
    %221 = vector.extract_strided_slice %140 {offsets = [0, 8], sizes = [8, 120], strides = [1, 1]} : vector<8x128xbf16> to vector<8x120xbf16>
    %222 = vector.extract_strided_slice %140 {offsets = [0, 0], sizes = [8, 8], strides = [1, 1]} : vector<8x128xbf16> to vector<8x8xbf16>
    %223 = tpu.concatenate %221, %222 in 1 : vector<8x120xbf16>, vector<8x8xbf16> -> vector<8x128xbf16>
    %c0_i32_93 = arith.constant 0 : i32
    %224 = arith.sitofp %c0_i32_93 : i32 to bf16
    %225 = vector.shape_cast %135 : vector<1x128xi1> to vector<1x128xi1>
    %226 = vector.broadcast %225 : vector<1x128xi1> to vector<8x128xi1>
    %227 = vector.broadcast %224 : bf16 to vector<8x128xbf16>
    %228 = arith.select %226, %223, %227 : vector<8x128xi1>, vector<8x128xbf16>
    %c7_94 = arith.constant 7 : index
    %c0_95 = arith.constant 0 : index
    %c0_96 = arith.constant 0 : index
    %229 = vector.load %arg6[%c7_94, %c0_95, %c0_96] : memref<9x16x8xbf16, #tpu.memory_space<vmem>>, vector<1x16x8xbf16>
    %230 = vector.shape_cast %229 : vector<1x16x8xbf16> to vector<16x8xbf16>
    %cst_97 = arith.constant dense<0.000000e+00> : vector<16x128xf32>
    %231 = tpu.matmul %230, %228, %cst_97 {dimension_numbers = #tpu.dot_dimension_numbers<[1], [0], [0], [1], [0, 0, 1, 1], [], []>} : vector<16x8xbf16>, vector<8x128xbf16>, vector<16x128xf32> -> vector<16x128xf32>
    %232 = arith.addf %220, %231 : vector<16x128xf32>
    %233 = vector.extract_strided_slice %140 {offsets = [0, 9], sizes = [8, 119], strides = [1, 1]} : vector<8x128xbf16> to vector<8x119xbf16>
    %234 = vector.extract_strided_slice %140 {offsets = [0, 0], sizes = [8, 9], strides = [1, 1]} : vector<8x128xbf16> to vector<8x9xbf16>
    %235 = tpu.concatenate %233, %234 in 1 : vector<8x119xbf16>, vector<8x9xbf16> -> vector<8x128xbf16>
    %236 = arith.andi %135, %139 : vector<1x128xi1>
    %c0_i32_98 = arith.constant 0 : i32
    %237 = arith.sitofp %c0_i32_98 : i32 to bf16
    %238 = vector.shape_cast %236 : vector<1x128xi1> to vector<1x128xi1>
    %239 = vector.broadcast %238 : vector<1x128xi1> to vector<8x128xi1>
    %240 = vector.broadcast %237 : bf16 to vector<8x128xbf16>
    %241 = arith.select %239, %235, %240 : vector<8x128xi1>, vector<8x128xbf16>
    %c8_99 = arith.constant 8 : index
    %c0_100 = arith.constant 0 : index
    %c0_101 = arith.constant 0 : index
    %242 = vector.load %arg6[%c8_99, %c0_100, %c0_101] : memref<9x16x8xbf16, #tpu.memory_space<vmem>>, vector<1x16x8xbf16>
    %243 = vector.shape_cast %242 : vector<1x16x8xbf16> to vector<16x8xbf16>
    %cst_102 = arith.constant dense<0.000000e+00> : vector<16x128xf32>
    %244 = tpu.matmul %243, %241, %cst_102 {dimension_numbers = #tpu.dot_dimension_numbers<[1], [0], [0], [1], [0, 0, 1, 1], [], []>} : vector<16x8xbf16>, vector<8x128xbf16>, vector<16x128xf32> -> vector<16x128xf32>
    %245 = arith.addf %232, %244 : vector<16x128xf32>
    %c0_103 = arith.constant 0 : index
    %c0_104 = arith.constant 0 : index
    %246 = vector.load %arg7[%c0_103, %c0_104] : memref<16x1xf32, #tpu.memory_space<vmem>>, vector<16x1xf32>
    %247 = vector.broadcast %246 : vector<16x1xf32> to vector<16x128xf32>
    %248 = arith.addf %245, %247 : vector<16x128xf32>
    %cst_105 = arith.constant 0.000000e+00 : f32
    %249 = vector.broadcast %cst_105 : f32 to vector<16x128xf32>
    %250 = arith.maximumf %248, %249 : vector<16x128xf32>
    %c0_106 = arith.constant 0 : index
    %c0_107 = arith.constant 0 : index
    %251 = vector.load %arg11[%c0_106, %c0_107] : memref<2x128xi32, #tpu.memory_space<vmem>>, vector<1x128xi32>
    %c1_108 = arith.constant 1 : index
    %c0_109 = arith.constant 0 : index
    %252 = vector.load %arg11[%c1_108, %c0_109] : memref<2x128xi32, #tpu.memory_space<vmem>>, vector<1x128xi32>
    %c1_i32_110 = arith.constant 1 : i32
    %253 = vector.broadcast %c1_i32_110 : i32 to vector<1x128xi32>
    %254 = arith.cmpi sge, %251, %253 : vector<1x128xi32>
    %c6_i32_111 = arith.constant 6 : i32
    %255 = vector.broadcast %c6_i32_111 : i32 to vector<1x128xi32>
    %256 = arith.cmpi sle, %251, %255 : vector<1x128xi32>
    %c1_i32_112 = arith.constant 1 : i32
    %257 = vector.broadcast %c1_i32_112 : i32 to vector<1x128xi32>
    %258 = arith.cmpi sge, %252, %257 : vector<1x128xi32>
    %c6_i32_113 = arith.constant 6 : i32
    %259 = vector.broadcast %c6_i32_113 : i32 to vector<1x128xi32>
    %260 = arith.cmpi sle, %252, %259 : vector<1x128xi32>
    %261 = arith.truncf %250 : vector<16x128xf32> to vector<16x128xbf16>
    %cst_114 = arith.constant 0.000000e+00 : f32
    %262 = vector.broadcast %cst_114 : f32 to vector<1x128xf32>
    %263 = vector.extract_strided_slice %261 {offsets = [0, 119], sizes = [16, 9], strides = [1, 1]} : vector<16x128xbf16> to vector<16x9xbf16>
    %264 = vector.extract_strided_slice %261 {offsets = [0, 0], sizes = [16, 119], strides = [1, 1]} : vector<16x128xbf16> to vector<16x119xbf16>
    %265 = tpu.concatenate %263, %264 in 1 : vector<16x9xbf16>, vector<16x119xbf16> -> vector<16x128xbf16>
    %266 = arith.andi %254, %258 : vector<1x128xi1>
    %c0_i32_115 = arith.constant 0 : i32
    %267 = arith.sitofp %c0_i32_115 : i32 to bf16
    %268 = vector.shape_cast %266 : vector<1x128xi1> to vector<1x128xi1>
    %269 = vector.broadcast %268 : vector<1x128xi1> to vector<16x128xi1>
    %270 = vector.broadcast %267 : bf16 to vector<16x128xbf16>
    %271 = arith.select %269, %265, %270 : vector<16x128xi1>, vector<16x128xbf16>
    %c0_116 = arith.constant 0 : index
    %c0_117 = arith.constant 0 : index
    %c0_118 = arith.constant 0 : index
    %272 = vector.load %arg9[%c0_116, %c0_117, %c0_118] : memref<9x1x16xbf16, #tpu.memory_space<vmem>>, vector<1x1x16xbf16>
    %273 = vector.shape_cast %272 : vector<1x1x16xbf16> to vector<1x16xbf16>
    %cst_119 = arith.constant dense<0.000000e+00> : vector<1x128xf32>
    %274 = tpu.matmul %273, %271, %cst_119 {dimension_numbers = #tpu.dot_dimension_numbers<[1], [0], [0], [1], [0, 0, 1, 1], [], []>} : vector<1x16xbf16>, vector<16x128xbf16>, vector<1x128xf32> -> vector<1x128xf32>
    %275 = arith.addf %262, %274 : vector<1x128xf32>
    %276 = vector.extract_strided_slice %261 {offsets = [0, 120], sizes = [16, 8], strides = [1, 1]} : vector<16x128xbf16> to vector<16x8xbf16>
    %277 = vector.extract_strided_slice %261 {offsets = [0, 0], sizes = [16, 120], strides = [1, 1]} : vector<16x128xbf16> to vector<16x120xbf16>
    %278 = tpu.concatenate %276, %277 in 1 : vector<16x8xbf16>, vector<16x120xbf16> -> vector<16x128xbf16>
    %c0_i32_120 = arith.constant 0 : i32
    %279 = arith.sitofp %c0_i32_120 : i32 to bf16
    %280 = vector.shape_cast %254 : vector<1x128xi1> to vector<1x128xi1>
    %281 = vector.broadcast %280 : vector<1x128xi1> to vector<16x128xi1>
    %282 = vector.broadcast %279 : bf16 to vector<16x128xbf16>
    %283 = arith.select %281, %278, %282 : vector<16x128xi1>, vector<16x128xbf16>
    %c1_121 = arith.constant 1 : index
    %c0_122 = arith.constant 0 : index
    %c0_123 = arith.constant 0 : index
    %284 = vector.load %arg9[%c1_121, %c0_122, %c0_123] : memref<9x1x16xbf16, #tpu.memory_space<vmem>>, vector<1x1x16xbf16>
    %285 = vector.shape_cast %284 : vector<1x1x16xbf16> to vector<1x16xbf16>
    %cst_124 = arith.constant dense<0.000000e+00> : vector<1x128xf32>
    %286 = tpu.matmul %285, %283, %cst_124 {dimension_numbers = #tpu.dot_dimension_numbers<[1], [0], [0], [1], [0, 0, 1, 1], [], []>} : vector<1x16xbf16>, vector<16x128xbf16>, vector<1x128xf32> -> vector<1x128xf32>
    %287 = arith.addf %275, %286 : vector<1x128xf32>
    %288 = vector.extract_strided_slice %261 {offsets = [0, 121], sizes = [16, 7], strides = [1, 1]} : vector<16x128xbf16> to vector<16x7xbf16>
    %289 = vector.extract_strided_slice %261 {offsets = [0, 0], sizes = [16, 121], strides = [1, 1]} : vector<16x128xbf16> to vector<16x121xbf16>
    %290 = tpu.concatenate %288, %289 in 1 : vector<16x7xbf16>, vector<16x121xbf16> -> vector<16x128xbf16>
    %291 = arith.andi %254, %260 : vector<1x128xi1>
    %c0_i32_125 = arith.constant 0 : i32
    %292 = arith.sitofp %c0_i32_125 : i32 to bf16
    %293 = vector.shape_cast %291 : vector<1x128xi1> to vector<1x128xi1>
    %294 = vector.broadcast %293 : vector<1x128xi1> to vector<16x128xi1>
    %295 = vector.broadcast %292 : bf16 to vector<16x128xbf16>
    %296 = arith.select %294, %290, %295 : vector<16x128xi1>, vector<16x128xbf16>
    %c2_126 = arith.constant 2 : index
    %c0_127 = arith.constant 0 : index
    %c0_128 = arith.constant 0 : index
    %297 = vector.load %arg9[%c2_126, %c0_127, %c0_128] : memref<9x1x16xbf16, #tpu.memory_space<vmem>>, vector<1x1x16xbf16>
    %298 = vector.shape_cast %297 : vector<1x1x16xbf16> to vector<1x16xbf16>
    %cst_129 = arith.constant dense<0.000000e+00> : vector<1x128xf32>
    %299 = tpu.matmul %298, %296, %cst_129 {dimension_numbers = #tpu.dot_dimension_numbers<[1], [0], [0], [1], [0, 0, 1, 1], [], []>} : vector<1x16xbf16>, vector<16x128xbf16>, vector<1x128xf32> -> vector<1x128xf32>
    %300 = arith.addf %287, %299 : vector<1x128xf32>
    %301 = vector.extract_strided_slice %261 {offsets = [0, 127], sizes = [16, 1], strides = [1, 1]} : vector<16x128xbf16> to vector<16x1xbf16>
    %302 = vector.extract_strided_slice %261 {offsets = [0, 0], sizes = [16, 127], strides = [1, 1]} : vector<16x128xbf16> to vector<16x127xbf16>
    %303 = tpu.concatenate %301, %302 in 1 : vector<16x1xbf16>, vector<16x127xbf16> -> vector<16x128xbf16>
    %c0_i32_130 = arith.constant 0 : i32
    %304 = arith.sitofp %c0_i32_130 : i32 to bf16
    %305 = vector.shape_cast %258 : vector<1x128xi1> to vector<1x128xi1>
    %306 = vector.broadcast %305 : vector<1x128xi1> to vector<16x128xi1>
    %307 = vector.broadcast %304 : bf16 to vector<16x128xbf16>
    %308 = arith.select %306, %303, %307 : vector<16x128xi1>, vector<16x128xbf16>
    %c3_131 = arith.constant 3 : index
    %c0_132 = arith.constant 0 : index
    %c0_133 = arith.constant 0 : index
    %309 = vector.load %arg9[%c3_131, %c0_132, %c0_133] : memref<9x1x16xbf16, #tpu.memory_space<vmem>>, vector<1x1x16xbf16>
    %310 = vector.shape_cast %309 : vector<1x1x16xbf16> to vector<1x16xbf16>
    %cst_134 = arith.constant dense<0.000000e+00> : vector<1x128xf32>
    %311 = tpu.matmul %310, %308, %cst_134 {dimension_numbers = #tpu.dot_dimension_numbers<[1], [0], [0], [1], [0, 0, 1, 1], [], []>} : vector<1x16xbf16>, vector<16x128xbf16>, vector<1x128xf32> -> vector<1x128xf32>
    %312 = arith.addf %300, %311 : vector<1x128xf32>
    %c4_135 = arith.constant 4 : index
    %c0_136 = arith.constant 0 : index
    %c0_137 = arith.constant 0 : index
    %313 = vector.load %arg9[%c4_135, %c0_136, %c0_137] : memref<9x1x16xbf16, #tpu.memory_space<vmem>>, vector<1x1x16xbf16>
    %314 = vector.shape_cast %313 : vector<1x1x16xbf16> to vector<1x16xbf16>
    %cst_138 = arith.constant dense<0.000000e+00> : vector<1x128xf32>
    %315 = tpu.matmul %314, %261, %cst_138 {dimension_numbers = #tpu.dot_dimension_numbers<[1], [0], [0], [1], [0, 0, 1, 1], [], []>} : vector<1x16xbf16>, vector<16x128xbf16>, vector<1x128xf32> -> vector<1x128xf32>
    %316 = arith.addf %312, %315 : vector<1x128xf32>
    %317 = vector.extract_strided_slice %261 {offsets = [0, 1], sizes = [16, 127], strides = [1, 1]} : vector<16x128xbf16> to vector<16x127xbf16>
    %318 = vector.extract_strided_slice %261 {offsets = [0, 0], sizes = [16, 1], strides = [1, 1]} : vector<16x128xbf16> to vector<16x1xbf16>
    %319 = tpu.concatenate %317, %318 in 1 : vector<16x127xbf16>, vector<16x1xbf16> -> vector<16x128xbf16>
    %c0_i32_139 = arith.constant 0 : i32
    %320 = arith.sitofp %c0_i32_139 : i32 to bf16
    %321 = vector.shape_cast %260 : vector<1x128xi1> to vector<1x128xi1>
    %322 = vector.broadcast %321 : vector<1x128xi1> to vector<16x128xi1>
    %323 = vector.broadcast %320 : bf16 to vector<16x128xbf16>
    %324 = arith.select %322, %319, %323 : vector<16x128xi1>, vector<16x128xbf16>
    %c5_140 = arith.constant 5 : index
    %c0_141 = arith.constant 0 : index
    %c0_142 = arith.constant 0 : index
    %325 = vector.load %arg9[%c5_140, %c0_141, %c0_142] : memref<9x1x16xbf16, #tpu.memory_space<vmem>>, vector<1x1x16xbf16>
    %326 = vector.shape_cast %325 : vector<1x1x16xbf16> to vector<1x16xbf16>
    %cst_143 = arith.constant dense<0.000000e+00> : vector<1x128xf32>
    %327 = tpu.matmul %326, %324, %cst_143 {dimension_numbers = #tpu.dot_dimension_numbers<[1], [0], [0], [1], [0, 0, 1, 1], [], []>} : vector<1x16xbf16>, vector<16x128xbf16>, vector<1x128xf32> -> vector<1x128xf32>
    %328 = arith.addf %316, %327 : vector<1x128xf32>
    %329 = vector.extract_strided_slice %261 {offsets = [0, 7], sizes = [16, 121], strides = [1, 1]} : vector<16x128xbf16> to vector<16x121xbf16>
    %330 = vector.extract_strided_slice %261 {offsets = [0, 0], sizes = [16, 7], strides = [1, 1]} : vector<16x128xbf16> to vector<16x7xbf16>
    %331 = tpu.concatenate %329, %330 in 1 : vector<16x121xbf16>, vector<16x7xbf16> -> vector<16x128xbf16>
    %332 = arith.andi %256, %258 : vector<1x128xi1>
    %c0_i32_144 = arith.constant 0 : i32
    %333 = arith.sitofp %c0_i32_144 : i32 to bf16
    %334 = vector.shape_cast %332 : vector<1x128xi1> to vector<1x128xi1>
    %335 = vector.broadcast %334 : vector<1x128xi1> to vector<16x128xi1>
    %336 = vector.broadcast %333 : bf16 to vector<16x128xbf16>
    %337 = arith.select %335, %331, %336 : vector<16x128xi1>, vector<16x128xbf16>
    %c6_145 = arith.constant 6 : index
    %c0_146 = arith.constant 0 : index
    %c0_147 = arith.constant 0 : index
    %338 = vector.load %arg9[%c6_145, %c0_146, %c0_147] : memref<9x1x16xbf16, #tpu.memory_space<vmem>>, vector<1x1x16xbf16>
    %339 = vector.shape_cast %338 : vector<1x1x16xbf16> to vector<1x16xbf16>
    %cst_148 = arith.constant dense<0.000000e+00> : vector<1x128xf32>
    %340 = tpu.matmul %339, %337, %cst_148 {dimension_numbers = #tpu.dot_dimension_numbers<[1], [0], [0], [1], [0, 0, 1, 1], [], []>} : vector<1x16xbf16>, vector<16x128xbf16>, vector<1x128xf32> -> vector<1x128xf32>
    %341 = arith.addf %328, %340 : vector<1x128xf32>
    %342 = vector.extract_strided_slice %261 {offsets = [0, 8], sizes = [16, 120], strides = [1, 1]} : vector<16x128xbf16> to vector<16x120xbf16>
    %343 = vector.extract_strided_slice %261 {offsets = [0, 0], sizes = [16, 8], strides = [1, 1]} : vector<16x128xbf16> to vector<16x8xbf16>
    %344 = tpu.concatenate %342, %343 in 1 : vector<16x120xbf16>, vector<16x8xbf16> -> vector<16x128xbf16>
    %c0_i32_149 = arith.constant 0 : i32
    %345 = arith.sitofp %c0_i32_149 : i32 to bf16
    %346 = vector.shape_cast %256 : vector<1x128xi1> to vector<1x128xi1>
    %347 = vector.broadcast %346 : vector<1x128xi1> to vector<16x128xi1>
    %348 = vector.broadcast %345 : bf16 to vector<16x128xbf16>
    %349 = arith.select %347, %344, %348 : vector<16x128xi1>, vector<16x128xbf16>
    %c7_150 = arith.constant 7 : index
    %c0_151 = arith.constant 0 : index
    %c0_152 = arith.constant 0 : index
    %350 = vector.load %arg9[%c7_150, %c0_151, %c0_152] : memref<9x1x16xbf16, #tpu.memory_space<vmem>>, vector<1x1x16xbf16>
    %351 = vector.shape_cast %350 : vector<1x1x16xbf16> to vector<1x16xbf16>
    %cst_153 = arith.constant dense<0.000000e+00> : vector<1x128xf32>
    %352 = tpu.matmul %351, %349, %cst_153 {dimension_numbers = #tpu.dot_dimension_numbers<[1], [0], [0], [1], [0, 0, 1, 1], [], []>} : vector<1x16xbf16>, vector<16x128xbf16>, vector<1x128xf32> -> vector<1x128xf32>
    %353 = arith.addf %341, %352 : vector<1x128xf32>
    %354 = vector.extract_strided_slice %261 {offsets = [0, 9], sizes = [16, 119], strides = [1, 1]} : vector<16x128xbf16> to vector<16x119xbf16>
    %355 = vector.extract_strided_slice %261 {offsets = [0, 0], sizes = [16, 9], strides = [1, 1]} : vector<16x128xbf16> to vector<16x9xbf16>
    %356 = tpu.concatenate %354, %355 in 1 : vector<16x119xbf16>, vector<16x9xbf16> -> vector<16x128xbf16>
    %357 = arith.andi %256, %260 : vector<1x128xi1>
    %c0_i32_154 = arith.constant 0 : i32
    %358 = arith.sitofp %c0_i32_154 : i32 to bf16
    %359 = vector.shape_cast %357 : vector<1x128xi1> to vector<1x128xi1>
    %360 = vector.broadcast %359 : vector<1x128xi1> to vector<16x128xi1>
    %361 = vector.broadcast %358 : bf16 to vector<16x128xbf16>
    %362 = arith.select %360, %356, %361 : vector<16x128xi1>, vector<16x128xbf16>
    %c8_155 = arith.constant 8 : index
    %c0_156 = arith.constant 0 : index
    %c0_157 = arith.constant 0 : index
    %363 = vector.load %arg9[%c8_155, %c0_156, %c0_157] : memref<9x1x16xbf16, #tpu.memory_space<vmem>>, vector<1x1x16xbf16>
    %364 = vector.shape_cast %363 : vector<1x1x16xbf16> to vector<1x16xbf16>
    %cst_158 = arith.constant dense<0.000000e+00> : vector<1x128xf32>
    %365 = tpu.matmul %364, %362, %cst_158 {dimension_numbers = #tpu.dot_dimension_numbers<[1], [0], [0], [1], [0, 0, 1, 1], [], []>} : vector<1x16xbf16>, vector<16x128xbf16>, vector<1x128xf32> -> vector<1x128xf32>
    %366 = arith.addf %353, %365 : vector<1x128xf32>
    %c0_159 = arith.constant 0 : index
    %c0_160 = arith.constant 0 : index
    %367 = vector.load %arg10[%c0_159, %c0_160] : memref<1x1xf32, #tpu.memory_space<vmem>>, vector<1x1xf32>
    %368 = vector.broadcast %367 : vector<1x1xf32> to vector<1x128xf32>
    %369 = arith.addf %366, %368 : vector<1x128xf32>
    %c0_161 = arith.constant 0 : index
    %c0_162 = arith.constant 0 : index
    %370 = vector.load %arg12[%c0_161, %c0_162] : memref<64x8xf32, #tpu.memory_space<vmem>>, vector<64x8xf32>
    %c0_163 = arith.constant 0 : index
    %c0_164 = arith.constant 0 : index
    %371 = vector.load %arg13[%c0_163, %c0_164] : memref<64x64xf32, #tpu.memory_space<vmem>>, vector<64x64xf32>
    %c0_165 = arith.constant 0 : index
    %c0_166 = arith.constant 0 : index
    %372 = vector.load %arg14[%c0_165, %c0_166] : memref<8x64xf32, #tpu.memory_space<vmem>>, vector<8x64xf32>
    %373 = vector.extract_strided_slice %369 {offsets = [0, 0], sizes = [1, 64], strides = [1, 1]} : vector<1x128xf32> to vector<1x64xf32>
    %374 = vector.broadcast %373 : vector<1x64xf32> to vector<8x64xf32>
    %375 = arith.mulf %372, %374 : vector<8x64xf32>
    %cst_167 = arith.constant dense<0.000000e+00> : vector<8x64xf32>
    %376 = tpu.matmul %375, %371, %cst_167 {dimension_numbers = #tpu.dot_dimension_numbers<[1], [0], [0], [1], [0, 0, 1, 1], [], []>} : vector<8x64xf32>, vector<64x64xf32>, vector<8x64xf32> -> vector<8x64xf32>
    %cst_168 = arith.constant dense<0.000000e+00> : vector<64x64xf32>
    %377 = tpu.matmul %370, %376, %cst_168 {dimension_numbers = #tpu.dot_dimension_numbers<[1], [0], [0], [1], [0, 0, 1, 1], [], []>} : vector<64x8xf32>, vector<8x64xf32>, vector<64x64xf32> -> vector<64x64xf32>
    %c0_169 = arith.constant 0 : index
    %c0_170 = arith.constant 0 : index
    %c0_171 = arith.constant 0 : index
    %378 = vector.load %arg15[%c0_169, %c0_170, %c0_171] : memref<2x64x64xf32, #tpu.memory_space<vmem>>, vector<1x64x64xf32>
    %379 = vector.shape_cast %378 : vector<1x64x64xf32> to vector<64x64xf32>
    %380 = vector.shape_cast %377 : vector<64x64xf32> to vector<1x64x64xf32>
    tpu.vector_store %arg15[%c0_169, %c0_170, %c0_171], %380 {strides = array<i32>} : memref<2x64x64xf32, #tpu.memory_space<vmem>>, vector<1x64x64xf32>,
    %381 = vector.extract_strided_slice %369 {offsets = [0, 64], sizes = [1, 64], strides = [1, 1]} : vector<1x128xf32> to vector<1x64xf32>
    %382 = vector.broadcast %381 : vector<1x64xf32> to vector<8x64xf32>
    %383 = arith.mulf %372, %382 : vector<8x64xf32>
    %cst_172 = arith.constant dense<0.000000e+00> : vector<8x64xf32>
    %384 = tpu.matmul %383, %371, %cst_172 {dimension_numbers = #tpu.dot_dimension_numbers<[1], [0], [0], [1], [0, 0, 1, 1], [], []>} : vector<8x64xf32>, vector<64x64xf32>, vector<8x64xf32> -> vector<8x64xf32>
    %cst_173 = arith.constant dense<0.000000e+00> : vector<64x64xf32>
    %385 = tpu.matmul %370, %384, %cst_173 {dimension_numbers = #tpu.dot_dimension_numbers<[1], [0], [0], [1], [0, 0, 1, 1], [], []>} : vector<64x8xf32>, vector<8x64xf32>, vector<64x64xf32> -> vector<64x64xf32>
    %c1_174 = arith.constant 1 : index
    %c0_175 = arith.constant 0 : index
    %c0_176 = arith.constant 0 : index
    %386 = vector.load %arg15[%c1_174, %c0_175, %c0_176] : memref<2x64x64xf32, #tpu.memory_space<vmem>>, vector<1x64x64xf32>
    %387 = vector.shape_cast %386 : vector<1x64x64xf32> to vector<64x64xf32>
    %388 = vector.shape_cast %385 : vector<64x64xf32> to vector<1x64x64xf32>
    tpu.vector_store %arg15[%c1_174, %c0_175, %c0_176], %388 {strides = array<i32>} : memref<2x64x64xf32, #tpu.memory_space<vmem>>, vector<1x64x64xf32>,
    return
  }
  func.func @transform_0(%arg0: i32) -> (i32, i32) {
    %c0_i32 = arith.constant 0 : i32
    %c0_i32_0 = arith.constant 0 : i32
    return %c0_i32, %arg0 : i32, i32
  }
  func.func @transform_1(%arg0: i32) -> (i32, i32, i32) {
    %c0_i32 = arith.constant 0 : i32
    %c0_i32_0 = arith.constant 0 : i32
    %c0_i32_1 = arith.constant 0 : i32
    %c0_i32_2 = arith.constant 0 : i32
    return %c0_i32, %c0_i32_0, %c0_i32_1 : i32, i32, i32
  }
  func.func @transform_2(%arg0: i32) -> (i32, i32) {
    %c0_i32 = arith.constant 0 : i32
    %c0_i32_0 = arith.constant 0 : i32
    %c0_i32_1 = arith.constant 0 : i32
    return %c0_i32, %c0_i32_0 : i32, i32
  }
  func.func @transform_3(%arg0: i32) -> (i32, i32) {
    %c0_i32 = arith.constant 0 : i32
    %c0_i32_0 = arith.constant 0 : i32
    %c0_i32_1 = arith.constant 0 : i32
    return %c0_i32, %c0_i32_0 : i32, i32
  }
  func.func @transform_4(%arg0: i32) -> (i32, i32) {
    %c0_i32 = arith.constant 0 : i32
    %c0_i32_0 = arith.constant 0 : i32
    %c0_i32_1 = arith.constant 0 : i32
    return %c0_i32, %c0_i32_0 : i32, i32
  }
  func.func @transform_5(%arg0: i32) -> (i32, i32, i32) {
    %c0_i32 = arith.constant 0 : i32
    %c0_i32_0 = arith.constant 0 : i32
    %c0_i32_1 = arith.constant 0 : i32
    %c0_i32_2 = arith.constant 0 : i32
    return %c0_i32, %c0_i32_0, %c0_i32_1 : i32, i32, i32
  }
  func.func @transform_6(%arg0: i32) -> (i32, i32) {
    %c0_i32 = arith.constant 0 : i32
    %c0_i32_0 = arith.constant 0 : i32
    %c0_i32_1 = arith.constant 0 : i32
    return %c0_i32, %c0_i32_0 : i32, i32
  }
  func.func @transform_7(%arg0: i32) -> (i32, i32) {
    %c0_i32 = arith.constant 0 : i32
    %c0_i32_0 = arith.constant 0 : i32
    %c0_i32_1 = arith.constant 0 : i32
    return %c0_i32, %c0_i32_0 : i32, i32
  }
  func.func @transform_8(%arg0: i32) -> (i32, i32, i32) {
    %c0_i32 = arith.constant 0 : i32
    %c0_i32_0 = arith.constant 0 : i32
    %c0_i32_1 = arith.constant 0 : i32
    %c0_i32_2 = arith.constant 0 : i32
    return %c0_i32, %c0_i32_0, %c0_i32_1 : i32, i32, i32
  }
  func.func @transform_9(%arg0: i32) -> (i32, i32) {
    %c0_i32 = arith.constant 0 : i32
    %c0_i32_0 = arith.constant 0 : i32
    %c0_i32_1 = arith.constant 0 : i32
    return %c0_i32, %c0_i32_0 : i32, i32
  }
  func.func @transform_10(%arg0: i32) -> (i32, i32) {
    %c0_i32 = arith.constant 0 : i32
    %c0_i32_0 = arith.constant 0 : i32
    %c0_i32_1 = arith.constant 0 : i32
    return %c0_i32, %c0_i32_0 : i32, i32
  }
  func.func @transform_11(%arg0: i32) -> (i32, i32) {
    %c0_i32 = arith.constant 0 : i32
    %c0_i32_0 = arith.constant 0 : i32
    %c0_i32_1 = arith.constant 0 : i32
    return %c0_i32, %c0_i32_0 : i32, i32
  }
  func.func @transform_12(%arg0: i32) -> (i32, i32) {
    %c0_i32 = arith.constant 0 : i32
    %c0_i32_0 = arith.constant 0 : i32
    %c0_i32_1 = arith.constant 0 : i32
    return %c0_i32, %c0_i32_0 : i32, i32
  }
  func.func @transform_13(%arg0: i32) -> (i32, i32) {
    %c0_i32 = arith.constant 0 : i32
    %c0_i32_0 = arith.constant 0 : i32
    %c0_i32_1 = arith.constant 0 : i32
    return %c0_i32, %c0_i32_0 : i32, i32
  }
  func.func @transform_14(%arg0: i32) -> (i32, i32, i32) {
    %c0_i32 = arith.constant 0 : i32
    %c0_i32_0 = arith.constant 0 : i32
    %c0_i32_1 = arith.constant 0 : i32
    return %arg0, %c0_i32, %c0_i32_0 : i32, i32, i32
  }
}

</mosaic_0001>

<llo_original>
// kernel: tpu_custom_call.1
$region0: #{tpu_custom_call.1}
  #allocation0 [shape = 'u32[]', space=smem, size = 0x4, offset = 0x4, fixed_abs, tag = 'smem constant byte address 0x4 - core index']
  #allocation1 [shape = 'u32[144,128]{1,0:T(1,128)}', space=vmem, size = 0x12000, scoped, tag = 'internal scratch']
  #allocation2 [shape = 'f32[1,1]{1,0:T(1,128)S(1)}', space=vmem, size = 0x200, scoped, tag = 'scoped memory for tpu_custom_call.1']
  %s0 = inlined_call_operand.vmem [shape: f32[4,512], index: 0, kind: input, shape index: {}]
  %s1 = inlined_call_operand.vmem [shape: bf16[9,8,4], index: 1, kind: input, shape index: {}]
  %s2 = inlined_call_operand.vmem [shape: f32[8,1], index: 2, kind: input, shape index: {}]
  %s3 = inlined_call_operand.vmem [shape: s32[2,512], index: 3, kind: input, shape index: {}]
  %s4 = inlined_call_operand.vmem [shape: bf16[256,64], index: 4, kind: input, shape index: {}]
  %s5 = inlined_call_operand.vmem [shape: bf16[9,16,8], index: 5, kind: input, shape index: {}]
  %s6 = inlined_call_operand.vmem [shape: f32[16,1], index: 6, kind: input, shape index: {}]
  %s7 = inlined_call_operand.vmem [shape: s32[2,128], index: 7, kind: input, shape index: {}]
  %s8 = inlined_call_operand.vmem [shape: bf16[9,1,16], index: 8, kind: input, shape index: {}]
  %s9 = inlined_call_operand.<no memory space> [shape: f32[1,1], index: 9, kind: input, shape index: {}]
  %s10 = inlined_call_operand.vmem [shape: s32[2,128], index: 10, kind: input, shape index: {}]
  %s11 = inlined_call_operand.vmem [shape: f32[64,8], index: 11, kind: input, shape index: {}]
  %s12 = inlined_call_operand.vmem [shape: f32[64,64], index: 12, kind: input, shape index: {}]
  %s13 = inlined_call_operand.vmem [shape: f32[8,64], index: 13, kind: input, shape index: {}]
  %s14 = inlined_call_operand.hbm [shape: f32[2,64,64], index: 14, kind: output, shape index: {}]
  %s15 = sld [smem:[#allocation0]]
  $region66: #{tpu_custom_call.1} parent=0
    _
  %s17 = ssub.s32 1, %s15
  %s18 = scalar_select 0, %s17, %s15
  %v19 = vstv %s9
  %20 = vst [vmem:[#allocation2] sm:$0x1] %v19
  $region1: #{tpu_custom_call.1} parent=0
    #allocation3 [shape = 'u8[65536]{0}', space=vmem, size = 0x10000, scoped, tag = 'output window, operand 0, single buffered']
    #allocation4 [shape = 's32[1]{0}', space=sflag, size = 0x4, scoped, tag = 'scoped memory for tpu_custom_call.1']
    %21 = vsyncpa [#allocation4], 0
    // Predicated region
    $region2: #{tpu_custom_call.1} parent=1 // pred_check
      _
    $region3: #{tpu_custom_call.1} parent=1 // pred_check_branch
      %23 = sbr.rel (0) target = $region5
    $region4: #{tpu_custom_call.1} parent=1 // pred_region
      _
    $region5: #{tpu_custom_call.1} parent=1 // pred_fallthru
      _
    // Predicated region
    $region6: #{tpu_custom_call.1} parent=1 // pred_check
      _
    $region7: #{tpu_custom_call.1} parent=1 // pred_check_branch
      %25 = sbr.rel (0) target = $region9
    $region8: #{tpu_custom_call.1} parent=1 // pred_region
      _
    $region9: #{tpu_custom_call.1} parent=1 // pred_fallthru
      _
    // Predicated region
    $region10: #{tpu_custom_call.1} parent=1 // pred_check
      _
    $region11: #{tpu_custom_call.1} parent=1 // pred_check_branch
      %27 = sbr.rel (0) target = $region13
    $region12: #{tpu_custom_call.1} parent=1 // pred_region
      _
    $region13: #{tpu_custom_call.1} parent=1 // pred_fallthru
      _
    // Predicated region
    $region14: #{tpu_custom_call.1} parent=1 // pred_check
      _
    $region15: #{tpu_custom_call.1} parent=1 // pred_check_branch
      %29 = sbr.rel (0) target = $region17
    $region16: #{tpu_custom_call.1} parent=1 // pred_region
      _
    $region17: #{tpu_custom_call.1} parent=1 // pred_fallthru
      _
    // Predicated region
    $region18: #{tpu_custom_call.1} parent=1 // pred_check
      _
    $region19: #{tpu_custom_call.1} parent=1 // pred_check_branch
      %31 = sbr.rel (0) target = $region21
    $region20: #{tpu_custom_call.1} parent=1 // pred_region
      _
    $region21: #{tpu_custom_call.1} parent=1 // pred_fallthru
      _
    // Predicated region
    $region22: #{tpu_custom_call.1} parent=1 // pred_check
      _
    $region23: #{tpu_custom_call.1} parent=1 // pred_check_branch
      %33 = sbr.rel (0) target = $region25
    $region24: #{tpu_custom_call.1} parent=1 // pred_region
      _
    $region25: #{tpu_custom_call.1} parent=1 // pred_fallthru
      _
    // Predicated region
    $region26: #{tpu_custom_call.1} parent=1 // pred_check
      _
    $region27: #{tpu_custom_call.1} parent=1 // pred_check_branch
      %35 = sbr.rel (0) target = $region29
    $region28: #{tpu_custom_call.1} parent=1 // pred_region
      _
    $region29: #{tpu_custom_call.1} parent=1 // pred_fallthru
      _
    // Predicated region
    $region30: #{tpu_custom_call.1} parent=1 // pred_check
      _
    $region31: #{tpu_custom_call.1} parent=1 // pred_check_branch
      %37 = sbr.rel (0) target = $region33
    $region32: #{tpu_custom_call.1} parent=1 // pred_region
      _
    $region33: #{tpu_custom_call.1} parent=1 // pred_fallthru
      _
    // Predicated region
    $region34: #{tpu_custom_call.1} parent=1 // pred_check
      _
    $region35: #{tpu_custom_call.1} parent=1 // pred_check_branch
      %39 = sbr.rel (0) target = $region37
    $region36: #{tpu_custom_call.1} parent=1 // pred_region
      _
    $region37: #{tpu_custom_call.1} parent=1 // pred_fallthru
      _
    // Predicated region
    $region38: #{tpu_custom_call.1} parent=1 // pred_check
      _
    $region39: #{tpu_custom_call.1} parent=1 // pred_check_branch
      %41 = sbr.rel (0) target = $region41
    $region40: #{tpu_custom_call.1} parent=1 // pred_region
      _
    $region41: #{tpu_custom_call.1} parent=1 // pred_fallthru
      _
    // Predicated region
    $region42: #{tpu_custom_call.1} parent=1 // pred_check
      _
    $region43: #{tpu_custom_call.1} parent=1 // pred_check_branch
      %43 = sbr.rel (0) target = $region45
    $region44: #{tpu_custom_call.1} parent=1 // pred_region
      _
    $region45: #{tpu_custom_call.1} parent=1 // pred_fallthru
      _
    // Predicated region
    $region46: #{tpu_custom_call.1} parent=1 // pred_check
      _
    $region47: #{tpu_custom_call.1} parent=1 // pred_check_branch
      %45 = sbr.rel (0) target = $region49
    $region48: #{tpu_custom_call.1} parent=1 // pred_region
      _
    $region49: #{tpu_custom_call.1} parent=1 // pred_fallthru
      _
    // Predicated region
    $region50: #{tpu_custom_call.1} parent=1 // pred_check
      _
    $region51: #{tpu_custom_call.1} parent=1 // pred_check_branch
      %47 = sbr.rel (0) target = $region53
    $region52: #{tpu_custom_call.1} parent=1 // pred_region
      _
    $region53: #{tpu_custom_call.1} parent=1 // pred_fallthru
      _
    // Predicated region
    $region54: #{tpu_custom_call.1} parent=1 // pred_check
      _
    $region55: #{tpu_custom_call.1} parent=1 // pred_check_branch
      %49 = sbr.rel (0) target = $region57
    $region56: #{tpu_custom_call.1} parent=1 // pred_region
      _
    $region57: #{tpu_custom_call.1} parent=1 // pred_fallthru
      _
    %v53 = vld [vmem:[%s0] sm:$0xff]
    %v54 = vld [vmem:[%s0 + $0x8] sm:$0xff]
    %v55 = vld [vmem:[%s3] ss:$2 sm:$0xf]
    %s56 = scalar_lea.vmem %s3, 1
    %v57 = vld [vmem:[%s56] ss:$2 sm:$0xf]
    %vm58 = vcmp.ge.s32.totalorder %v55, 1
    %vm59 = vcmp.le.s32.totalorder %v55, 14
    %vm60 = vcmp.ge.s32.totalorder %v57, 1
    %vm61 = vcmp.le.s32.totalorder %v57, 14
    %v64 = vcombine.high %v53, %v53
    %v65 = vcombine.high %v54, %v54
    %v68 = vpack.c.bf16 %v53, %v53
    %v69 = vpack.c.bf16 %v64, %v64
    %v70 = vpack.c.bf16 %v54, %v54
    %v71 = vpack.c.bf16 %v65, %v65
    %73 = vrot.lane.b32.xlu0 %v71, 17
    %v74 = vpop.permute.xlu0 %73
    %78 = vrot.lane.b32.xlu0 %v68, 17
    %v79 = vpop.permute.xlu0 %78
    %80 = vrot.lane.b32.xlu0 %v69, 17
    %v81 = vpop.permute.xlu0 %80
    %82 = vrot.lane.b32.xlu0 %v70, 17
    %v83 = vpop.permute.xlu0 %82
    %vm84 = vcmask 138240
    %v85 = vsel %vm84, %v79, %v81
    %v86 = vsel %vm84, %v81, %v83
    %v87 = vsel %vm84, %v83, %v74
    %vm91 = vcmask 138240
    %v94 = vsel %vm91, %v74, %v79
    %vm96 = vmand %vm58, %vm60
    %v97 = vsel %vm96, 1, 0
    %v98 = vlaneseq
    %v99 = vshrl.u32 %v98, 7
    %v100 = vsub.s32 0, %v99
    %v101 = vrot.slane %v97, %v100
    %v102 = vlaneseq
    %v103 = vshrl.u32 %v102, 7
    %v104 = vsub.s32 1, %v103
    %v105 = vrot.slane %v97, %v104
    %v106 = vlaneseq
    %v107 = vshrl.u32 %v106, 7
    %v108 = vsub.s32 2, %v107
    %v109 = vrot.slane %v97, %v108
    %v110 = vlaneseq
    %v111 = vshrl.u32 %v110, 7
    %v112 = vsub.s32 3, %v111
    %v113 = vrot.slane %v97, %v112
    %vm114 = vcmp.eq.s32.totalorder %v101, 1
    %vm115 = vcmp.eq.s32.totalorder %v105, 1
    %vm116 = vcmp.eq.s32.totalorder %v109, 1
    %vm117 = vcmp.eq.s32.totalorder %v113, 1
    %vm118 = vmpackc.low %vm115, %vm114
    %vm119 = vmpackc.low %vm117, %vm116
    %v120 = vsel %vm118, 65537, 0
    %v121 = vsel %vm119, 65537, 0
    %v122 = vlaneseq
    %v123 = vshrl.u32 %v122, 7
    %v124 = vsub.s32 0, %v123
    %v125 = vrot.slane %v120, %v124
    %v126 = vlaneseq
    %v127 = vshrl.u32 %v126, 7
    %v128 = vsub.s32 4, %v127
    %v129 = vrot.slane %v120, %v128
    %v130 = vlaneseq
    %v131 = vshrl.u32 %v130, 7
    %v132 = vsub.s32 0, %v131
    %v133 = vrot.slane %v121, %v132
    %v134 = vlaneseq
    %v135 = vshrl.u32 %v134, 7
    %v136 = vsub.s32 4, %v135
    %v137 = vrot.slane %v121, %v136
    %vm138 = vcmp.ne.s16.totalorder %v125, 0
    %vm139 = vcmp.ne.s16.totalorder %v129, 0
    %vm140 = vcmp.ne.s16.totalorder %v133, 0
    %vm141 = vcmp.ne.s16.totalorder %v137, 0
    %v142 = vsel %vm138, %v94, 0
    %v143 = vsel %vm139, %v85, 0
    %v144 = vsel %vm140, %v86, 0
    %v145 = vsel %vm141, %v87, 0
    %v146 = vld [vmem:[%s1] sm:$0xf]
    %147 = vrot.lane.b32.xlu0 %v71, 16
    %v148 = vpop.permute.xlu0 %147
    %149 = vrot.lane.b32.xlu0 %v68, 16
    %v150 = vpop.permute.xlu0 %149
    %151 = vrot.lane.b32.xlu0 %v69, 16
    %v152 = vpop.permute.xlu0 %151
    %153 = vrot.lane.b32.xlu0 %v70, 16
    %v154 = vpop.permute.xlu0 %153
    %vm155 = vcmask 130048
    %v156 = vsel %vm155, %v150, %v152
    %v157 = vsel %vm155, %v152, %v154
    %v158 = vsel %vm155, %v154, %v148
    %vm162 = vcmask 130048
    %v165 = vsel %vm162, %v148, %v150
    %v167 = vsel %vm58, 1, 0
    %v168 = vlaneseq
    %v169 = vshrl.u32 %v168, 7
    %v170 = vsub.s32 0, %v169
    %v171 = vrot.slane %v167, %v170
    %v172 = vlaneseq
    %v173 = vshrl.u32 %v172, 7
    %v174 = vsub.s32 1, %v173
    %v175 = vrot.slane %v167, %v174
    %v176 = vlaneseq
    %v177 = vshrl.u32 %v176, 7
    %v178 = vsub.s32 2, %v177
    %v179 = vrot.slane %v167, %v178
    %v180 = vlaneseq
    %v181 = vshrl.u32 %v180, 7
    %v182 = vsub.s32 3, %v181
    %v183 = vrot.slane %v167, %v182
    %vm184 = vcmp.eq.s32.totalorder %v171, 1
    %vm185 = vcmp.eq.s32.totalorder %v175, 1
    %vm186 = vcmp.eq.s32.totalorder %v179, 1
    %vm187 = vcmp.eq.s32.totalorder %v183, 1
    %vm188 = vmpackc.low %vm185, %vm184
    %vm189 = vmpackc.low %vm187, %vm186
    %v190 = vsel %vm188, 65537, 0
    %v191 = vsel %vm189, 65537, 0
    %v192 = vlaneseq
    %v193 = vshrl.u32 %v192, 7
    %v194 = vsub.s32 0, %v193
    %v195 = vrot.slane %v190, %v194
    %v196 = vlaneseq
    %v197 = vshrl.u32 %v196, 7
    %v198 = vsub.s32 4, %v197
    %v199 = vrot.slane %v190, %v198
    %v200 = vlaneseq
    %v201 = vshrl.u32 %v200, 7
    %v202 = vsub.s32 0, %v201
    %v203 = vrot.slane %v191, %v202
    %v204 = vlaneseq
    %v205 = vshrl.u32 %v204, 7
    %v206 = vsub.s32 4, %v205
    %v207 = vrot.slane %v191, %v206
    %vm208 = vcmp.ne.s16.totalorder %v195, 0
    %vm209 = vcmp.ne.s16.totalorder %v199, 0
    %vm210 = vcmp.ne.s16.totalorder %v203, 0
    %vm211 = vcmp.ne.s16.totalorder %v207, 0
    %v212 = vsel %vm208, %v165, 0
    %v213 = vsel %vm209, %v156, 0
    %v214 = vsel %vm210, %v157, 0
    %v215 = vsel %vm211, %v158, 0
    %s216 = scalar_lea.vmem %s1, 4
    %v217 = vld [vmem:[%s216] sm:$0xf]
    %vm218 = vcmask 31744
    %v220 = vsel %vm218, %v217, 0
    %vm222 = vcmask 1041408
    %v224 = vsel %vm222, %v212, 0
    %v227 = vsel %vm222, %v213, 0
    %v230 = vsel %vm222, %v214, 0
    %v233 = vsel %vm222, %v215, 0
    %235 = vmatprep.subr.bf16.mxu0 0
    %236 = vmatpush1.bf16.msra.mxu0 0
    %237 = vmatprep.subr.bf16.mxu0 0
    %238 = vmatpush1.bf16.msra.mxu0 0
    %239 = vmatprep.subr.bf16.mxu0 0
    %240 = vmatpush1.bf16.msra.mxu0 0
    %241 = vmatprep.subr.bf16.mxu0 0
    %242 = vmatpush1.bf16.msra.mxu0 0
    %243 = vmatprep.subr.bf16.mxu0 0
    %244 = vmatpush1.bf16.msra.mxu0 0
    %245 = vmatprep.subr.bf16.mxu0 0
    %246 = vmatpush1.bf16.msra.mxu0 0
    %247 = vmatprep.subr.bf16.mxu0 0
    %248 = vmatpush1.bf16.msra.mxu0 0
    %249 = vmatprep.subr.bf16.mxu0 %v227
    %250 = vmatpush1.bf16.msra.mxu0 %v224
    %251 = vmatprep.subr.bf16.mxu0 0
    %252 = vmatpush2.bf16.msra.mxu0 0
    %253 = vmatprep.subr.bf16.mxu0 0
    %254 = vmatpush2.bf16.msra.mxu0 0
    %255 = vmatprep.subr.bf16.mxu0 0
    %256 = vmatpush2.bf16.msra.mxu0 0
    %257 = vmatprep.subr.bf16.mxu0 0
    %258 = vmatpush2.bf16.msra.mxu0 0
    %259 = vmatprep.subr.bf16.mxu0 0
    %260 = vmatpush2.bf16.msra.mxu0 0
    %261 = vmatprep.subr.bf16.mxu0 0
    %262 = vmatpush2.bf16.msra.mxu0 0
    %263 = vmatprep.subr.bf16.mxu0 0
    %264 = vmatpush2.bf16.msra.mxu0 0
    %265 = vmatprep.subr.bf16.mxu0 0
    %266 = vmatpush2.bf16.msra.mxu0 0
    %267 = vmatprep.mubr.bf16.mxu0 0
    %268 = vmatmul.mubr.bf16.gmra.mxu0 %v220
    %v269 = vpop.f32.mrf.mxu0
    %v270 = vadd.f32 0.0, %v269
    %v271 = vpop.f32.mrf.mxu0
    %v272 = vadd.f32 0.0, %v271
    %v273 = vpop.f32.mrf.mxu0
    %v274 = vpop.f32.mrf.mxu0
    %275 = vdwg.mxu0
    %276 = vmatprep.subr.bf16.mxu0 0
    %277 = vmatpush1.bf16.msra.mxu0 0
    %278 = vmatprep.subr.bf16.mxu0 0
    %279 = vmatpush1.bf16.msra.mxu0 0
    %280 = vmatprep.subr.bf16.mxu0 0
    %281 = vmatpush1.bf16.msra.mxu0 0
    %282 = vmatprep.subr.bf16.mxu0 0
    %283 = vmatpush1.bf16.msra.mxu0 0
    %284 = vmatprep.subr.bf16.mxu0 0
    %285 = vmatpush1.bf16.msra.mxu0 0
    %286 = vmatprep.subr.bf16.mxu0 0
    %287 = vmatpush1.bf16.msra.mxu0 0
    %288 = vmatprep.subr.bf16.mxu0 0
    %289 = vmatpush1.bf16.msra.mxu0 0
    %290 = vmatprep.subr.bf16.mxu0 %v233
    %291 = vmatpush1.bf16.msra.mxu0 %v230
    %292 = vmatprep.subr.bf16.mxu0 0
    %293 = vmatpush2.bf16.msra.mxu0 0
    %294 = vmatprep.subr.bf16.mxu0 0
    %295 = vmatpush2.bf16.msra.mxu0 0
    %296 = vmatprep.subr.bf16.mxu0 0
    %297 = vmatpush2.bf16.msra.mxu0 0
    %298 = vmatprep.subr.bf16.mxu0 0
    %299 = vmatpush2.bf16.msra.mxu0 0
    %300 = vmatprep.subr.bf16.mxu0 0
    %301 = vmatpush2.bf16.msra.mxu0 0
    %302 = vmatprep.subr.bf16.mxu0 0
    %303 = vmatpush2.bf16.msra.mxu0 0
    %304 = vmatprep.subr.bf16.mxu0 0
    %305 = vmatpush2.bf16.msra.mxu0 0
    %306 = vmatprep.subr.bf16.mxu0 0
    %307 = vmatpush2.bf16.msra.mxu0 0
    %308 = vmatprep.mubr.bf16.mxu0 0
    %309 = vmatmul.mubr.bf16.gmra.mxu0 %v220
    %v310 = vpop.f32.mrf.mxu0
    %v311 = vadd.f32 0.0, %v310
    %v312 = vpop.f32.mrf.mxu0
    %v313 = vadd.f32 0.0, %v312
    %v314 = vpop.f32.mrf.mxu0
    %v315 = vpop.f32.mrf.mxu0
    %316 = vdwg.mxu0
    %v318 = vsel %vm218, %v146, 0
    %v321 = vsel %vm222, %v142, 0
    %v324 = vsel %vm222, %v143, 0
    %v327 = vsel %vm222, %v144, 0
    %v330 = vsel %vm222, %v145, 0
    %332 = vmatprep.subr.bf16.mxu0 0
    %333 = vmatpush1.bf16.msra.mxu0 0
    %334 = vmatprep.subr.bf16.mxu0 0
    %335 = vmatpush1.bf16.msra.mxu0 0
    %336 = vmatprep.subr.bf16.mxu0 0
    %337 = vmatpush1.bf16.msra.mxu0 0
    %338 = vmatprep.subr.bf16.mxu0 0
    %339 = vmatpush1.bf16.msra.mxu0 0
    %340 = vmatprep.subr.bf16.mxu0 0
    %341 = vmatpush1.bf16.msra.mxu0 0
    %342 = vmatprep.subr.bf16.mxu0 0
    %343 = vmatpush1.bf16.msra.mxu0 0
    %344 = vmatprep.subr.bf16.mxu0 0
    %345 = vmatpush1.bf16.msra.mxu0 0
    %346 = vmatprep.subr.bf16.mxu0 %v324
    %347 = vmatpush1.bf16.msra.mxu0 %v321
    %348 = vmatprep.subr.bf16.mxu0 0
    %349 = vmatpush2.bf16.msra.mxu0 0
    %350 = vmatprep.subr.bf16.mxu0 0
    %351 = vmatpush2.bf16.msra.mxu0 0
    %352 = vmatprep.subr.bf16.mxu0 0
    %353 = vmatpush2.bf16.msra.mxu0 0
    %354 = vmatprep.subr.bf16.mxu0 0
    %355 = vmatpush2.bf16.msra.mxu0 0
    %356 = vmatprep.subr.bf16.mxu0 0
    %357 = vmatpush2.bf16.msra.mxu0 0
    %358 = vmatprep.subr.bf16.mxu0 0
    %359 = vmatpush2.bf16.msra.mxu0 0
    %360 = vmatprep.subr.bf16.mxu0 0
    %361 = vmatpush2.bf16.msra.mxu0 0
    %362 = vmatprep.subr.bf16.mxu0 0
    %363 = vmatpush2.bf16.msra.mxu0 0
    %364 = vmatprep.mubr.bf16.mxu0 0
    %365 = vmatmul.mubr.bf16.gmra.mxu0 %v318
    %v366 = vpop.f32.mrf.mxu0
    %v367 = vadd.f32 %v270, %v366
    %v368 = vpop.f32.mrf.mxu0
    %v369 = vadd.f32 %v272, %v368
    %v370 = vpop.f32.mrf.mxu0
    %v371 = vpop.f32.mrf.mxu0
    %372 = vdwg.mxu0
    %373 = vmatprep.subr.bf16.mxu0 0
    %374 = vmatpush1.bf16.msra.mxu0 0
    %375 = vmatprep.subr.bf16.mxu0 0
    %376 = vmatpush1.bf16.msra.mxu0 0
    %377 = vmatprep.subr.bf16.mxu0 0
    %378 = vmatpush1.bf16.msra.mxu0 0
    %379 = vmatprep.subr.bf16.mxu0 0
    %380 = vmatpush1.bf16.msra.mxu0 0
    %381 = vmatprep.subr.bf16.mxu0 0
    %382 = vmatpush1.bf16.msra.mxu0 0
    %383 = vmatprep.subr.bf16.mxu0 0
    %384 = vmatpush1.bf16.msra.mxu0 0
    %385 = vmatprep.subr.bf16.mxu0 0
    %386 = vmatpush1.bf16.msra.mxu0 0
    %387 = vmatprep.subr.bf16.mxu0 %v330
    %388 = vmatpush1.bf16.msra.mxu0 %v327
    %389 = vmatprep.subr.bf16.mxu0 0
    %390 = vmatpush2.bf16.msra.mxu0 0
    %391 = vmatprep.subr.bf16.mxu0 0
    %392 = vmatpush2.bf16.msra.mxu0 0
    %393 = vmatprep.subr.bf16.mxu0 0
    %394 = vmatpush2.bf16.msra.mxu0 0
    %395 = vmatprep.subr.bf16.mxu0 0
    %396 = vmatpush2.bf16.msra.mxu0 0
    %397 = vmatprep.subr.bf16.mxu0 0
    %398 = vmatpush2.bf16.msra.mxu0 0
    %399 = vmatprep.subr.bf16.mxu0 0
    %400 = vmatpush2.bf16.msra.mxu0 0
    %401 = vmatprep.subr.bf16.mxu0 0
    %402 = vmatpush2.bf16.msra.mxu0 0
    %403 = vmatprep.subr.bf16.mxu0 0
    %404 = vmatpush2.bf16.msra.mxu0 0
    %405 = vmatprep.mubr.bf16.mxu0 0
    %406 = vmatmul.mubr.bf16.gmra.mxu0 %v318
    %v407 = vpop.f32.mrf.mxu0
    %v408 = vadd.f32 %v311, %v407
    %v409 = vpop.f32.mrf.mxu0
    %v410 = vadd.f32 %v313, %v409
    %v411 = vpop.f32.mrf.mxu0
    %v412 = vpop.f32.mrf.mxu0
    %413 = vdwg.mxu0
    %414 = vrot.lane.b32.xlu0 %v71, 15
    %v415 = vpop.permute.xlu0 %414
    %416 = vrot.lane.b32.xlu0 %v68, 15
    %v417 = vpop.permute.xlu0 %416
    %418 = vrot.lane.b32.xlu0 %v69, 15
    %v419 = vpop.permute.xlu0 %418
    %420 = vrot.lane.b32.xlu0 %v70, 15
    %v421 = vpop.permute.xlu0 %420
    %vm422 = vcmask 121856
    %v423 = vsel %vm422, %v417, %v419
    %v424 = vsel %vm422, %v419, %v421
    %v425 = vsel %vm422, %v421, %v415
    %vm429 = vcmask 121856
    %v432 = vsel %vm429, %v415, %v417
    %vm434 = vmand %vm58, %vm61
    %v435 = vsel %vm434, 1, 0
    %v436 = vlaneseq
    %v437 = vshrl.u32 %v436, 7
    %v438 = vsub.s32 0, %v437
    %v439 = vrot.slane %v435, %v438
    %v440 = vlaneseq
    %v441 = vshrl.u32 %v440, 7
    %v442 = vsub.s32 1, %v441
    %v443 = vrot.slane %v435, %v442
    %v444 = vlaneseq
    %v445 = vshrl.u32 %v444, 7
    %v446 = vsub.s32 2, %v445
    %v447 = vrot.slane %v435, %v446
    %v448 = vlaneseq
    %v449 = vshrl.u32 %v448, 7
    %v450 = vsub.s32 3, %v449
    %v451 = vrot.slane %v435, %v450
    %vm452 = vcmp.eq.s32.totalorder %v439, 1
    %vm453 = vcmp.eq.s32.totalorder %v443, 1
    %vm454 = vcmp.eq.s32.totalorder %v447, 1
    %vm455 = vcmp.eq.s32.totalorder %v451, 1
    %vm456 = vmpackc.low %vm453, %vm452
    %vm457 = vmpackc.low %vm455, %vm454
    %v458 = vsel %vm456, 65537, 0
    %v459 = vsel %vm457, 65537, 0
    %v460 = vlaneseq
    %v461 = vshrl.u32 %v460, 7
    %v462 = vsub.s32 0, %v461
    %v463 = vrot.slane %v458, %v462
    %v464 = vlaneseq
    %v465 = vshrl.u32 %v464, 7
    %v466 = vsub.s32 4, %v465
    %v467 = vrot.slane %v458, %v466
    %v468 = vlaneseq
    %v469 = vshrl.u32 %v468, 7
    %v470 = vsub.s32 0, %v469
    %v471 = vrot.slane %v459, %v470
    %v472 = vlaneseq
    %v473 = vshrl.u32 %v472, 7
    %v474 = vsub.s32 4, %v473
    %v475 = vrot.slane %v459, %v474
    %vm476 = vcmp.ne.s16.totalorder %v463, 0
    %vm477 = vcmp.ne.s16.totalorder %v467, 0
    %vm478 = vcmp.ne.s16.totalorder %v471, 0
    %vm479 = vcmp.ne.s16.totalorder %v475, 0
    %v480 = vsel %vm476, %v432, 0
    %v481 = vsel %vm477, %v423, 0
    %v482 = vsel %vm478, %v424, 0
    %v483 = vsel %vm479, %v425, 0
    %s484 = scalar_lea.vmem %s1, 8
    %v485 = vld [vmem:[%s484] sm:$0xf]
    %v487 = vsel %vm218, %v485, 0
    %v490 = vsel %vm222, %v480, 0
    %v493 = vsel %vm222, %v481, 0
    %v496 = vsel %vm222, %v482, 0
    %v499 = vsel %vm222, %v483, 0
    %501 = vmatprep.subr.bf16.mxu0 0
    %502 = vmatpush1.bf16.msra.mxu0 0
    %503 = vmatprep.subr.bf16.mxu0 0
    %504 = vmatpush1.bf16.msra.mxu0 0
    %505 = vmatprep.subr.bf16.mxu0 0
    %506 = vmatpush1.bf16.msra.mxu0 0
    %507 = vmatprep.subr.bf16.mxu0 0
    %508 = vmatpush1.bf16.msra.mxu0 0
    %509 = vmatprep.subr.bf16.mxu0 0
    %510 = vmatpush1.bf16.msra.mxu0 0
    %511 = vmatprep.subr.bf16.mxu0 0
    %512 = vmatpush1.bf16.msra.mxu0 0
    %513 = vmatprep.subr.bf16.mxu0 0
    %514 = vmatpush1.bf16.msra.mxu0 0
    %515 = vmatprep.subr.bf16.mxu0 %v493
    %516 = vmatpush1.bf16.msra.mxu0 %v490
    %517 = vmatprep.subr.bf16.mxu0 0
    %518 = vmatpush2.bf16.msra.mxu0 0
    %519 = vmatprep.subr.bf16.mxu0 0
    %520 = vmatpush2.bf16.msra.mxu0 0
    %521 = vmatprep.subr.bf16.mxu0 0
    %522 = vmatpush2.bf16.msra.mxu0 0
    %523 = vmatprep.subr.bf16.mxu0 0
    %524 = vmatpush2.bf16.msra.mxu0 0
    %525 = vmatprep.subr.bf16.mxu0 0
    %526 = vmatpush2.bf16.msra.mxu0 0
    %527 = vmatprep.subr.bf16.mxu0 0
    %528 = vmatpush2.bf16.msra.mxu0 0
    %529 = vmatprep.subr.bf16.mxu0 0
    %530 = vmatpush2.bf16.msra.mxu0 0
    %531 = vmatprep.subr.bf16.mxu0 0
    %532 = vmatpush2.bf16.msra.mxu0 0
    %533 = vmatprep.mubr.bf16.mxu0 0
    %534 = vmatmul.mubr.bf16.gmra.mxu0 %v487
    %v535 = vpop.f32.mrf.mxu0
    %v536 = vadd.f32 0.0, %v535
    %v537 = vpop.f32.mrf.mxu0
    %v538 = vadd.f32 0.0, %v537
    %v539 = vpop.f32.mrf.mxu0
    %v540 = vpop.f32.mrf.mxu0
    %541 = vdwg.mxu0
    %542 = vmatprep.subr.bf16.mxu0 0
    %543 = vmatpush1.bf16.msra.mxu0 0
    %544 = vmatprep.subr.bf16.mxu0 0
    %545 = vmatpush1.bf16.msra.mxu0 0
    %546 = vmatprep.subr.bf16.mxu0 0
    %547 = vmatpush1.bf16.msra.mxu0 0
    %548 = vmatprep.subr.bf16.mxu0 0
    %549 = vmatpush1.bf16.msra.mxu0 0
    %550 = vmatprep.subr.bf16.mxu0 0
    %551 = vmatpush1.bf16.msra.mxu0 0
    %552 = vmatprep.subr.bf16.mxu0 0
    %553 = vmatpush1.bf16.msra.mxu0 0
    %554 = vmatprep.subr.bf16.mxu0 0
    %555 = vmatpush1.bf16.msra.mxu0 0
    %556 = vmatprep.subr.bf16.mxu0 %v499
    %557 = vmatpush1.bf16.msra.mxu0 %v496
    %558 = vmatprep.subr.bf16.mxu0 0
    %559 = vmatpush2.bf16.msra.mxu0 0
    %560 = vmatprep.subr.bf16.mxu0 0
    %561 = vmatpush2.bf16.msra.mxu0 0
    %562 = vmatprep.subr.bf16.mxu0 0
    %563 = vmatpush2.bf16.msra.mxu0 0
    %564 = vmatprep.subr.bf16.mxu0 0
    %565 = vmatpush2.bf16.msra.mxu0 0
    %566 = vmatprep.subr.bf16.mxu0 0
    %567 = vmatpush2.bf16.msra.mxu0 0
    %568 = vmatprep.subr.bf16.mxu0 0
    %569 = vmatpush2.bf16.msra.mxu0 0
    %570 = vmatprep.subr.bf16.mxu0 0
    %571 = vmatpush2.bf16.msra.mxu0 0
    %572 = vmatprep.subr.bf16.mxu0 0
    %573 = vmatpush2.bf16.msra.mxu0 0
    %574 = vmatprep.mubr.bf16.mxu0 0
    %575 = vmatmul.mubr.bf16.gmra.mxu0 %v487
    %v576 = vpop.f32.mrf.mxu0
    %v577 = vadd.f32 0.0, %v576
    %v578 = vpop.f32.mrf.mxu0
    %v579 = vadd.f32 0.0, %v578
    %v580 = vpop.f32.mrf.mxu0
    %v581 = vpop.f32.mrf.mxu0
    %582 = vdwg.mxu0
    %v583 = vadd.f32 %v367, %v536
    %v584 = vadd.f32 %v369, %v538
    %v585 = vadd.f32 %v408, %v577
    %v586 = vadd.f32 %v410, %v579
    %587 = vrot.lane.b32.xlu0 %v71, 1
    %v588 = vpop.permute.xlu0 %587
    %589 = vrot.lane.b32.xlu0 %v68, 1
    %v590 = vpop.permute.xlu0 %589
    %591 = vrot.lane.b32.xlu0 %v69, 1
    %v592 = vpop.permute.xlu0 %591
    %593 = vrot.lane.b32.xlu0 %v70, 1
    %v594 = vpop.permute.xlu0 %593
    %vm595 = vcmask 7168
    %v596 = vsel %vm595, %v590, %v592
    %v597 = vsel %vm595, %v592, %v594
    %v598 = vsel %vm595, %v594, %v588
    %vm602 = vcmask 7168
    %v605 = vsel %vm602, %v588, %v590
    %v607 = vsel %vm60, 1, 0
    %v608 = vlaneseq
    %v609 = vshrl.u32 %v608, 7
    %v610 = vsub.s32 0, %v609
    %v611 = vrot.slane %v607, %v610
    %v612 = vlaneseq
    %v613 = vshrl.u32 %v612, 7
    %v614 = vsub.s32 1, %v613
    %v615 = vrot.slane %v607, %v614
    %v616 = vlaneseq
    %v617 = vshrl.u32 %v616, 7
    %v618 = vsub.s32 2, %v617
    %v619 = vrot.slane %v607, %v618
    %v620 = vlaneseq
    %v621 = vshrl.u32 %v620, 7
    %v622 = vsub.s32 3, %v621
    %v623 = vrot.slane %v607, %v622
    %vm624 = vcmp.eq.s32.totalorder %v611, 1
    %vm625 = vcmp.eq.s32.totalorder %v615, 1
    %vm626 = vcmp.eq.s32.totalorder %v619, 1
    %vm627 = vcmp.eq.s32.totalorder %v623, 1
    %vm628 = vmpackc.low %vm625, %vm624
    %vm629 = vmpackc.low %vm627, %vm626
    %v630 = vsel %vm628, 65537, 0
    %v631 = vsel %vm629, 65537, 0
    %v632 = vlaneseq
    %v633 = vshrl.u32 %v632, 7
    %v634 = vsub.s32 0, %v633
    %v635 = vrot.slane %v630, %v634
    %v636 = vlaneseq
    %v637 = vshrl.u32 %v636, 7
    %v638 = vsub.s32 4, %v637
    %v639 = vrot.slane %v630, %v638
    %v640 = vlaneseq
    %v641 = vshrl.u32 %v640, 7
    %v642 = vsub.s32 0, %v641
    %v643 = vrot.slane %v631, %v642
    %v644 = vlaneseq
    %v645 = vshrl.u32 %v644, 7
    %v646 = vsub.s32 4, %v645
    %v647 = vrot.slane %v631, %v646
    %vm648 = vcmp.ne.s16.totalorder %v635, 0
    %vm649 = vcmp.ne.s16.totalorder %v639, 0
    %vm650 = vcmp.ne.s16.totalorder %v643, 0
    %vm651 = vcmp.ne.s16.totalorder %v647, 0
    %v652 = vsel %vm648, %v605, 0
    %v653 = vsel %vm649, %v596, 0
    %v654 = vsel %vm650, %v597, 0
    %v655 = vsel %vm651, %v598, 0
    %s656 = scalar_lea.vmem %s1, 12
    %v657 = vld [vmem:[%s656] sm:$0xf]
    %v659 = vsel %vm218, %v657, 0
    %v662 = vsel %vm222, %v652, 0
    %v665 = vsel %vm222, %v653, 0
    %v668 = vsel %vm222, %v654, 0
    %v671 = vsel %vm222, %v655, 0
    %673 = vmatprep.subr.bf16.mxu0 0
    %674 = vmatpush1.bf16.msra.mxu0 0
    %675 = vmatprep.subr.bf16.mxu0 0
    %676 = vmatpush1.bf16.msra.mxu0 0
    %677 = vmatprep.subr.bf16.mxu0 0
    %678 = vmatpush1.bf16.msra.mxu0 0
    %679 = vmatprep.subr.bf16.mxu0 0
    %680 = vmatpush1.bf16.msra.mxu0 0
    %681 = vmatprep.subr.bf16.mxu0 0
    %682 = vmatpush1.bf16.msra.mxu0 0
    %683 = vmatprep.subr.bf16.mxu0 0
    %684 = vmatpush1.bf16.msra.mxu0 0
    %685 = vmatprep.subr.bf16.mxu0 0
    %686 = vmatpush1.bf16.msra.mxu0 0
    %687 = vmatprep.subr.bf16.mxu0 %v665
    %688 = vmatpush1.bf16.msra.mxu0 %v662
    %689 = vmatprep.subr.bf16.mxu0 0
    %690 = vmatpush2.bf16.msra.mxu0 0
    %691 = vmatprep.subr.bf16.mxu0 0
    %692 = vmatpush2.bf16.msra.mxu0 0
    %693 = vmatprep.subr.bf16.mxu0 0
    %694 = vmatpush2.bf16.msra.mxu0 0
    %695 = vmatprep.subr.bf16.mxu0 0
    %696 = vmatpush2.bf16.msra.mxu0 0
    %697 = vmatprep.subr.bf16.mxu0 0
    %698 = vmatpush2.bf16.msra.mxu0 0
    %699 = vmatprep.subr.bf16.mxu0 0
    %700 = vmatpush2.bf16.msra.mxu0 0
    %701 = vmatprep.subr.bf16.mxu0 0
    %702 = vmatpush2.bf16.msra.mxu0 0
    %703 = vmatprep.subr.bf16.mxu0 0
    %704 = vmatpush2.bf16.msra.mxu0 0
    %705 = vmatprep.mubr.bf16.mxu0 0
    %706 = vmatmul.mubr.bf16.gmra.mxu0 %v659
    %v707 = vpop.f32.mrf.mxu0
    %v708 = vadd.f32 0.0, %v707
    %v709 = vpop.f32.mrf.mxu0
    %v710 = vadd.f32 0.0, %v709
    %v711 = vpop.f32.mrf.mxu0
    %v712 = vpop.f32.mrf.mxu0
    %713 = vdwg.mxu0
    %714 = vmatprep.subr.bf16.mxu0 0
    %715 = vmatpush1.bf16.msra.mxu0 0
    %716 = vmatprep.subr.bf16.mxu0 0
    %717 = vmatpush1.bf16.msra.mxu0 0
    %718 = vmatprep.subr.bf16.mxu0 0
    %719 = vmatpush1.bf16.msra.mxu0 0
    %720 = vmatprep.subr.bf16.mxu0 0
    %721 = vmatpush1.bf16.msra.mxu0 0
    %722 = vmatprep.subr.bf16.mxu0 0
    %723 = vmatpush1.bf16.msra.mxu0 0
    %724 = vmatprep.subr.bf16.mxu0 0
    %725 = vmatpush1.bf16.msra.mxu0 0
    %726 = vmatprep.subr.bf16.mxu0 0
    %727 = vmatpush1.bf16.msra.mxu0 0
    %728 = vmatprep.subr.bf16.mxu0 %v671
    %729 = vmatpush1.bf16.msra.mxu0 %v668
    %730 = vmatprep.subr.bf16.mxu0 0
    %731 = vmatpush2.bf16.msra.mxu0 0
    %732 = vmatprep.subr.bf16.mxu0 0
    %733 = vmatpush2.bf16.msra.mxu0 0
    %734 = vmatprep.subr.bf16.mxu0 0
    %735 = vmatpush2.bf16.msra.mxu0 0
    %736 = vmatprep.subr.bf16.mxu0 0
    %737 = vmatpush2.bf16.msra.mxu0 0
    %738 = vmatprep.subr.bf16.mxu0 0
    %739 = vmatpush2.bf16.msra.mxu0 0
    %740 = vmatprep.subr.bf16.mxu0 0
    %741 = vmatpush2.bf16.msra.mxu0 0
    %742 = vmatprep.subr.bf16.mxu0 0
    %743 = vmatpush2.bf16.msra.mxu0 0
    %744 = vmatprep.subr.bf16.mxu0 0
    %745 = vmatpush2.bf16.msra.mxu0 0
    %746 = vmatprep.mubr.bf16.mxu0 0
    %747 = vmatmul.mubr.bf16.gmra.mxu0 %v659
    %v748 = vpop.f32.mrf.mxu0
    %v749 = vadd.f32 0.0, %v748
    %v750 = vpop.f32.mrf.mxu0
    %v751 = vadd.f32 0.0, %v750
    %v752 = vpop.f32.mrf.mxu0
    %v753 = vpop.f32.mrf.mxu0
    %754 = vdwg.mxu0
    %v755 = vadd.f32 %v583, %v708
    %v756 = vadd.f32 %v584, %v710
    %v757 = vadd.f32 %v585, %v749
    %v758 = vadd.f32 %v586, %v751
    %s759 = scalar_lea.vmem %s1, 16
    %v760 = vld [vmem:[%s759] sm:$0xf]
    %v762 = vsel %vm218, %v760, 0
    %v765 = vsel %vm222, %v68, 0
    %v768 = vsel %vm222, %v69, 0
    %v771 = vsel %vm222, %v70, 0
    %v774 = vsel %vm222, %v71, 0
    %776 = vmatprep.subr.bf16.mxu0 0
    %777 = vmatpush1.bf16.msra.mxu0 0
    %778 = vmatprep.subr.bf16.mxu0 0
    %779 = vmatpush1.bf16.msra.mxu0 0
    %780 = vmatprep.subr.bf16.mxu0 0
    %781 = vmatpush1.bf16.msra.mxu0 0
    %782 = vmatprep.subr.bf16.mxu0 0
    %783 = vmatpush1.bf16.msra.mxu0 0
    %784 = vmatprep.subr.bf16.mxu0 0
    %785 = vmatpush1.bf16.msra.mxu0 0
    %786 = vmatprep.subr.bf16.mxu0 0
    %787 = vmatpush1.bf16.msra.mxu0 0
    %788 = vmatprep.subr.bf16.mxu0 0
    %789 = vmatpush1.bf16.msra.mxu0 0
    %790 = vmatprep.subr.bf16.mxu0 %v768
    %791 = vmatpush1.bf16.msra.mxu0 %v765
    %792 = vmatprep.subr.bf16.mxu0 0
    %793 = vmatpush2.bf16.msra.mxu0 0
    %794 = vmatprep.subr.bf16.mxu0 0
    %795 = vmatpush2.bf16.msra.mxu0 0
    %796 = vmatprep.subr.bf16.mxu0 0
    %797 = vmatpush2.bf16.msra.mxu0 0
    %798 = vmatprep.subr.bf16.mxu0 0
    %799 = vmatpush2.bf16.msra.mxu0 0
    %800 = vmatprep.subr.bf16.mxu0 0
    %801 = vmatpush2.bf16.msra.mxu0 0
    %802 = vmatprep.subr.bf16.mxu0 0
    %803 = vmatpush2.bf16.msra.mxu0 0
    %804 = vmatprep.subr.bf16.mxu0 0
    %805 = vmatpush2.bf16.msra.mxu0 0
    %806 = vmatprep.subr.bf16.mxu0 0
    %807 = vmatpush2.bf16.msra.mxu0 0
    %808 = vmatprep.mubr.bf16.mxu0 0
    %809 = vmatmul.mubr.bf16.gmra.mxu0 %v762
    %v810 = vpop.f32.mrf.mxu0
    %v811 = vadd.f32 0.0, %v810
    %v812 = vpop.f32.mrf.mxu0
    %v813 = vadd.f32 0.0, %v812
    %v814 = vpop.f32.mrf.mxu0
    %v815 = vpop.f32.mrf.mxu0
    %816 = vdwg.mxu0
    %817 = vmatprep.subr.bf16.mxu0 0
    %818 = vmatpush1.bf16.msra.mxu0 0
    %819 = vmatprep.subr.bf16.mxu0 0
    %820 = vmatpush1.bf16.msra.mxu0 0
    %821 = vmatprep.subr.bf16.mxu0 0
    %822 = vmatpush1.bf16.msra.mxu0 0
    %823 = vmatprep.subr.bf16.mxu0 0
    %824 = vmatpush1.bf16.msra.mxu0 0
    %825 = vmatprep.subr.bf16.mxu0 0
    %826 = vmatpush1.bf16.msra.mxu0 0
    %827 = vmatprep.subr.bf16.mxu0 0
    %828 = vmatpush1.bf16.msra.mxu0 0
    %829 = vmatprep.subr.bf16.mxu0 0
    %830 = vmatpush1.bf16.msra.mxu0 0
    %831 = vmatprep.subr.bf16.mxu0 %v774
    %832 = vmatpush1.bf16.msra.mxu0 %v771
    %833 = vmatprep.subr.bf16.mxu0 0
    %834 = vmatpush2.bf16.msra.mxu0 0
    %835 = vmatprep.subr.bf16.mxu0 0
    %836 = vmatpush2.bf16.msra.mxu0 0
    %837 = vmatprep.subr.bf16.mxu0 0
    %838 = vmatpush2.bf16.msra.mxu0 0
    %839 = vmatprep.subr.bf16.mxu0 0
    %840 = vmatpush2.bf16.msra.mxu0 0
    %841 = vmatprep.subr.bf16.mxu0 0
    %842 = vmatpush2.bf16.msra.mxu0 0
    %843 = vmatprep.subr.bf16.mxu0 0
    %844 = vmatpush2.bf16.msra.mxu0 0
    %845 = vmatprep.subr.bf16.mxu0 0
    %846 = vmatpush2.bf16.msra.mxu0 0
    %847 = vmatprep.subr.bf16.mxu0 0
    %848 = vmatpush2.bf16.msra.mxu0 0
    %849 = vmatprep.mubr.bf16.mxu0 0
    %850 = vmatmul.mubr.bf16.gmra.mxu0 %v762
    %v851 = vpop.f32.mrf.mxu0
    %v852 = vadd.f32 0.0, %v851
    %v853 = vpop.f32.mrf.mxu0
    %v854 = vadd.f32 0.0, %v853
    %v855 = vpop.f32.mrf.mxu0
    %v856 = vpop.f32.mrf.mxu0
    %857 = vdwg.mxu0
    %v858 = vadd.f32 %v755, %v811
    %v859 = vadd.f32 %v756, %v813
    %v860 = vadd.f32 %v757, %v852
    %v861 = vadd.f32 %v758, %v854
    %862 = vrot.lane.b32.xlu0 %v68, 127
    %v863 = vpop.permute.xlu0 %862
    %864 = vrot.lane.b32.xlu0 %v69, 127
    %v865 = vpop.permute.xlu0 %864
    %866 = vrot.lane.b32.xlu0 %v70, 127
    %v867 = vpop.permute.xlu0 %866
    %868 = vrot.lane.b32.xlu0 %v71, 127
    %v869 = vpop.permute.xlu0 %868
    %vm870 = vcmask 1039360
    %v871 = vsel %vm870, %v863, %v865
    %v872 = vsel %vm870, %v865, %v867
    %v873 = vsel %vm870, %v867, %v869
    %vm877 = vcmask 1039360
    %v880 = vsel %vm877, %v869, %v863
    %v882 = vsel %vm61, 1, 0
    %v883 = vlaneseq
    %v884 = vshrl.u32 %v883, 7
    %v885 = vsub.s32 0, %v884
    %v886 = vrot.slane %v882, %v885
    %v887 = vlaneseq
    %v888 = vshrl.u32 %v887, 7
    %v889 = vsub.s32 1, %v888
    %v890 = vrot.slane %v882, %v889
    %v891 = vlaneseq
    %v892 = vshrl.u32 %v891, 7
    %v893 = vsub.s32 2, %v892
    %v894 = vrot.slane %v882, %v893
    %v895 = vlaneseq
    %v896 = vshrl.u32 %v895, 7
    %v897 = vsub.s32 3, %v896
    %v898 = vrot.slane %v882, %v897
    %vm899 = vcmp.eq.s32.totalorder %v886, 1
    %vm900 = vcmp.eq.s32.totalorder %v890, 1
    %vm901 = vcmp.eq.s32.totalorder %v894, 1
    %vm902 = vcmp.eq.s32.totalorder %v898, 1
    %vm903 = vmpackc.low %vm900, %vm899
    %vm904 = vmpackc.low %vm902, %vm901
    %v905 = vsel %vm903, 65537, 0
    %v906 = vsel %vm904, 65537, 0
    %v907 = vlaneseq
    %v908 = vshrl.u32 %v907, 7
    %v909 = vsub.s32 0, %v908
    %v910 = vrot.slane %v905, %v909
    %v911 = vlaneseq
    %v912 = vshrl.u32 %v911, 7
    %v913 = vsub.s32 4, %v912
    %v914 = vrot.slane %v905, %v913
    %v915 = vlaneseq
    %v916 = vshrl.u32 %v915, 7
    %v917 = vsub.s32 0, %v916
    %v918 = vrot.slane %v906, %v917
    %v919 = vlaneseq
    %v920 = vshrl.u32 %v919, 7
    %v921 = vsub.s32 4, %v920
    %v922 = vrot.slane %v906, %v921
    %vm923 = vcmp.ne.s16.totalorder %v910, 0
    %vm924 = vcmp.ne.s16.totalorder %v914, 0
    %vm925 = vcmp.ne.s16.totalorder %v918, 0
    %vm926 = vcmp.ne.s16.totalorder %v922, 0
    %v927 = vsel %vm923, %v871, 0
    %v928 = vsel %vm924, %v872, 0
    %v929 = vsel %vm925, %v873, 0
    %v930 = vsel %vm926, %v880, 0
    %s931 = scalar_lea.vmem %s1, 20
    %v932 = vld [vmem:[%s931] sm:$0xf]
    %v934 = vsel %vm218, %v932, 0
    %v937 = vsel %vm222, %v927, 0
    %v940 = vsel %vm222, %v928, 0
    %v943 = vsel %vm222, %v929, 0
    %v946 = vsel %vm222, %v930, 0
    %948 = vmatprep.subr.bf16.mxu0 0
    %949 = vmatpush1.bf16.msra.mxu0 0
    %950 = vmatprep.subr.bf16.mxu0 0
    %951 = vmatpush1.bf16.msra.mxu0 0
    %952 = vmatprep.subr.bf16.mxu0 0
    %953 = vmatpush1.bf16.msra.mxu0 0
    %954 = vmatprep.subr.bf16.mxu0 0
    %955 = vmatpush1.bf16.msra.mxu0 0
    %956 = vmatprep.subr.bf16.mxu0 0
    %957 = vmatpush1.bf16.msra.mxu0 0
    %958 = vmatprep.subr.bf16.mxu0 0
    %959 = vmatpush1.bf16.msra.mxu0 0
    %960 = vmatprep.subr.bf16.mxu0 0
    %961 = vmatpush1.bf16.msra.mxu0 0
    %962 = vmatprep.subr.bf16.mxu0 %v940
    %963 = vmatpush1.bf16.msra.mxu0 %v937
    %964 = vmatprep.subr.bf16.mxu0 0
    %965 = vmatpush2.bf16.msra.mxu0 0
    %966 = vmatprep.subr.bf16.mxu0 0
    %967 = vmatpush2.bf16.msra.mxu0 0
    %968 = vmatprep.subr.bf16.mxu0 0
    %969 = vmatpush2.bf16.msra.mxu0 0
    %970 = vmatprep.subr.bf16.mxu0 0
    %971 = vmatpush2.bf16.msra.mxu0 0
    %972 = vmatprep.subr.bf16.mxu0 0
    %973 = vmatpush2.bf16.msra.mxu0 0
    %974 = vmatprep.subr.bf16.mxu0 0
    %975 = vmatpush2.bf16.msra.mxu0 0
    %976 = vmatprep.subr.bf16.mxu0 0
    %977 = vmatpush2.bf16.msra.mxu0 0
    %978 = vmatprep.subr.bf16.mxu0 0
    %979 = vmatpush2.bf16.msra.mxu0 0
    %980 = vmatprep.mubr.bf16.mxu0 0
    %981 = vmatmul.mubr.bf16.gmra.mxu0 %v934
    %v982 = vpop.f32.mrf.mxu0
    %v983 = vadd.f32 0.0, %v982
    %v984 = vpop.f32.mrf.mxu0
    %v985 = vadd.f32 0.0, %v984
    %v986 = vpop.f32.mrf.mxu0
    %v987 = vpop.f32.mrf.mxu0
    %988 = vdwg.mxu0
    %989 = vmatprep.subr.bf16.mxu0 0
    %990 = vmatpush1.bf16.msra.mxu0 0
    %991 = vmatprep.subr.bf16.mxu0 0
    %992 = vmatpush1.bf16.msra.mxu0 0
    %993 = vmatprep.subr.bf16.mxu0 0
    %994 = vmatpush1.bf16.msra.mxu0 0
    %995 = vmatprep.subr.bf16.mxu0 0
    %996 = vmatpush1.bf16.msra.mxu0 0
    %997 = vmatprep.subr.bf16.mxu0 0
    %998 = vmatpush1.bf16.msra.mxu0 0
    %999 = vmatprep.subr.bf16.mxu0 0
    %1000 = vmatpush1.bf16.msra.mxu0 0
    %1001 = vmatprep.subr.bf16.mxu0 0
    %1002 = vmatpush1.bf16.msra.mxu0 0
    %1003 = vmatprep.subr.bf16.mxu0 %v946
    %1004 = vmatpush1.bf16.msra.mxu0 %v943
    %1005 = vmatprep.subr.bf16.mxu0 0
    %1006 = vmatpush2.bf16.msra.mxu0 0
    %1007 = vmatprep.subr.bf16.mxu0 0
    %1008 = vmatpush2.bf16.msra.mxu0 0
    %1009 = vmatprep.subr.bf16.mxu0 0
    %1010 = vmatpush2.bf16.msra.mxu0 0
    %1011 = vmatprep.subr.bf16.mxu0 0
    %1012 = vmatpush2.bf16.msra.mxu0 0
    %1013 = vmatprep.subr.bf16.mxu0 0
    %1014 = vmatpush2.bf16.msra.mxu0 0
    %1015 = vmatprep.subr.bf16.mxu0 0
    %1016 = vmatpush2.bf16.msra.mxu0 0
    %1017 = vmatprep.subr.bf16.mxu0 0
    %1018 = vmatpush2.bf16.msra.mxu0 0
    %1019 = vmatprep.subr.bf16.mxu0 0
    %1020 = vmatpush2.bf16.msra.mxu0 0
    %1021 = vmatprep.mubr.bf16.mxu0 0
    %1022 = vmatmul.mubr.bf16.gmra.mxu0 %v934
    %v1023 = vpop.f32.mrf.mxu0
    %v1024 = vadd.f32 0.0, %v1023
    %v1025 = vpop.f32.mrf.mxu0
    %v1026 = vadd.f32 0.0, %v1025
    %v1027 = vpop.f32.mrf.mxu0
    %v1028 = vpop.f32.mrf.mxu0
    %1029 = vdwg.mxu0
    %v1030 = vadd.f32 %v858, %v983
    %v1031 = vadd.f32 %v859, %v985
    %v1032 = vadd.f32 %v860, %v1024
    %v1033 = vadd.f32 %v861, %v1026
    %1034 = vrot.lane.b32.xlu0 %v68, 113
    %v1035 = vpop.permute.xlu0 %1034
    %1036 = vrot.lane.b32.xlu0 %v69, 113
    %v1037 = vpop.permute.xlu0 %1036
    %1038 = vrot.lane.b32.xlu0 %v70, 113
    %v1039 = vpop.permute.xlu0 %1038
    %1040 = vrot.lane.b32.xlu0 %v71, 113
    %v1041 = vpop.permute.xlu0 %1040
    %vm1042 = vcmask 924672
    %v1043 = vsel %vm1042, %v1035, %v1037
    %v1044 = vsel %vm1042, %v1037, %v1039
    %v1045 = vsel %vm1042, %v1039, %v1041
    %vm1049 = vcmask 924672
    %v1052 = vsel %vm1049, %v1041, %v1035
    %vm1054 = vmand %vm59, %vm60
    %v1055 = vsel %vm1054, 1, 0
    %v1056 = vlaneseq
    %v1057 = vshrl.u32 %v1056, 7
    %v1058 = vsub.s32 0, %v1057
    %v1059 = vrot.slane %v1055, %v1058
    %v1060 = vlaneseq
    %v1061 = vshrl.u32 %v1060, 7
    %v1062 = vsub.s32 1, %v1061
    %v1063 = vrot.slane %v1055, %v1062
    %v1064 = vlaneseq
    %v1065 = vshrl.u32 %v1064, 7
    %v1066 = vsub.s32 2, %v1065
    %v1067 = vrot.slane %v1055, %v1066
    %v1068 = vlaneseq
    %v1069 = vshrl.u32 %v1068, 7
    %v1070 = vsub.s32 3, %v1069
    %v1071 = vrot.slane %v1055, %v1070
    %vm1072 = vcmp.eq.s32.totalorder %v1059, 1
    %vm1073 = vcmp.eq.s32.totalorder %v1063, 1
    %vm1074 = vcmp.eq.s32.totalorder %v1067, 1
    %vm1075 = vcmp.eq.s32.totalorder %v1071, 1
    %vm1076 = vmpackc.low %vm1073, %vm1072
    %vm1077 = vmpackc.low %vm1075, %vm1074
    %v1078 = vsel %vm1076, 65537, 0
    %v1079 = vsel %vm1077, 65537, 0
    %v1080 = vlaneseq
    %v1081 = vshrl.u32 %v1080, 7
    %v1082 = vsub.s32 0, %v1081
    %v1083 = vrot.slane %v1078, %v1082
    %v1084 = vlaneseq
    %v1085 = vshrl.u32 %v1084, 7
    %v1086 = vsub.s32 4, %v1085
    %v1087 = vrot.slane %v1078, %v1086
    %v1088 = vlaneseq
    %v1089 = vshrl.u32 %v1088, 7
    %v1090 = vsub.s32 0, %v1089
    %v1091 = vrot.slane %v1079, %v1090
    %v1092 = vlaneseq
    %v1093 = vshrl.u32 %v1092, 7
    %v1094 = vsub.s32 4, %v1093
    %v1095 = vrot.slane %v1079, %v1094
    %vm1096 = vcmp.ne.s16.totalorder %v1083, 0
    %vm1097 = vcmp.ne.s16.totalorder %v1087, 0
    %vm1098 = vcmp.ne.s16.totalorder %v1091, 0
    %vm1099 = vcmp.ne.s16.totalorder %v1095, 0
    %v1100 = vsel %vm1096, %v1043, 0
    %v1101 = vsel %vm1097, %v1044, 0
    %v1102 = vsel %vm1098, %v1045, 0
    %v1103 = vsel %vm1099, %v1052, 0
    %s1104 = scalar_lea.vmem %s1, 24
    %v1105 = vld [vmem:[%s1104] sm:$0xf]
    %v1107 = vsel %vm218, %v1105, 0
    %v1110 = vsel %vm222, %v1100, 0
    %v1113 = vsel %vm222, %v1101, 0
    %v1116 = vsel %vm222, %v1102, 0
    %v1119 = vsel %vm222, %v1103, 0
    %1121 = vmatprep.subr.bf16.mxu0 0
    %1122 = vmatpush1.bf16.msra.mxu0 0
    %1123 = vmatprep.subr.bf16.mxu0 0
    %1124 = vmatpush1.bf16.msra.mxu0 0
    %1125 = vmatprep.subr.bf16.mxu0 0
    %1126 = vmatpush1.bf16.msra.mxu0 0
    %1127 = vmatprep.subr.bf16.mxu0 0
    %1128 = vmatpush1.bf16.msra.mxu0 0
    %1129 = vmatprep.subr.bf16.mxu0 0
    %1130 = vmatpush1.bf16.msra.mxu0 0
    %1131 = vmatprep.subr.bf16.mxu0 0
    %1132 = vmatpush1.bf16.msra.mxu0 0
    %1133 = vmatprep.subr.bf16.mxu0 0
    %1134 = vmatpush1.bf16.msra.mxu0 0
    %1135 = vmatprep.subr.bf16.mxu0 %v1113
    %1136 = vmatpush1.bf16.msra.mxu0 %v1110
    %1137 = vmatprep.subr.bf16.mxu0 0
    %1138 = vmatpush2.bf16.msra.mxu0 0
    %1139 = vmatprep.subr.bf16.mxu0 0
    %1140 = vmatpush2.bf16.msra.mxu0 0
    %1141 = vmatprep.subr.bf16.mxu0 0
    %1142 = vmatpush2.bf16.msra.mxu0 0
    %1143 = vmatprep.subr.bf16.mxu0 0
    %1144 = vmatpush2.bf16.msra.mxu0 0
    %1145 = vmatprep.subr.bf16.mxu0 0
    %1146 = vmatpush2.bf16.msra.mxu0 0
    %1147 = vmatprep.subr.bf16.mxu0 0
    %1148 = vmatpush2.bf16.msra.mxu0 0
    %1149 = vmatprep.subr.bf16.mxu0 0
    %1150 = vmatpush2.bf16.msra.mxu0 0
    %1151 = vmatprep.subr.bf16.mxu0 0
    %1152 = vmatpush2.bf16.msra.mxu0 0
    %1153 = vmatprep.mubr.bf16.mxu0 0
    %1154 = vmatmul.mubr.bf16.gmra.mxu0 %v1107
    %v1155 = vpop.f32.mrf.mxu0
    %v1156 = vadd.f32 0.0, %v1155
    %v1157 = vpop.f32.mrf.mxu0
    %v1158 = vadd.f32 0.0, %v1157
    %v1159 = vpop.f32.mrf.mxu0
    %v1160 = vpop.f32.mrf.mxu0
    %1161 = vdwg.mxu0
    %1162 = vmatprep.subr.bf16.mxu0 0
    %1163 = vmatpush1.bf16.msra.mxu0 0
    %1164 = vmatprep.subr.bf16.mxu0 0
    %1165 = vmatpush1.bf16.msra.mxu0 0
    %1166 = vmatprep.subr.bf16.mxu0 0
    %1167 = vmatpush1.bf16.msra.mxu0 0
    %1168 = vmatprep.subr.bf16.mxu0 0
    %1169 = vmatpush1.bf16.msra.mxu0 0
    %1170 = vmatprep.subr.bf16.mxu0 0
    %1171 = vmatpush1.bf16.msra.mxu0 0
    %1172 = vmatprep.subr.bf16.mxu0 0
    %1173 = vmatpush1.bf16.msra.mxu0 0
    %1174 = vmatprep.subr.bf16.mxu0 0
    %1175 = vmatpush1.bf16.msra.mxu0 0
    %1176 = vmatprep.subr.bf16.mxu0 %v1119
    %1177 = vmatpush1.bf16.msra.mxu0 %v1116
    %1178 = vmatprep.subr.bf16.mxu0 0
    %1179 = vmatpush2.bf16.msra.mxu0 0
    %1180 = vmatprep.subr.bf16.mxu0 0
    %1181 = vmatpush2.bf16.msra.mxu0 0
    %1182 = vmatprep.subr.bf16.mxu0 0
    %1183 = vmatpush2.bf16.msra.mxu0 0
    %1184 = vmatprep.subr.bf16.mxu0 0
    %1185 = vmatpush2.bf16.msra.mxu0 0
    %1186 = vmatprep.subr.bf16.mxu0 0
    %1187 = vmatpush2.bf16.msra.mxu0 0
    %1188 = vmatprep.subr.bf16.mxu0 0
    %1189 = vmatpush2.bf16.msra.mxu0 0
    %1190 = vmatprep.subr.bf16.mxu0 0
    %1191 = vmatpush2.bf16.msra.mxu0 0
    %1192 = vmatprep.subr.bf16.mxu0 0
    %1193 = vmatpush2.bf16.msra.mxu0 0
    %1194 = vmatprep.mubr.bf16.mxu0 0
    %1195 = vmatmul.mubr.bf16.gmra.mxu0 %v1107
    %v1196 = vpop.f32.mrf.mxu0
    %v1197 = vadd.f32 0.0, %v1196
    %v1198 = vpop.f32.mrf.mxu0
    %v1199 = vadd.f32 0.0, %v1198
    %v1200 = vpop.f32.mrf.mxu0
    %v1201 = vpop.f32.mrf.mxu0
    %1202 = vdwg.mxu0
    %v1203 = vadd.f32 %v1030, %v1156
    %v1204 = vadd.f32 %v1031, %v1158
    %v1205 = vadd.f32 %v1032, %v1197
    %v1206 = vadd.f32 %v1033, %v1199
    %1207 = vrot.lane.b32.xlu0 %v68, 112
    %v1208 = vpop.permute.xlu0 %1207
    %1209 = vrot.lane.b32.xlu0 %v69, 112
    %v1210 = vpop.permute.xlu0 %1209
    %1211 = vrot.lane.b32.xlu0 %v70, 112
    %v1212 = vpop.permute.xlu0 %1211
    %1213 = vrot.lane.b32.xlu0 %v71, 112
    %v1214 = vpop.permute.xlu0 %1213
    %vm1215 = vcmask 916480
    %v1216 = vsel %vm1215, %v1208, %v1210
    %v1217 = vsel %vm1215, %v1210, %v1212
    %v1218 = vsel %vm1215, %v1212, %v1214
    %vm1222 = vcmask 916480
    %v1225 = vsel %vm1222, %v1214, %v1208
    %v1227 = vsel %vm59, 1, 0
    %v1228 = vlaneseq
    %v1229 = vshrl.u32 %v1228, 7
    %v1230 = vsub.s32 0, %v1229
    %v1231 = vrot.slane %v1227, %v1230
    %v1232 = vlaneseq
    %v1233 = vshrl.u32 %v1232, 7
    %v1234 = vsub.s32 1, %v1233
    %v1235 = vrot.slane %v1227, %v1234
    %v1236 = vlaneseq
    %v1237 = vshrl.u32 %v1236, 7
    %v1238 = vsub.s32 2, %v1237
    %v1239 = vrot.slane %v1227, %v1238
    %v1240 = vlaneseq
    %v1241 = vshrl.u32 %v1240, 7
    %v1242 = vsub.s32 3, %v1241
    %v1243 = vrot.slane %v1227, %v1242
    %vm1244 = vcmp.eq.s32.totalorder %v1231, 1
    %vm1245 = vcmp.eq.s32.totalorder %v1235, 1
    %vm1246 = vcmp.eq.s32.totalorder %v1239, 1
    %vm1247 = vcmp.eq.s32.totalorder %v1243, 1
    %vm1248 = vmpackc.low %vm1245, %vm1244
    %vm1249 = vmpackc.low %vm1247, %vm1246
    %v1250 = vsel %vm1248, 65537, 0
    %v1251 = vsel %vm1249, 65537, 0
    %v1252 = vlaneseq
    %v1253 = vshrl.u32 %v1252, 7
    %v1254 = vsub.s32 0, %v1253
    %v1255 = vrot.slane %v1250, %v1254
    %v1256 = vlaneseq
    %v1257 = vshrl.u32 %v1256, 7
    %v1258 = vsub.s32 4, %v1257
    %v1259 = vrot.slane %v1250, %v1258
    %v1260 = vlaneseq
    %v1261 = vshrl.u32 %v1260, 7
    %v1262 = vsub.s32 0, %v1261
    %v1263 = vrot.slane %v1251, %v1262
    %v1264 = vlaneseq
    %v1265 = vshrl.u32 %v1264, 7
    %v1266 = vsub.s32 4, %v1265
    %v1267 = vrot.slane %v1251, %v1266
    %vm1268 = vcmp.ne.s16.totalorder %v1255, 0
    %vm1269 = vcmp.ne.s16.totalorder %v1259, 0
    %vm1270 = vcmp.ne.s16.totalorder %v1263, 0
    %vm1271 = vcmp.ne.s16.totalorder %v1267, 0
    %v1272 = vsel %vm1268, %v1216, 0
    %v1273 = vsel %vm1269, %v1217, 0
    %v1274 = vsel %vm1270, %v1218, 0
    %v1275 = vsel %vm1271, %v1225, 0
    %s1276 = scalar_lea.vmem %s1, 28
    %v1277 = vld [vmem:[%s1276] sm:$0xf]
    %v1279 = vsel %vm218, %v1277, 0
    %v1282 = vsel %vm222, %v1272, 0
    %v1285 = vsel %vm222, %v1273, 0
    %v1288 = vsel %vm222, %v1274, 0
    %v1291 = vsel %vm222, %v1275, 0
    %1293 = vmatprep.subr.bf16.mxu0 0
    %1294 = vmatpush1.bf16.msra.mxu0 0
    %1295 = vmatprep.subr.bf16.mxu0 0
    %1296 = vmatpush1.bf16.msra.mxu0 0
    %1297 = vmatprep.subr.bf16.mxu0 0
    %1298 = vmatpush1.bf16.msra.mxu0 0
    %1299 = vmatprep.subr.bf16.mxu0 0
    %1300 = vmatpush1.bf16.msra.mxu0 0
    %1301 = vmatprep.subr.bf16.mxu0 0
    %1302 = vmatpush1.bf16.msra.mxu0 0
    %1303 = vmatprep.subr.bf16.mxu0 0
    %1304 = vmatpush1.bf16.msra.mxu0 0
    %1305 = vmatprep.subr.bf16.mxu0 0
    %1306 = vmatpush1.bf16.msra.mxu0 0
    %1307 = vmatprep.subr.bf16.mxu0 %v1285
    %1308 = vmatpush1.bf16.msra.mxu0 %v1282
    %1309 = vmatprep.subr.bf16.mxu0 0
    %1310 = vmatpush2.bf16.msra.mxu0 0
    %1311 = vmatprep.subr.bf16.mxu0 0
    %1312 = vmatpush2.bf16.msra.mxu0 0
    %1313 = vmatprep.subr.bf16.mxu0 0
    %1314 = vmatpush2.bf16.msra.mxu0 0
    %1315 = vmatprep.subr.bf16.mxu0 0
    %1316 = vmatpush2.bf16.msra.mxu0 0
    %1317 = vmatprep.subr.bf16.mxu0 0
    %1318 = vmatpush2.bf16.msra.mxu0 0
    %1319 = vmatprep.subr.bf16.mxu0 0
    %1320 = vmatpush2.bf16.msra.mxu0 0
    %1321 = vmatprep.subr.bf16.mxu0 0
    %1322 = vmatpush2.bf16.msra.mxu0 0
    %1323 = vmatprep.subr.bf16.mxu0 0
    %1324 = vmatpush2.bf16.msra.mxu0 0
    %1325 = vmatprep.mubr.bf16.mxu0 0
    %1326 = vmatmul.mubr.bf16.gmra.mxu0 %v1279
    %v1327 = vpop.f32.mrf.mxu0
    %v1328 = vadd.f32 0.0, %v1327
    %v1329 = vpop.f32.mrf.mxu0
    %v1330 = vadd.f32 0.0, %v1329
    %v1331 = vpop.f32.mrf.mxu0
    %v1332 = vpop.f32.mrf.mxu0
    %1333 = vdwg.mxu0
    %1334 = vmatprep.subr.bf16.mxu0 0
    %1335 = vmatpush1.bf16.msra.mxu0 0
    %1336 = vmatprep.subr.bf16.mxu0 0
    %1337 = vmatpush1.bf16.msra.mxu0 0
    %1338 = vmatprep.subr.bf16.mxu0 0
    %1339 = vmatpush1.bf16.msra.mxu0 0
    %1340 = vmatprep.subr.bf16.mxu0 0
    %1341 = vmatpush1.bf16.msra.mxu0 0
    %1342 = vmatprep.subr.bf16.mxu0 0
    %1343 = vmatpush1.bf16.msra.mxu0 0
    %1344 = vmatprep.subr.bf16.mxu0 0
    %1345 = vmatpush1.bf16.msra.mxu0 0
    %1346 = vmatprep.subr.bf16.mxu0 0
    %1347 = vmatpush1.bf16.msra.mxu0 0
    %1348 = vmatprep.subr.bf16.mxu0 %v1291
    %1349 = vmatpush1.bf16.msra.mxu0 %v1288
    %1350 = vmatprep.subr.bf16.mxu0 0
    %1351 = vmatpush2.bf16.msra.mxu0 0
    %1352 = vmatprep.subr.bf16.mxu0 0
    %1353 = vmatpush2.bf16.msra.mxu0 0
    %1354 = vmatprep.subr.bf16.mxu0 0
    %1355 = vmatpush2.bf16.msra.mxu0 0
    %1356 = vmatprep.subr.bf16.mxu0 0
    %1357 = vmatpush2.bf16.msra.mxu0 0
    %1358 = vmatprep.subr.bf16.mxu0 0
    %1359 = vmatpush2.bf16.msra.mxu0 0
    %1360 = vmatprep.subr.bf16.mxu0 0
    %1361 = vmatpush2.bf16.msra.mxu0 0
    %1362 = vmatprep.subr.bf16.mxu0 0
    %1363 = vmatpush2.bf16.msra.mxu0 0
    %1364 = vmatprep.subr.bf16.mxu0 0
    %1365 = vmatpush2.bf16.msra.mxu0 0
    %1366 = vmatprep.mubr.bf16.mxu0 0
    %1367 = vmatmul.mubr.bf16.gmra.mxu0 %v1279
    %v1368 = vpop.f32.mrf.mxu0
    %v1369 = vadd.f32 0.0, %v1368
    %v1370 = vpop.f32.mrf.mxu0
    %v1371 = vadd.f32 0.0, %v1370
    %v1372 = vpop.f32.mrf.mxu0
    %v1373 = vpop.f32.mrf.mxu0
    %1374 = vdwg.mxu0
    %v1375 = vadd.f32 %v1203, %v1328
    %v1376 = vadd.f32 %v1204, %v1330
    %v1377 = vadd.f32 %v1205, %v1369
    %v1378 = vadd.f32 %v1206, %v1371
    %1379 = vrot.lane.b32.xlu0 %v68, 111
    %v1380 = vpop.permute.xlu0 %1379
    %1381 = vrot.lane.b32.xlu0 %v69, 111
    %v1382 = vpop.permute.xlu0 %1381
    %1383 = vrot.lane.b32.xlu0 %v70, 111
    %v1384 = vpop.permute.xlu0 %1383
    %1385 = vrot.lane.b32.xlu0 %v71, 111
    %v1386 = vpop.permute.xlu0 %1385
    %vm1387 = vcmask 908288
    %v1388 = vsel %vm1387, %v1380, %v1382
    %v1389 = vsel %vm1387, %v1382, %v1384
    %v1390 = vsel %vm1387, %v1384, %v1386
    %vm1394 = vcmask 908288
    %v1397 = vsel %vm1394, %v1386, %v1380
    %vm1399 = vmand %vm59, %vm61
    %v1400 = vsel %vm1399, 1, 0
    %v1401 = vlaneseq
    %v1402 = vshrl.u32 %v1401, 7
    %v1403 = vsub.s32 0, %v1402
    %v1404 = vrot.slane %v1400, %v1403
    %v1405 = vlaneseq
    %v1406 = vshrl.u32 %v1405, 7
    %v1407 = vsub.s32 1, %v1406
    %v1408 = vrot.slane %v1400, %v1407
    %v1409 = vlaneseq
    %v1410 = vshrl.u32 %v1409, 7
    %v1411 = vsub.s32 2, %v1410
    %v1412 = vrot.slane %v1400, %v1411
    %v1413 = vlaneseq
    %v1414 = vshrl.u32 %v1413, 7
    %v1415 = vsub.s32 3, %v1414
    %v1416 = vrot.slane %v1400, %v1415
    %vm1417 = vcmp.eq.s32.totalorder %v1404, 1
    %vm1418 = vcmp.eq.s32.totalorder %v1408, 1
    %vm1419 = vcmp.eq.s32.totalorder %v1412, 1
    %vm1420 = vcmp.eq.s32.totalorder %v1416, 1
    %vm1421 = vmpackc.low %vm1418, %vm1417
    %vm1422 = vmpackc.low %vm1420, %vm1419
    %v1423 = vsel %vm1421, 65537, 0
    %v1424 = vsel %vm1422, 65537, 0
    %v1425 = vlaneseq
    %v1426 = vshrl.u32 %v1425, 7
    %v1427 = vsub.s32 0, %v1426
    %v1428 = vrot.slane %v1423, %v1427
    %v1429 = vlaneseq
    %v1430 = vshrl.u32 %v1429, 7
    %v1431 = vsub.s32 4, %v1430
    %v1432 = vrot.slane %v1423, %v1431
    %v1433 = vlaneseq
    %v1434 = vshrl.u32 %v1433, 7
    %v1435 = vsub.s32 0, %v1434
    %v1436 = vrot.slane %v1424, %v1435
    %v1437 = vlaneseq
    %v1438 = vshrl.u32 %v1437, 7
    %v1439 = vsub.s32 4, %v1438
    %v1440 = vrot.slane %v1424, %v1439
    %vm1441 = vcmp.ne.s16.totalorder %v1428, 0
    %vm1442 = vcmp.ne.s16.totalorder %v1432, 0
    %vm1443 = vcmp.ne.s16.totalorder %v1436, 0
    %vm1444 = vcmp.ne.s16.totalorder %v1440, 0
    %v1445 = vsel %vm1441, %v1388, 0
    %v1446 = vsel %vm1442, %v1389, 0
    %v1447 = vsel %vm1443, %v1390, 0
    %v1448 = vsel %vm1444, %v1397, 0
    %s1449 = scalar_lea.vmem %s1, 32
    %v1450 = vld [vmem:[%s1449] sm:$0xf]
    %v1452 = vsel %vm218, %v1450, 0
    %v1455 = vsel %vm222, %v1445, 0
    %v1458 = vsel %vm222, %v1446, 0
    %v1461 = vsel %vm222, %v1447, 0
    %v1464 = vsel %vm222, %v1448, 0
    %1466 = vmatprep.subr.bf16.mxu0 0
    %1467 = vmatpush1.bf16.msra.mxu0 0
    %1468 = vmatprep.subr.bf16.mxu0 0
    %1469 = vmatpush1.bf16.msra.mxu0 0
    %1470 = vmatprep.subr.bf16.mxu0 0
    %1471 = vmatpush1.bf16.msra.mxu0 0
    %1472 = vmatprep.subr.bf16.mxu0 0
    %1473 = vmatpush1.bf16.msra.mxu0 0
    %1474 = vmatprep.subr.bf16.mxu0 0
    %1475 = vmatpush1.bf16.msra.mxu0 0
    %1476 = vmatprep.subr.bf16.mxu0 0
    %1477 = vmatpush1.bf16.msra.mxu0 0
    %1478 = vmatprep.subr.bf16.mxu0 0
    %1479 = vmatpush1.bf16.msra.mxu0 0
    %1480 = vmatprep.subr.bf16.mxu0 %v1458
    %1481 = vmatpush1.bf16.msra.mxu0 %v1455
    %1482 = vmatprep.subr.bf16.mxu0 0
    %1483 = vmatpush2.bf16.msra.mxu0 0
    %1484 = vmatprep.subr.bf16.mxu0 0
    %1485 = vmatpush2.bf16.msra.mxu0 0
    %1486 = vmatprep.subr.bf16.mxu0 0
    %1487 = vmatpush2.bf16.msra.mxu0 0
    %1488 = vmatprep.subr.bf16.mxu0 0
    %1489 = vmatpush2.bf16.msra.mxu0 0
    %1490 = vmatprep.subr.bf16.mxu0 0
    %1491 = vmatpush2.bf16.msra.mxu0 0
    %1492 = vmatprep.subr.bf16.mxu0 0
    %1493 = vmatpush2.bf16.msra.mxu0 0
    %1494 = vmatprep.subr.bf16.mxu0 0
    %1495 = vmatpush2.bf16.msra.mxu0 0
    %1496 = vmatprep.subr.bf16.mxu0 0
    %1497 = vmatpush2.bf16.msra.mxu0 0
    %1498 = vmatprep.mubr.bf16.mxu0 0
    %1499 = vmatmul.mubr.bf16.gmra.mxu0 %v1452
    %v1500 = vpop.f32.mrf.mxu0
    %v1501 = vadd.f32 0.0, %v1500
    %v1502 = vpop.f32.mrf.mxu0
    %v1503 = vadd.f32 0.0, %v1502
    %v1504 = vpop.f32.mrf.mxu0
    %v1505 = vpop.f32.mrf.mxu0
    %1506 = vdwg.mxu0
    %1507 = vmatprep.subr.bf16.mxu0 0
    %1508 = vmatpush1.bf16.msra.mxu0 0
    %1509 = vmatprep.subr.bf16.mxu0 0
    %1510 = vmatpush1.bf16.msra.mxu0 0
    %1511 = vmatprep.subr.bf16.mxu0 0
    %1512 = vmatpush1.bf16.msra.mxu0 0
    %1513 = vmatprep.subr.bf16.mxu0 0
    %1514 = vmatpush1.bf16.msra.mxu0 0
    %1515 = vmatprep.subr.bf16.mxu0 0
    %1516 = vmatpush1.bf16.msra.mxu0 0
    %1517 = vmatprep.subr.bf16.mxu0 0
    %1518 = vmatpush1.bf16.msra.mxu0 0
    %1519 = vmatprep.subr.bf16.mxu0 0
    %1520 = vmatpush1.bf16.msra.mxu0 0
    %1521 = vmatprep.subr.bf16.mxu0 %v1464
    %1522 = vmatpush1.bf16.msra.mxu0 %v1461
    %1523 = vmatprep.subr.bf16.mxu0 0
    %1524 = vmatpush2.bf16.msra.mxu0 0
    %1525 = vmatprep.subr.bf16.mxu0 0
    %1526 = vmatpush2.bf16.msra.mxu0 0
    %1527 = vmatprep.subr.bf16.mxu0 0
    %1528 = vmatpush2.bf16.msra.mxu0 0
    %1529 = vmatprep.subr.bf16.mxu0 0
    %1530 = vmatpush2.bf16.msra.mxu0 0
    %1531 = vmatprep.subr.bf16.mxu0 0
    %1532 = vmatpush2.bf16.msra.mxu0 0
    %1533 = vmatprep.subr.bf16.mxu0 0
    %1534 = vmatpush2.bf16.msra.mxu0 0
    %1535 = vmatprep.subr.bf16.mxu0 0
    %1536 = vmatpush2.bf16.msra.mxu0 0
    %1537 = vmatprep.subr.bf16.mxu0 0
    %1538 = vmatpush2.bf16.msra.mxu0 0
    %1539 = vmatprep.mubr.bf16.mxu0 0
    %1540 = vmatmul.mubr.bf16.gmra.mxu0 %v1452
    %v1541 = vpop.f32.mrf.mxu0
    %v1542 = vadd.f32 0.0, %v1541
    %v1543 = vpop.f32.mrf.mxu0
    %v1544 = vadd.f32 0.0, %v1543
    %v1545 = vpop.f32.mrf.mxu0
    %v1546 = vpop.f32.mrf.mxu0
    %1547 = vdwg.mxu0
    %v1548 = vadd.f32 %v1375, %v1501
    %v1549 = vadd.f32 %v1376, %v1503
    %v1550 = vadd.f32 %v1377, %v1542
    %v1551 = vadd.f32 %v1378, %v1544
    %v1552 = vld [vmem:[%s2] sm:$0xff]
    %1554 = vset.pattern.permute.xlu0 0
    %1555 = vperm.xlu0 %1554, %v1552
    %v1556 = vpop.permute.xlu0 %1555
    %v1558 = vadd.f32 %v1548, %v1556
    %v1559 = vadd.f32 %v1549, %v1556
    %v1560 = vadd.f32 %v1550, %v1556
    %v1561 = vadd.f32 %v1551, %v1556
    %v1562 = vmax.f32 %v1558, 0.0
    %v1563 = vmax.f32 %v1559, 0.0
    %v1564 = vmax.f32 %v1560, 0.0
    %v1565 = vmax.f32 %v1561, 0.0
    %v1566 = vpack.c.bf16 %v1562, %v1562
    %v1567 = vpack.c.bf16 %v1563, %v1563
    %v1568 = vpack.c.bf16 %v1564, %v1564
    %v1569 = vpack.c.bf16 %v1565, %v1565
    %v1570 = vld [vmem:[%s4] sm:$0xf]
    %v1571 = vld [vmem:[%s4 + $0x4] sm:$0xf]
    %v1572 = vld [vmem:[%s4 + $0x8] sm:$0xf]
    %v1573 = vld [vmem:[%s4 + $0xc] sm:$0xf]
    %v1574 = vld [vmem:[%s4 + $0x10] sm:$0xf]
    %v1575 = vld [vmem:[%s4 + $0x14] sm:$0xf]
    %v1576 = vld [vmem:[%s4 + $0x18] sm:$0xf]
    %v1577 = vld [vmem:[%s4 + $0x1c] sm:$0xf]
    %v1578 = vld [vmem:[%s4 + $0x20] sm:$0xf]
    %v1579 = vld [vmem:[%s4 + $0x24] sm:$0xf]
    %v1580 = vld [vmem:[%s4 + $0x28] sm:$0xf]
    %v1581 = vld [vmem:[%s4 + $0x2c] sm:$0xf]
    %v1582 = vld [vmem:[%s4 + $0x30] sm:$0xf]
    %v1583 = vld [vmem:[%s4 + $0x34] sm:$0xf]
    %v1584 = vld [vmem:[%s4 + $0x38] sm:$0xf]
    %v1585 = vld [vmem:[%s4 + $0x3c] sm:$0xf]
    %v1586 = vld [vmem:[%s4 + $0x40] sm:$0xf]
    %v1587 = vld [vmem:[%s4 + $0x44] sm:$0xf]
    %v1588 = vld [vmem:[%s4 + $0x48] sm:$0xf]
    %v1589 = vld [vmem:[%s4 + $0x4c] sm:$0xf]
    %v1590 = vld [vmem:[%s4 + $0x50] sm:$0xf]
    %v1591 = vld [vmem:[%s4 + $0x54] sm:$0xf]
    %v1592 = vld [vmem:[%s4 + $0x58] sm:$0xf]
    %v1593 = vld [vmem:[%s4 + $0x5c] sm:$0xf]
    %v1594 = vld [vmem:[%s4 + $0x60] sm:$0xf]
    %v1595 = vld [vmem:[%s4 + $0x64] sm:$0xf]
    %v1596 = vld [vmem:[%s4 + $0x68] sm:$0xf]
    %v1597 = vld [vmem:[%s4 + $0x6c] sm:$0xf]
    %v1598 = vld [vmem:[%s4 + $0x70] sm:$0xf]
    %v1599 = vld [vmem:[%s4 + $0x74] sm:$0xf]
    %v1600 = vld [vmem:[%s4 + $0x78] sm:$0xf]
    %v1601 = vld [vmem:[%s4 + $0x7c] sm:$0xf]
    %v1634 = vunpack.c.l.b16 %v1570
    %v1635 = vunpack.c.l.b16 %v1571
    %v1636 = vunpack.c.l.b16 %v1572
    %v1637 = vunpack.c.l.b16 %v1573
    %v1638 = vunpack.c.l.b16 %v1574
    %v1639 = vunpack.c.l.b16 %v1575
    %v1640 = vunpack.c.l.b16 %v1576
    %v1641 = vunpack.c.l.b16 %v1577
    %v1642 = vunpack.c.l.b16 %v1578
    %v1643 = vunpack.c.l.b16 %v1579
    %v1644 = vunpack.c.l.b16 %v1580
    %v1645 = vunpack.c.l.b16 %v1581
    %v1646 = vunpack.c.l.b16 %v1582
    %v1647 = vunpack.c.l.b16 %v1583
    %v1648 = vunpack.c.l.b16 %v1584
    %v1649 = vunpack.c.l.b16 %v1585
    %v1650 = vunpack.c.l.b16 %v1586
    %v1651 = vunpack.c.l.b16 %v1587
    %v1652 = vunpack.c.l.b16 %v1588
    %v1653 = vunpack.c.l.b16 %v1589
    %v1654 = vunpack.c.l.b16 %v1590
    %v1655 = vunpack.c.l.b16 %v1591
    %v1656 = vunpack.c.l.b16 %v1592
    %v1657 = vunpack.c.l.b16 %v1593
    %v1658 = vunpack.c.l.b16 %v1594
    %v1659 = vunpack.c.l.b16 %v1595
    %v1660 = vunpack.c.l.b16 %v1596
    %v1661 = vunpack.c.l.b16 %v1597
    %v1662 = vunpack.c.l.b16 %v1598
    %v1663 = vunpack.c.l.b16 %v1599
    %v1664 = vunpack.c.l.b16 %v1600
    %v1665 = vunpack.c.l.b16 %v1601
    %v1666 = vpack.c.b16 %v1635, %v1634
    %v1667 = vpack.c.b16 %v1637, %v1636
    %v1668 = vpack.c.b16 %v1639, %v1638
    %v1669 = vpack.c.b16 %v1641, %v1640
    %v1670 = vpack.c.b16 %v1643, %v1642
    %v1671 = vpack.c.b16 %v1645, %v1644
    %v1672 = vpack.c.b16 %v1647, %v1646
    %v1673 = vpack.c.b16 %v1649, %v1648
    %v1674 = vpack.c.b16 %v1651, %v1650
    %v1675 = vpack.c.b16 %v1653, %v1652
    %v1676 = vpack.c.b16 %v1655, %v1654
    %v1677 = vpack.c.b16 %v1657, %v1656
    %v1678 = vpack.c.b16 %v1659, %v1658
    %v1679 = vpack.c.b16 %v1661, %v1660
    %v1680 = vpack.c.b16 %v1663, %v1662
    %v1681 = vpack.c.b16 %v1665, %v1664
    %1698 = vmatprep.subr.bf16.mxu0 0
    %1699 = vmatpush1.bf16.msra.mxu0 %v1673
    %1700 = vmatprep.subr.bf16.mxu0 0
    %1701 = vmatpush1.bf16.msra.mxu0 %v1672
    %1702 = vmatprep.subr.bf16.mxu0 0
    %1703 = vmatpush1.bf16.msra.mxu0 %v1671
    %1704 = vmatprep.subr.bf16.mxu0 0
    %1705 = vmatpush1.bf16.msra.mxu0 %v1670
    %1706 = vmatprep.subr.bf16.mxu0 0
    %1707 = vmatpush1.bf16.msra.mxu0 %v1669
    %1708 = vmatprep.subr.bf16.mxu0 0
    %1709 = vmatpush1.bf16.msra.mxu0 %v1668
    %1710 = vmatprep.subr.bf16.mxu0 0
    %1711 = vmatpush1.bf16.msra.mxu0 %v1667
    %1712 = vmatprep.subr.bf16.mxu0 0
    %1713 = vmatpush1.bf16.msra.mxu0 %v1666
    %1714 = vmatprep.subr.bf16.mxu0 0
    %1715 = vmatpush2.bf16.msra.mxu0 %v1681
    %1716 = vmatprep.subr.bf16.mxu0 0
    %1717 = vmatpush2.bf16.msra.mxu0 %v1680
    %1718 = vmatprep.subr.bf16.mxu0 0
    %1719 = vmatpush2.bf16.msra.mxu0 %v1679
    %1720 = vmatprep.subr.bf16.mxu0 0
    %1721 = vmatpush2.bf16.msra.mxu0 %v1678
    %1722 = vmatprep.subr.bf16.mxu0 0
    %1723 = vmatpush2.bf16.msra.mxu0 %v1677
    %1724 = vmatprep.subr.bf16.mxu0 0
    %1725 = vmatpush2.bf16.msra.mxu0 %v1676
    %1726 = vmatprep.subr.bf16.mxu0 0
    %1727 = vmatpush2.bf16.msra.mxu0 %v1675
    %1728 = vmatprep.subr.bf16.mxu0 0
    %1729 = vmatpush2.bf16.msra.mxu0 %v1674
    %1730 = vmatprep.mubr.bf16.mxu0 %v1567
    %1731 = vmatmul.mubr.bf16.gmra.mxu0 %v1566
    %v1732 = vpop.f32.mrf.mxu0
    %v1733 = vadd.f32 0.0, %v1732
    %v1734 = vpop.f32.mrf.mxu0
    %v1735 = vpop.f32.mrf.mxu0
    %v1736 = vpop.f32.mrf.mxu0
    %1737 = vdwg.mxu0
    %1738 = vmatprep.subr.bf16.mxu0 0
    %1739 = vmatpush1.bf16.msra.mxu0 %v1673
    %1740 = vmatprep.subr.bf16.mxu0 0
    %1741 = vmatpush1.bf16.msra.mxu0 %v1672
    %1742 = vmatprep.subr.bf16.mxu0 0
    %1743 = vmatpush1.bf16.msra.mxu0 %v1671
    %1744 = vmatprep.subr.bf16.mxu0 0
    %1745 = vmatpush1.bf16.msra.mxu0 %v1670
    %1746 = vmatprep.subr.bf16.mxu0 0
    %1747 = vmatpush1.bf16.msra.mxu0 %v1669
    %1748 = vmatprep.subr.bf16.mxu0 0
    %1749 = vmatpush1.bf16.msra.mxu0 %v1668
    %1750 = vmatprep.subr.bf16.mxu0 0
    %1751 = vmatpush1.bf16.msra.mxu0 %v1667
    %1752 = vmatprep.subr.bf16.mxu0 0
    %1753 = vmatpush1.bf16.msra.mxu0 %v1666
    %1754 = vmatprep.subr.bf16.mxu0 0
    %1755 = vmatpush2.bf16.msra.mxu0 %v1681
    %1756 = vmatprep.subr.bf16.mxu0 0
    %1757 = vmatpush2.bf16.msra.mxu0 %v1680
    %1758 = vmatprep.subr.bf16.mxu0 0
    %1759 = vmatpush2.bf16.msra.mxu0 %v1679
    %1760 = vmatprep.subr.bf16.mxu0 0
    %1761 = vmatpush2.bf16.msra.mxu0 %v1678
    %1762 = vmatprep.subr.bf16.mxu0 0
    %1763 = vmatpush2.bf16.msra.mxu0 %v1677
    %1764 = vmatprep.subr.bf16.mxu0 0
    %1765 = vmatpush2.bf16.msra.mxu0 %v1676
    %1766 = vmatprep.subr.bf16.mxu0 0
    %1767 = vmatpush2.bf16.msra.mxu0 %v1675
    %1768 = vmatprep.subr.bf16.mxu0 0
    %1769 = vmatpush2.bf16.msra.mxu0 %v1674
    %1770 = vmatprep.mubr.bf16.mxu0 %v1569
    %1771 = vmatmul.mubr.bf16.gmra.mxu0 %v1568
    %v1772 = vpop.f32.mrf.mxu0
    %v1773 = vadd.f32 0.0, %v1772
    %v1774 = vpop.f32.mrf.mxu0
    %v1775 = vpop.f32.mrf.mxu0
    %v1776 = vpop.f32.mrf.mxu0
    %1777 = vdwg.mxu0
    %1779 = vrot.lane.b32.xlu0 %v1773, 64
    %v1780 = vpop.permute.xlu0 %1779
    %vm1782 = vcmask 523264
    %v1783 = vsel %vm1782, %v1733, %v1780
    %v1784 = vld [vmem:[%s7] sm:$0x1]
    %v1785 = vld [vmem:[%s7 + $0x1] sm:$0x1]
    %vm1786 = vcmp.ge.s32.totalorder %v1784, 1
    %vm1787 = vcmp.le.s32.totalorder %v1784, 6
    %vm1788 = vcmp.ge.s32.totalorder %v1785, 1
    %vm1789 = vcmp.le.s32.totalorder %v1785, 6
    %v1790 = vpack.c.bf16 %v1783, %v1783
    %1792 = vrot.lane.b32.xlu0 %v1790, 9
    %v1793 = vpop.permute.xlu0 %1792
    %vm1796 = vmand %vm1786, %vm1788
    %v1797 = vsel %vm1796, 1, 0
    %v1798 = vlaneseq
    %v1799 = vshrl.u32 %v1798, 7
    %v1800 = vsub.s32 0, %v1799
    %v1801 = vrot.slane %v1797, %v1800
    %vm1802 = vcmp.eq.s32.totalorder %v1801, 1
    %vm1803 = vmpackc.low %vm1802, %vm1802
    %v1804 = vsel %vm1803, %v1793, 0
    %v1805 = vld [vmem:[%s5] sm:$0xf]
    %v1806 = vld [vmem:[%s5 + $0x4] sm:$0xf]
    %1807 = vrot.lane.b32.xlu0 %v1790, 8
    %v1808 = vpop.permute.xlu0 %1807
    %vm1809 = vcmask 64512
    %v1812 = vsel %vm1786, 1, 0
    %v1813 = vlaneseq
    %v1814 = vshrl.u32 %v1813, 7
    %v1815 = vsub.s32 0, %v1814
    %v1816 = vrot.slane %v1812, %v1815
    %vm1817 = vcmp.eq.s32.totalorder %v1816, 1
    %vm1818 = vmpackc.low %vm1817, %vm1817
    %v1819 = vsel %vm1818, %v1808, 0
    %s1820 = scalar_lea.vmem %s5, 8
    %v1821 = vld [vmem:[%s1820] sm:$0xf]
    %v1822 = vld [vmem:[%s1820 + $0x4] sm:$0xf]
    %v1825 = vunpack.c.l.b16 %v1821
    %v1826 = vunpack.c.l.b16 %v1822
    %v1827 = vpack.c.b16 %v1826, %v1825
    %v1829 = vsel %vm1809, %v1827, 0
    %vm1831 = vcmask 1043456
    %v1833 = vsel %vm1831, %v1819, 0
    %1835 = vmatprep.subr.bf16.mxu0 0
    %1836 = vmatpush1.bf16.msra.mxu0 0
    %1837 = vmatprep.subr.bf16.mxu0 0
    %1838 = vmatpush1.bf16.msra.mxu0 0
    %1839 = vmatprep.subr.bf16.mxu0 0
    %1840 = vmatpush1.bf16.msra.mxu0 0
    %1841 = vmatprep.subr.bf16.mxu0 0
    %1842 = vmatpush1.bf16.msra.mxu0 0
    %1843 = vmatprep.subr.bf16.mxu0 0
    %1844 = vmatpush1.bf16.msra.mxu0 0
    %1845 = vmatprep.subr.bf16.mxu0 0
    %1846 = vmatpush1.bf16.msra.mxu0 0
    %1847 = vmatprep.subr.bf16.mxu0 0
    %1848 = vmatpush1.bf16.msra.mxu0 0
    %1849 = vmatprep.subr.bf16.mxu0 0
    %1850 = vmatpush1.bf16.msra.mxu0 %v1833
    %1851 = vmatprep.subr.bf16.mxu0 0
    %1852 = vmatpush2.bf16.msra.mxu0 0
    %1853 = vmatprep.subr.bf16.mxu0 0
    %1854 = vmatpush2.bf16.msra.mxu0 0
    %1855 = vmatprep.subr.bf16.mxu0 0
    %1856 = vmatpush2.bf16.msra.mxu0 0
    %1857 = vmatprep.subr.bf16.mxu0 0
    %1858 = vmatpush2.bf16.msra.mxu0 0
    %1859 = vmatprep.subr.bf16.mxu0 0
    %1860 = vmatpush2.bf16.msra.mxu0 0
    %1861 = vmatprep.subr.bf16.mxu0 0
    %1862 = vmatpush2.bf16.msra.mxu0 0
    %1863 = vmatprep.subr.bf16.mxu0 0
    %1864 = vmatpush2.bf16.msra.mxu0 0
    %1865 = vmatprep.subr.bf16.mxu0 0
    %1866 = vmatpush2.bf16.msra.mxu0 0
    %1867 = vmatprep.mubr.bf16.mxu0 0
    %1868 = vmatmul.mubr.bf16.gmra.mxu0 %v1829
    %v1869 = vpop.f32.mrf.mxu0
    %v1870 = vadd.f32 0.0, %v1869
    %v1871 = vpop.f32.mrf.mxu0
    %v1872 = vpop.f32.mrf.mxu0
    %v1873 = vadd.f32 0.0, %v1872
    %v1874 = vpop.f32.mrf.mxu0
    %1875 = vdwg.mxu0
    %v1878 = vunpack.c.l.b16 %v1805
    %v1879 = vunpack.c.l.b16 %v1806
    %v1880 = vpack.c.b16 %v1879, %v1878
    %v1882 = vsel %vm1809, %v1880, 0
    %v1885 = vsel %vm1831, %v1804, 0
    %1887 = vmatprep.subr.bf16.mxu0 0
    %1888 = vmatpush1.bf16.msra.mxu0 0
    %1889 = vmatprep.subr.bf16.mxu0 0
    %1890 = vmatpush1.bf16.msra.mxu0 0
    %1891 = vmatprep.subr.bf16.mxu0 0
    %1892 = vmatpush1.bf16.msra.mxu0 0
    %1893 = vmatprep.subr.bf16.mxu0 0
    %1894 = vmatpush1.bf16.msra.mxu0 0
    %1895 = vmatprep.subr.bf16.mxu0 0
    %1896 = vmatpush1.bf16.msra.mxu0 0
    %1897 = vmatprep.subr.bf16.mxu0 0
    %1898 = vmatpush1.bf16.msra.mxu0 0
    %1899 = vmatprep.subr.bf16.mxu0 0
    %1900 = vmatpush1.bf16.msra.mxu0 0
    %1901 = vmatprep.subr.bf16.mxu0 0
    %1902 = vmatpush1.bf16.msra.mxu0 %v1885
    %1903 = vmatprep.subr.bf16.mxu0 0
    %1904 = vmatpush2.bf16.msra.mxu0 0
    %1905 = vmatprep.subr.bf16.mxu0 0
    %1906 = vmatpush2.bf16.msra.mxu0 0
    %1907 = vmatprep.subr.bf16.mxu0 0
    %1908 = vmatpush2.bf16.msra.mxu0 0
    %1909 = vmatprep.subr.bf16.mxu0 0
    %1910 = vmatpush2.bf16.msra.mxu0 0
    %1911 = vmatprep.subr.bf16.mxu0 0
    %1912 = vmatpush2.bf16.msra.mxu0 0
    %1913 = vmatprep.subr.bf16.mxu0 0
    %1914 = vmatpush2.bf16.msra.mxu0 0
    %1915 = vmatprep.subr.bf16.mxu0 0
    %1916 = vmatpush2.bf16.msra.mxu0 0
    %1917 = vmatprep.subr.bf16.mxu0 0
    %1918 = vmatpush2.bf16.msra.mxu0 0
    %1919 = vmatprep.mubr.bf16.mxu0 0
    %1920 = vmatmul.mubr.bf16.gmra.mxu0 %v1882
    %v1921 = vpop.f32.mrf.mxu0
    %v1922 = vadd.f32 %v1870, %v1921
    %v1923 = vpop.f32.mrf.mxu0
    %v1924 = vpop.f32.mrf.mxu0
    %v1925 = vadd.f32 %v1873, %v1924
    %v1926 = vpop.f32.mrf.mxu0
    %1927 = vdwg.mxu0
    %1928 = vrot.lane.b32.xlu0 %v1790, 7
    %v1929 = vpop.permute.xlu0 %1928
    %vm1932 = vmand %vm1786, %vm1789
    %v1933 = vsel %vm1932, 1, 0
    %v1934 = vlaneseq
    %v1935 = vshrl.u32 %v1934, 7
    %v1936 = vsub.s32 0, %v1935
    %v1937 = vrot.slane %v1933, %v1936
    %vm1938 = vcmp.eq.s32.totalorder %v1937, 1
    %vm1939 = vmpackc.low %vm1938, %vm1938
    %v1940 = vsel %vm1939, %v1929, 0
    %s1941 = scalar_lea.vmem %s5, 16
    %v1942 = vld [vmem:[%s1941] sm:$0xf]
    %v1943 = vld [vmem:[%s1941 + $0x4] sm:$0xf]
    %v1946 = vunpack.c.l.b16 %v1942
    %v1947 = vunpack.c.l.b16 %v1943
    %v1948 = vpack.c.b16 %v1947, %v1946
    %v1950 = vsel %vm1809, %v1948, 0
    %v1953 = vsel %vm1831, %v1940, 0
    %1955 = vmatprep.subr.bf16.mxu0 0
    %1956 = vmatpush1.bf16.msra.mxu0 0
    %1957 = vmatprep.subr.bf16.mxu0 0
    %1958 = vmatpush1.bf16.msra.mxu0 0
    %1959 = vmatprep.subr.bf16.mxu0 0
    %1960 = vmatpush1.bf16.msra.mxu0 0
    %1961 = vmatprep.subr.bf16.mxu0 0
    %1962 = vmatpush1.bf16.msra.mxu0 0
    %1963 = vmatprep.subr.bf16.mxu0 0
    %1964 = vmatpush1.bf16.msra.mxu0 0
    %1965 = vmatprep.subr.bf16.mxu0 0
    %1966 = vmatpush1.bf16.msra.mxu0 0
    %1967 = vmatprep.subr.bf16.mxu0 0
    %1968 = vmatpush1.bf16.msra.mxu0 0
    %1969 = vmatprep.subr.bf16.mxu0 0
    %1970 = vmatpush1.bf16.msra.mxu0 %v1953
    %1971 = vmatprep.subr.bf16.mxu0 0
    %1972 = vmatpush2.bf16.msra.mxu0 0
    %1973 = vmatprep.subr.bf16.mxu0 0
    %1974 = vmatpush2.bf16.msra.mxu0 0
    %1975 = vmatprep.subr.bf16.mxu0 0
    %1976 = vmatpush2.bf16.msra.mxu0 0
    %1977 = vmatprep.subr.bf16.mxu0 0
    %1978 = vmatpush2.bf16.msra.mxu0 0
    %1979 = vmatprep.subr.bf16.mxu0 0
    %1980 = vmatpush2.bf16.msra.mxu0 0
    %1981 = vmatprep.subr.bf16.mxu0 0
    %1982 = vmatpush2.bf16.msra.mxu0 0
    %1983 = vmatprep.subr.bf16.mxu0 0
    %1984 = vmatpush2.bf16.msra.mxu0 0
    %1985 = vmatprep.subr.bf16.mxu0 0
    %1986 = vmatpush2.bf16.msra.mxu0 0
    %1987 = vmatprep.mubr.bf16.mxu0 0
    %1988 = vmatmul.mubr.bf16.gmra.mxu0 %v1950
    %v1989 = vpop.f32.mrf.mxu0
    %v1990 = vadd.f32 0.0, %v1989
    %v1991 = vpop.f32.mrf.mxu0
    %v1992 = vpop.f32.mrf.mxu0
    %v1993 = vadd.f32 0.0, %v1992
    %v1994 = vpop.f32.mrf.mxu0
    %1995 = vdwg.mxu0
    %v1996 = vadd.f32 %v1922, %v1990
    %v1997 = vadd.f32 %v1925, %v1993
    %1998 = vrot.lane.b32.xlu0 %v1790, 1
    %v1999 = vpop.permute.xlu0 %1998
    %v2002 = vsel %vm1788, 1, 0
    %v2003 = vlaneseq
    %v2004 = vshrl.u32 %v2003, 7
    %v2005 = vsub.s32 0, %v2004
    %v2006 = vrot.slane %v2002, %v2005
    %vm2007 = vcmp.eq.s32.totalorder %v2006, 1
    %vm2008 = vmpackc.low %vm2007, %vm2007
    %v2009 = vsel %vm2008, %v1999, 0
    %s2010 = scalar_lea.vmem %s5, 24
    %v2011 = vld [vmem:[%s2010] sm:$0xf]
    %v2012 = vld [vmem:[%s2010 + $0x4] sm:$0xf]
    %v2015 = vunpack.c.l.b16 %v2011
    %v2016 = vunpack.c.l.b16 %v2012
    %v2017 = vpack.c.b16 %v2016, %v2015
    %v2019 = vsel %vm1809, %v2017, 0
    %v2022 = vsel %vm1831, %v2009, 0
    %2024 = vmatprep.subr.bf16.mxu0 0
    %2025 = vmatpush1.bf16.msra.mxu0 0
    %2026 = vmatprep.subr.bf16.mxu0 0
    %2027 = vmatpush1.bf16.msra.mxu0 0
    %2028 = vmatprep.subr.bf16.mxu0 0
    %2029 = vmatpush1.bf16.msra.mxu0 0
    %2030 = vmatprep.subr.bf16.mxu0 0
    %2031 = vmatpush1.bf16.msra.mxu0 0
    %2032 = vmatprep.subr.bf16.mxu0 0
    %2033 = vmatpush1.bf16.msra.mxu0 0
    %2034 = vmatprep.subr.bf16.mxu0 0
    %2035 = vmatpush1.bf16.msra.mxu0 0
    %2036 = vmatprep.subr.bf16.mxu0 0
    %2037 = vmatpush1.bf16.msra.mxu0 0
    %2038 = vmatprep.subr.bf16.mxu0 0
    %2039 = vmatpush1.bf16.msra.mxu0 %v2022
    %2040 = vmatprep.subr.bf16.mxu0 0
    %2041 = vmatpush2.bf16.msra.mxu0 0
    %2042 = vmatprep.subr.bf16.mxu0 0
    %2043 = vmatpush2.bf16.msra.mxu0 0
    %2044 = vmatprep.subr.bf16.mxu0 0
    %2045 = vmatpush2.bf16.msra.mxu0 0
    %2046 = vmatprep.subr.bf16.mxu0 0
    %2047 = vmatpush2.bf16.msra.mxu0 0
    %2048 = vmatprep.subr.bf16.mxu0 0
    %2049 = vmatpush2.bf16.msra.mxu0 0
    %2050 = vmatprep.subr.bf16.mxu0 0
    %2051 = vmatpush2.bf16.msra.mxu0 0
    %2052 = vmatprep.subr.bf16.mxu0 0
    %2053 = vmatpush2.bf16.msra.mxu0 0
    %2054 = vmatprep.subr.bf16.mxu0 0
    %2055 = vmatpush2.bf16.msra.mxu0 0
    %2056 = vmatprep.mubr.bf16.mxu0 0
    %2057 = vmatmul.mubr.bf16.gmra.mxu0 %v2019
    %v2058 = vpop.f32.mrf.mxu0
    %v2059 = vadd.f32 0.0, %v2058
    %v2060 = vpop.f32.mrf.mxu0
    %v2061 = vpop.f32.mrf.mxu0
    %v2062 = vadd.f32 0.0, %v2061
    %v2063 = vpop.f32.mrf.mxu0
    %2064 = vdwg.mxu0
    %v2065 = vadd.f32 %v1996, %v2059
    %v2066 = vadd.f32 %v1997, %v2062
    %s2067 = scalar_lea.vmem %s5, 32
    %v2068 = vld [vmem:[%s2067] sm:$0xf]
    %v2069 = vld [vmem:[%s2067 + $0x4] sm:$0xf]
    %v2072 = vunpack.c.l.b16 %v2068
    %v2073 = vunpack.c.l.b16 %v2069
    %v2074 = vpack.c.b16 %v2073, %v2072
    %v2076 = vsel %vm1809, %v2074, 0
    %v2079 = vsel %vm1831, %v1790, 0
    %2081 = vmatprep.subr.bf16.mxu0 0
    %2082 = vmatpush1.bf16.msra.mxu0 0
    %2083 = vmatprep.subr.bf16.mxu0 0
    %2084 = vmatpush1.bf16.msra.mxu0 0
    %2085 = vmatprep.subr.bf16.mxu0 0
    %2086 = vmatpush1.bf16.msra.mxu0 0
    %2087 = vmatprep.subr.bf16.mxu0 0
    %2088 = vmatpush1.bf16.msra.mxu0 0
    %2089 = vmatprep.subr.bf16.mxu0 0
    %2090 = vmatpush1.bf16.msra.mxu0 0
    %2091 = vmatprep.subr.bf16.mxu0 0
    %2092 = vmatpush1.bf16.msra.mxu0 0
    %2093 = vmatprep.subr.bf16.mxu0 0
    %2094 = vmatpush1.bf16.msra.mxu0 0
    %2095 = vmatprep.subr.bf16.mxu0 0
    %2096 = vmatpush1.bf16.msra.mxu0 %v2079
    %2097 = vmatprep.subr.bf16.mxu0 0
    %2098 = vmatpush2.bf16.msra.mxu0 0
    %2099 = vmatprep.subr.bf16.mxu0 0
    %2100 = vmatpush2.bf16.msra.mxu0 0
    %2101 = vmatprep.subr.bf16.mxu0 0
    %2102 = vmatpush2.bf16.msra.mxu0 0
    %2103 = vmatprep.subr.bf16.mxu0 0
    %2104 = vmatpush2.bf16.msra.mxu0 0
    %2105 = vmatprep.subr.bf16.mxu0 0
    %2106 = vmatpush2.bf16.msra.mxu0 0
    %2107 = vmatprep.subr.bf16.mxu0 0
    %2108 = vmatpush2.bf16.msra.mxu0 0
    %2109 = vmatprep.subr.bf16.mxu0 0
    %2110 = vmatpush2.bf16.msra.mxu0 0
    %2111 = vmatprep.subr.bf16.mxu0 0
    %2112 = vmatpush2.bf16.msra.mxu0 0
    %2113 = vmatprep.mubr.bf16.mxu0 0
    %2114 = vmatmul.mubr.bf16.gmra.mxu0 %v2076
    %v2115 = vpop.f32.mrf.mxu0
    %v2116 = vadd.f32 0.0, %v2115
    %v2117 = vpop.f32.mrf.mxu0
    %v2118 = vpop.f32.mrf.mxu0
    %v2119 = vadd.f32 0.0, %v2118
    %v2120 = vpop.f32.mrf.mxu0
    %2121 = vdwg.mxu0
    %v2122 = vadd.f32 %v2065, %v2116
    %v2123 = vadd.f32 %v2066, %v2119
    %2124 = vrot.lane.b32.xlu0 %v1790, 127
    %v2125 = vpop.permute.xlu0 %2124
    %v2128 = vsel %vm1789, 1, 0
    %v2129 = vlaneseq
    %v2130 = vshrl.u32 %v2129, 7
    %v2131 = vsub.s32 0, %v2130
    %v2132 = vrot.slane %v2128, %v2131
    %vm2133 = vcmp.eq.s32.totalorder %v2132, 1
    %vm2134 = vmpackc.low %vm2133, %vm2133
    %v2135 = vsel %vm2134, %v2125, 0
    %s2136 = scalar_lea.vmem %s5, 40
    %v2137 = vld [vmem:[%s2136] sm:$0xf]
    %v2138 = vld [vmem:[%s2136 + $0x4] sm:$0xf]
    %v2141 = vunpack.c.l.b16 %v2137
    %v2142 = vunpack.c.l.b16 %v2138
    %v2143 = vpack.c.b16 %v2142, %v2141
    %v2145 = vsel %vm1809, %v2143, 0
    %v2148 = vsel %vm1831, %v2135, 0
    %2150 = vmatprep.subr.bf16.mxu0 0
    %2151 = vmatpush1.bf16.msra.mxu0 0
    %2152 = vmatprep.subr.bf16.mxu0 0
    %2153 = vmatpush1.bf16.msra.mxu0 0
    %2154 = vmatprep.subr.bf16.mxu0 0
    %2155 = vmatpush1.bf16.msra.mxu0 0
    %2156 = vmatprep.subr.bf16.mxu0 0
    %2157 = vmatpush1.bf16.msra.mxu0 0
    %2158 = vmatprep.subr.bf16.mxu0 0
    %2159 = vmatpush1.bf16.msra.mxu0 0
    %2160 = vmatprep.subr.bf16.mxu0 0
    %2161 = vmatpush1.bf16.msra.mxu0 0
    %2162 = vmatprep.subr.bf16.mxu0 0
    %2163 = vmatpush1.bf16.msra.mxu0 0
    %2164 = vmatprep.subr.bf16.mxu0 0
    %2165 = vmatpush1.bf16.msra.mxu0 %v2148
    %2166 = vmatprep.subr.bf16.mxu0 0
    %2167 = vmatpush2.bf16.msra.mxu0 0
    %2168 = vmatprep.subr.bf16.mxu0 0
    %2169 = vmatpush2.bf16.msra.mxu0 0
    %2170 = vmatprep.subr.bf16.mxu0 0
    %2171 = vmatpush2.bf16.msra.mxu0 0
    %2172 = vmatprep.subr.bf16.mxu0 0
    %2173 = vmatpush2.bf16.msra.mxu0 0
    %2174 = vmatprep.subr.bf16.mxu0 0
    %2175 = vmatpush2.bf16.msra.mxu0 0
    %2176 = vmatprep.subr.bf16.mxu0 0
    %2177 = vmatpush2.bf16.msra.mxu0 0
    %2178 = vmatprep.subr.bf16.mxu0 0
    %2179 = vmatpush2.bf16.msra.mxu0 0
    %2180 = vmatprep.subr.bf16.mxu0 0
    %2181 = vmatpush2.bf16.msra.mxu0 0
    %2182 = vmatprep.mubr.bf16.mxu0 0
    %2183 = vmatmul.mubr.bf16.gmra.mxu0 %v2145
    %v2184 = vpop.f32.mrf.mxu0
    %v2185 = vadd.f32 0.0, %v2184
    %v2186 = vpop.f32.mrf.mxu0
    %v2187 = vpop.f32.mrf.mxu0
    %v2188 = vadd.f32 0.0, %v2187
    %v2189 = vpop.f32.mrf.mxu0
    %2190 = vdwg.mxu0
    %v2191 = vadd.f32 %v2122, %v2185
    %v2192 = vadd.f32 %v2123, %v2188
    %2193 = vrot.lane.b32.xlu0 %v1790, 121
    %v2194 = vpop.permute.xlu0 %2193
    %vm2197 = vmand %vm1787, %vm1788
    %v2198 = vsel %vm2197, 1, 0
    %v2199 = vlaneseq
    %v2200 = vshrl.u32 %v2199, 7
    %v2201 = vsub.s32 0, %v2200
    %v2202 = vrot.slane %v2198, %v2201
    %vm2203 = vcmp.eq.s32.totalorder %v2202, 1
    %vm2204 = vmpackc.low %vm2203, %vm2203
    %v2205 = vsel %vm2204, %v2194, 0
    %s2206 = scalar_lea.vmem %s5, 48
    %v2207 = vld [vmem:[%s2206] sm:$0xf]
    %v2208 = vld [vmem:[%s2206 + $0x4] sm:$0xf]
    %v2211 = vunpack.c.l.b16 %v2207
    %v2212 = vunpack.c.l.b16 %v2208
    %v2213 = vpack.c.b16 %v2212, %v2211
    %v2215 = vsel %vm1809, %v2213, 0
    %v2218 = vsel %vm1831, %v2205, 0
    %2220 = vmatprep.subr.bf16.mxu0 0
    %2221 = vmatpush1.bf16.msra.mxu0 0
    %2222 = vmatprep.subr.bf16.mxu0 0
    %2223 = vmatpush1.bf16.msra.mxu0 0
    %2224 = vmatprep.subr.bf16.mxu0 0
    %2225 = vmatpush1.bf16.msra.mxu0 0
    %2226 = vmatprep.subr.bf16.mxu0 0
    %2227 = vmatpush1.bf16.msra.mxu0 0
    %2228 = vmatprep.subr.bf16.mxu0 0
    %2229 = vmatpush1.bf16.msra.mxu0 0
    %2230 = vmatprep.subr.bf16.mxu0 0
    %2231 = vmatpush1.bf16.msra.mxu0 0
    %2232 = vmatprep.subr.bf16.mxu0 0
    %2233 = vmatpush1.bf16.msra.mxu0 0
    %2234 = vmatprep.subr.bf16.mxu0 0
    %2235 = vmatpush1.bf16.msra.mxu0 %v2218
    %2236 = vmatprep.subr.bf16.mxu0 0
    %2237 = vmatpush2.bf16.msra.mxu0 0
    %2238 = vmatprep.subr.bf16.mxu0 0
    %2239 = vmatpush2.bf16.msra.mxu0 0
    %2240 = vmatprep.subr.bf16.mxu0 0
    %2241 = vmatpush2.bf16.msra.mxu0 0
    %2242 = vmatprep.subr.bf16.mxu0 0
    %2243 = vmatpush2.bf16.msra.mxu0 0
    %2244 = vmatprep.subr.bf16.mxu0 0
    %2245 = vmatpush2.bf16.msra.mxu0 0
    %2246 = vmatprep.subr.bf16.mxu0 0
    %2247 = vmatpush2.bf16.msra.mxu0 0
    %2248 = vmatprep.subr.bf16.mxu0 0
    %2249 = vmatpush2.bf16.msra.mxu0 0
    %2250 = vmatprep.subr.bf16.mxu0 0
    %2251 = vmatpush2.bf16.msra.mxu0 0
    %2252 = vmatprep.mubr.bf16.mxu0 0
    %2253 = vmatmul.mubr.bf16.gmra.mxu0 %v2215
    %v2254 = vpop.f32.mrf.mxu0
    %v2255 = vadd.f32 0.0, %v2254
    %v2256 = vpop.f32.mrf.mxu0
    %v2257 = vpop.f32.mrf.mxu0
    %v2258 = vadd.f32 0.0, %v2257
    %v2259 = vpop.f32.mrf.mxu0
    %2260 = vdwg.mxu0
    %v2261 = vadd.f32 %v2191, %v2255
    %v2262 = vadd.f32 %v2192, %v2258
    %2263 = vrot.lane.b32.xlu0 %v1790, 120
    %v2264 = vpop.permute.xlu0 %2263
    %v2267 = vsel %vm1787, 1, 0
    %v2268 = vlaneseq
    %v2269 = vshrl.u32 %v2268, 7
    %v2270 = vsub.s32 0, %v2269
    %v2271 = vrot.slane %v2267, %v2270
    %vm2272 = vcmp.eq.s32.totalorder %v2271, 1
    %vm2273 = vmpackc.low %vm2272, %vm2272
    %v2274 = vsel %vm2273, %v2264, 0
    %s2275 = scalar_lea.vmem %s5, 56
    %v2276 = vld [vmem:[%s2275] sm:$0xf]
    %v2277 = vld [vmem:[%s2275 + $0x4] sm:$0xf]
    %v2280 = vunpack.c.l.b16 %v2276
    %v2281 = vunpack.c.l.b16 %v2277
    %v2282 = vpack.c.b16 %v2281, %v2280
    %v2284 = vsel %vm1809, %v2282, 0
    %v2287 = vsel %vm1831, %v2274, 0
    %2289 = vmatprep.subr.bf16.mxu0 0
    %2290 = vmatpush1.bf16.msra.mxu0 0
    %2291 = vmatprep.subr.bf16.mxu0 0
    %2292 = vmatpush1.bf16.msra.mxu0 0
    %2293 = vmatprep.subr.bf16.mxu0 0
    %2294 = vmatpush1.bf16.msra.mxu0 0
    %2295 = vmatprep.subr.bf16.mxu0 0
    %2296 = vmatpush1.bf16.msra.mxu0 0
    %2297 = vmatprep.subr.bf16.mxu0 0
    %2298 = vmatpush1.bf16.msra.mxu0 0
    %2299 = vmatprep.subr.bf16.mxu0 0
    %2300 = vmatpush1.bf16.msra.mxu0 0
    %2301 = vmatprep.subr.bf16.mxu0 0
    %2302 = vmatpush1.bf16.msra.mxu0 0
    %2303 = vmatprep.subr.bf16.mxu0 0
    %2304 = vmatpush1.bf16.msra.mxu0 %v2287
    %2305 = vmatprep.subr.bf16.mxu0 0
    %2306 = vmatpush2.bf16.msra.mxu0 0
    %2307 = vmatprep.subr.bf16.mxu0 0
    %2308 = vmatpush2.bf16.msra.mxu0 0
    %2309 = vmatprep.subr.bf16.mxu0 0
    %2310 = vmatpush2.bf16.msra.mxu0 0
    %2311 = vmatprep.subr.bf16.mxu0 0
    %2312 = vmatpush2.bf16.msra.mxu0 0
    %2313 = vmatprep.subr.bf16.mxu0 0
    %2314 = vmatpush2.bf16.msra.mxu0 0
    %2315 = vmatprep.subr.bf16.mxu0 0
    %2316 = vmatpush2.bf16.msra.mxu0 0
    %2317 = vmatprep.subr.bf16.mxu0 0
    %2318 = vmatpush2.bf16.msra.mxu0 0
    %2319 = vmatprep.subr.bf16.mxu0 0
    %2320 = vmatpush2.bf16.msra.mxu0 0
    %2321 = vmatprep.mubr.bf16.mxu0 0
    %2322 = vmatmul.mubr.bf16.gmra.mxu0 %v2284
    %v2323 = vpop.f32.mrf.mxu0
    %v2324 = vadd.f32 0.0, %v2323
    %v2325 = vpop.f32.mrf.mxu0
    %v2326 = vpop.f32.mrf.mxu0
    %v2327 = vadd.f32 0.0, %v2326
    %v2328 = vpop.f32.mrf.mxu0
    %2329 = vdwg.mxu0
    %v2330 = vadd.f32 %v2261, %v2324
    %v2331 = vadd.f32 %v2262, %v2327
    %2332 = vrot.lane.b32.xlu0 %v1790, 119
    %v2333 = vpop.permute.xlu0 %2332
    %vm2336 = vmand %vm1787, %vm1789
    %v2337 = vsel %vm2336, 1, 0
    %v2338 = vlaneseq
    %v2339 = vshrl.u32 %v2338, 7
    %v2340 = vsub.s32 0, %v2339
    %v2341 = vrot.slane %v2337, %v2340
    %vm2342 = vcmp.eq.s32.totalorder %v2341, 1
    %vm2343 = vmpackc.low %vm2342, %vm2342
    %v2344 = vsel %vm2343, %v2333, 0
    %s2345 = scalar_lea.vmem %s5, 64
    %v2346 = vld [vmem:[%s2345] sm:$0xf]
    %v2347 = vld [vmem:[%s2345 + $0x4] sm:$0xf]
    %v2350 = vunpack.c.l.b16 %v2346
    %v2351 = vunpack.c.l.b16 %v2347
    %v2352 = vpack.c.b16 %v2351, %v2350
    %v2354 = vsel %vm1809, %v2352, 0
    %v2357 = vsel %vm1831, %v2344, 0
    %2359 = vmatprep.subr.bf16.mxu0 0
    %2360 = vmatpush1.bf16.msra.mxu0 0
    %2361 = vmatprep.subr.bf16.mxu0 0
    %2362 = vmatpush1.bf16.msra.mxu0 0
    %2363 = vmatprep.subr.bf16.mxu0 0
    %2364 = vmatpush1.bf16.msra.mxu0 0
    %2365 = vmatprep.subr.bf16.mxu0 0
    %2366 = vmatpush1.bf16.msra.mxu0 0
    %2367 = vmatprep.subr.bf16.mxu0 0
    %2368 = vmatpush1.bf16.msra.mxu0 0
    %2369 = vmatprep.subr.bf16.mxu0 0
    %2370 = vmatpush1.bf16.msra.mxu0 0
    %2371 = vmatprep.subr.bf16.mxu0 0
    %2372 = vmatpush1.bf16.msra.mxu0 0
    %2373 = vmatprep.subr.bf16.mxu0 0
    %2374 = vmatpush1.bf16.msra.mxu0 %v2357
    %2375 = vmatprep.subr.bf16.mxu0 0
    %2376 = vmatpush2.bf16.msra.mxu0 0
    %2377 = vmatprep.subr.bf16.mxu0 0
    %2378 = vmatpush2.bf16.msra.mxu0 0
    %2379 = vmatprep.subr.bf16.mxu0 0
    %2380 = vmatpush2.bf16.msra.mxu0 0
    %2381 = vmatprep.subr.bf16.mxu0 0
    %2382 = vmatpush2.bf16.msra.mxu0 0
    %2383 = vmatprep.subr.bf16.mxu0 0
    %2384 = vmatpush2.bf16.msra.mxu0 0
    %2385 = vmatprep.subr.bf16.mxu0 0
    %2386 = vmatpush2.bf16.msra.mxu0 0
    %2387 = vmatprep.subr.bf16.mxu0 0
    %2388 = vmatpush2.bf16.msra.mxu0 0
    %2389 = vmatprep.subr.bf16.mxu0 0
    %2390 = vmatpush2.bf16.msra.mxu0 0
    %2391 = vmatprep.mubr.bf16.mxu0 0
    %2392 = vmatmul.mubr.bf16.gmra.mxu0 %v2354
    %v2393 = vpop.f32.mrf.mxu0
    %v2394 = vadd.f32 0.0, %v2393
    %v2395 = vpop.f32.mrf.mxu0
    %v2396 = vpop.f32.mrf.mxu0
    %v2397 = vadd.f32 0.0, %v2396
    %v2398 = vpop.f32.mrf.mxu0
    %2399 = vdwg.mxu0
    %v2400 = vadd.f32 %v2330, %v2394
    %v2401 = vadd.f32 %v2331, %v2397
    %v2402 = vld [vmem:[%s6] sm:$0xff]
    %v2403 = vld [vmem:[%s6 + $0x8] sm:$0xff]
    %2405 = vset.pattern.permute.xlu0 0
    %2406 = vperm.xlu0 %2405, %v2402
    %v2407 = vpop.permute.xlu0 %2406
    %2410 = vset.pattern.permute.xlu0 0
    %2411 = vperm.xlu0 %2410, %v2403
    %v2412 = vpop.permute.xlu0 %2411
    %v2414 = vadd.f32 %v2400, %v2407
    %v2415 = vadd.f32 %v2401, %v2412
    %v2416 = vmax.f32 %v2414, 0.0
    %v2417 = vmax.f32 %v2415, 0.0
    %v2418 = vld [vmem:[%s10] sm:$0x1]
    %v2419 = vld [vmem:[%s10 + $0x1] sm:$0x1]
    %vm2420 = vcmp.ge.s32.totalorder %v2418, 1
    %vm2421 = vcmp.le.s32.totalorder %v2418, 6
    %vm2422 = vcmp.ge.s32.totalorder %v2419, 1
    %vm2423 = vcmp.le.s32.totalorder %v2419, 6
    %v2424 = vpack.c.bf16 %v2417, %v2416
    %2426 = vrot.lane.b32.xlu0 %v2424, 9
    %v2427 = vpop.permute.xlu0 %2426
    %vm2430 = vmand %vm2420, %vm2422
    %v2431 = vsel %vm2430, 1, 0
    %v2432 = vlaneseq
    %v2433 = vshrl.u32 %v2432, 7
    %v2434 = vsub.s32 0, %v2433
    %v2435 = vrot.slane %v2431, %v2434
    %vm2436 = vcmp.eq.s32.totalorder %v2435, 1
    %vm2437 = vmpackc.low %vm2436, %vm2436
    %v2438 = vsel %vm2437, 65537, 0
    %v2439 = vlaneseq
    %v2440 = vshrl.u32 %v2439, 7
    %v2441 = vsub.s32 0, %v2440
    %v2442 = vrot.slane %v2438, %v2441
    %vm2443 = vcmp.ne.s16.totalorder %v2442, 0
    %v2444 = vsel %vm2443, %v2427, 0
    %v2445 = vld [vmem:[%s8] sm:$0x1]
    %2446 = vrot.lane.b32.xlu0 %v2424, 8
    %v2447 = vpop.permute.xlu0 %2446
    %v2450 = vsel %vm2420, 1, 0
    %v2451 = vlaneseq
    %v2452 = vshrl.u32 %v2451, 7
    %v2453 = vsub.s32 0, %v2452
    %v2454 = vrot.slane %v2450, %v2453
    %vm2455 = vcmp.eq.s32.totalorder %v2454, 1
    %vm2456 = vmpackc.low %vm2455, %vm2455
    %v2457 = vsel %vm2456, 65537, 0
    %v2458 = vlaneseq
    %v2459 = vshrl.u32 %v2458, 7
    %v2460 = vsub.s32 0, %v2459
    %v2461 = vrot.slane %v2457, %v2460
    %vm2462 = vcmp.ne.s16.totalorder %v2461, 0
    %v2463 = vsel %vm2462, %v2447, 0
    %s2464 = scalar_lea.vmem %s8, 1
    %v2465 = vld [vmem:[%s2464] sm:$0x1]
    %v2467 = vsel %vm162, %v2465, 0
    %2469 = vmatprep.subr.bf16.mxu0 0
    %2470 = vmatpush1.bf16.msra.mxu0 0
    %2471 = vmatprep.subr.bf16.mxu0 0
    %2472 = vmatpush1.bf16.msra.mxu0 0
    %2473 = vmatprep.subr.bf16.mxu0 0
    %2474 = vmatpush1.bf16.msra.mxu0 0
    %2475 = vmatprep.subr.bf16.mxu0 0
    %2476 = vmatpush1.bf16.msra.mxu0 0
    %2477 = vmatprep.subr.bf16.mxu0 0
    %2478 = vmatpush1.bf16.msra.mxu0 0
    %2479 = vmatprep.subr.bf16.mxu0 0
    %2480 = vmatpush1.bf16.msra.mxu0 0
    %2481 = vmatprep.subr.bf16.mxu0 0
    %2482 = vmatpush1.bf16.msra.mxu0 0
    %2483 = vmatprep.subr.bf16.mxu0 0
    %2484 = vmatpush1.bf16.msra.mxu0 %v2463
    %2485 = vmatprep.subr.bf16.mxu0 0
    %2486 = vmatpush2.bf16.msra.mxu0 0
    %2487 = vmatprep.subr.bf16.mxu0 0
    %2488 = vmatpush2.bf16.msra.mxu0 0
    %2489 = vmatprep.subr.bf16.mxu0 0
    %2490 = vmatpush2.bf16.msra.mxu0 0
    %2491 = vmatprep.subr.bf16.mxu0 0
    %2492 = vmatpush2.bf16.msra.mxu0 0
    %2493 = vmatprep.subr.bf16.mxu0 0
    %2494 = vmatpush2.bf16.msra.mxu0 0
    %2495 = vmatprep.subr.bf16.mxu0 0
    %2496 = vmatpush2.bf16.msra.mxu0 0
    %2497 = vmatprep.subr.bf16.mxu0 0
    %2498 = vmatpush2.bf16.msra.mxu0 0
    %2499 = vmatprep.subr.bf16.mxu0 0
    %2500 = vmatpush2.bf16.msra.mxu0 0
    %2501 = vmatprep.mubr.bf16.mxu0 0
    %2502 = vmatmul.mubr.bf16.gmra.mxu0 %v2467
    %v2503 = vpop.f32.mrf.mxu0
    %v2504 = vadd.f32 0.0, %v2503
    %v2505 = vpop.f32.mrf.mxu0
    %v2506 = vpop.f32.mrf.mxu0
    %v2507 = vpop.f32.mrf.mxu0
    %2508 = vdwg.mxu0
    %v2510 = vsel %vm162, %v2445, 0
    %2512 = vmatprep.subr.bf16.mxu0 0
    %2513 = vmatpush1.bf16.msra.mxu0 0
    %2514 = vmatprep.subr.bf16.mxu0 0
    %2515 = vmatpush1.bf16.msra.mxu0 0
    %2516 = vmatprep.subr.bf16.mxu0 0
    %2517 = vmatpush1.bf16.msra.mxu0 0
    %2518 = vmatprep.subr.bf16.mxu0 0
    %2519 = vmatpush1.bf16.msra.mxu0 0
    %2520 = vmatprep.subr.bf16.mxu0 0
    %2521 = vmatpush1.bf16.msra.mxu0 0
    %2522 = vmatprep.subr.bf16.mxu0 0
    %2523 = vmatpush1.bf16.msra.mxu0 0
    %2524 = vmatprep.subr.bf16.mxu0 0
    %2525 = vmatpush1.bf16.msra.mxu0 0
    %2526 = vmatprep.subr.bf16.mxu0 0
    %2527 = vmatpush1.bf16.msra.mxu0 %v2444
    %2528 = vmatprep.subr.bf16.mxu0 0
    %2529 = vmatpush2.bf16.msra.mxu0 0
    %2530 = vmatprep.subr.bf16.mxu0 0
    %2531 = vmatpush2.bf16.msra.mxu0 0
    %2532 = vmatprep.subr.bf16.mxu0 0
    %2533 = vmatpush2.bf16.msra.mxu0 0
    %2534 = vmatprep.subr.bf16.mxu0 0
    %2535 = vmatpush2.bf16.msra.mxu0 0
    %2536 = vmatprep.subr.bf16.mxu0 0
    %2537 = vmatpush2.bf16.msra.mxu0 0
    %2538 = vmatprep.subr.bf16.mxu0 0
    %2539 = vmatpush2.bf16.msra.mxu0 0
    %2540 = vmatprep.subr.bf16.mxu0 0
    %2541 = vmatpush2.bf16.msra.mxu0 0
    %2542 = vmatprep.subr.bf16.mxu0 0
    %2543 = vmatpush2.bf16.msra.mxu0 0
    %2544 = vmatprep.mubr.bf16.mxu0 0
    %2545 = vmatmul.mubr.bf16.gmra.mxu0 %v2510
    %v2546 = vpop.f32.mrf.mxu0
    %v2547 = vadd.f32 %v2504, %v2546
    %v2548 = vpop.f32.mrf.mxu0
    %v2549 = vpop.f32.mrf.mxu0
    %v2550 = vpop.f32.mrf.mxu0
    %2551 = vdwg.mxu0
    %2552 = vrot.lane.b32.xlu0 %v2424, 7
    %v2553 = vpop.permute.xlu0 %2552
    %vm2556 = vmand %vm2420, %vm2423
    %v2557 = vsel %vm2556, 1, 0
    %v2558 = vlaneseq
    %v2559 = vshrl.u32 %v2558, 7
    %v2560 = vsub.s32 0, %v2559
    %v2561 = vrot.slane %v2557, %v2560
    %vm2562 = vcmp.eq.s32.totalorder %v2561, 1
    %vm2563 = vmpackc.low %vm2562, %vm2562
    %v2564 = vsel %vm2563, 65537, 0
    %v2565 = vlaneseq
    %v2566 = vshrl.u32 %v2565, 7
    %v2567 = vsub.s32 0, %v2566
    %v2568 = vrot.slane %v2564, %v2567
    %vm2569 = vcmp.ne.s16.totalorder %v2568, 0
    %v2570 = vsel %vm2569, %v2553, 0
    %s2571 = scalar_lea.vmem %s8, 2
    %v2572 = vld [vmem:[%s2571] sm:$0x1]
    %v2574 = vsel %vm162, %v2572, 0
    %2576 = vmatprep.subr.bf16.mxu0 0
    %2577 = vmatpush1.bf16.msra.mxu0 0
    %2578 = vmatprep.subr.bf16.mxu0 0
    %2579 = vmatpush1.bf16.msra.mxu0 0
    %2580 = vmatprep.subr.bf16.mxu0 0
    %2581 = vmatpush1.bf16.msra.mxu0 0
    %2582 = vmatprep.subr.bf16.mxu0 0
    %2583 = vmatpush1.bf16.msra.mxu0 0
    %2584 = vmatprep.subr.bf16.mxu0 0
    %2585 = vmatpush1.bf16.msra.mxu0 0
    %2586 = vmatprep.subr.bf16.mxu0 0
    %2587 = vmatpush1.bf16.msra.mxu0 0
    %2588 = vmatprep.subr.bf16.mxu0 0
    %2589 = vmatpush1.bf16.msra.mxu0 0
    %2590 = vmatprep.subr.bf16.mxu0 0
    %2591 = vmatpush1.bf16.msra.mxu0 %v2570
    %2592 = vmatprep.subr.bf16.mxu0 0
    %2593 = vmatpush2.bf16.msra.mxu0 0
    %2594 = vmatprep.subr.bf16.mxu0 0
    %2595 = vmatpush2.bf16.msra.mxu0 0
    %2596 = vmatprep.subr.bf16.mxu0 0
    %2597 = vmatpush2.bf16.msra.mxu0 0
    %2598 = vmatprep.subr.bf16.mxu0 0
    %2599 = vmatpush2.bf16.msra.mxu0 0
    %2600 = vmatprep.subr.bf16.mxu0 0
    %2601 = vmatpush2.bf16.msra.mxu0 0
    %2602 = vmatprep.subr.bf16.mxu0 0
    %2603 = vmatpush2.bf16.msra.mxu0 0
    %2604 = vmatprep.subr.bf16.mxu0 0
    %2605 = vmatpush2.bf16.msra.mxu0 0
    %2606 = vmatprep.subr.bf16.mxu0 0
    %2607 = vmatpush2.bf16.msra.mxu0 0
    %2608 = vmatprep.mubr.bf16.mxu0 0
    %2609 = vmatmul.mubr.bf16.gmra.mxu0 %v2574
    %v2610 = vpop.f32.mrf.mxu0
    %v2611 = vadd.f32 0.0, %v2610
    %v2612 = vpop.f32.mrf.mxu0
    %v2613 = vpop.f32.mrf.mxu0
    %v2614 = vpop.f32.mrf.mxu0
    %2615 = vdwg.mxu0
    %v2616 = vadd.f32 %v2547, %v2611
    %2617 = vrot.lane.b32.xlu0 %v2424, 1
    %v2618 = vpop.permute.xlu0 %2617
    %v2621 = vsel %vm2422, 1, 0
    %v2622 = vlaneseq
    %v2623 = vshrl.u32 %v2622, 7
    %v2624 = vsub.s32 0, %v2623
    %v2625 = vrot.slane %v2621, %v2624
    %vm2626 = vcmp.eq.s32.totalorder %v2625, 1
    %vm2627 = vmpackc.low %vm2626, %vm2626
    %v2628 = vsel %vm2627, 65537, 0
    %v2629 = vlaneseq
    %v2630 = vshrl.u32 %v2629, 7
    %v2631 = vsub.s32 0, %v2630
    %v2632 = vrot.slane %v2628, %v2631
    %vm2633 = vcmp.ne.s16.totalorder %v2632, 0
    %v2634 = vsel %vm2633, %v2618, 0
    %s2635 = scalar_lea.vmem %s8, 3
    %v2636 = vld [vmem:[%s2635] sm:$0x1]
    %v2638 = vsel %vm162, %v2636, 0
    %2640 = vmatprep.subr.bf16.mxu0 0
    %2641 = vmatpush1.bf16.msra.mxu0 0
    %2642 = vmatprep.subr.bf16.mxu0 0
    %2643 = vmatpush1.bf16.msra.mxu0 0
    %2644 = vmatprep.subr.bf16.mxu0 0
    %2645 = vmatpush1.bf16.msra.mxu0 0
    %2646 = vmatprep.subr.bf16.mxu0 0
    %2647 = vmatpush1.bf16.msra.mxu0 0
    %2648 = vmatprep.subr.bf16.mxu0 0
    %2649 = vmatpush1.bf16.msra.mxu0 0
    %2650 = vmatprep.subr.bf16.mxu0 0
    %2651 = vmatpush1.bf16.msra.mxu0 0
    %2652 = vmatprep.subr.bf16.mxu0 0
    %2653 = vmatpush1.bf16.msra.mxu0 0
    %2654 = vmatprep.subr.bf16.mxu0 0
    %2655 = vmatpush1.bf16.msra.mxu0 %v2634
    %2656 = vmatprep.subr.bf16.mxu0 0
    %2657 = vmatpush2.bf16.msra.mxu0 0
    %2658 = vmatprep.subr.bf16.mxu0 0
    %2659 = vmatpush2.bf16.msra.mxu0 0
    %2660 = vmatprep.subr.bf16.mxu0 0
    %2661 = vmatpush2.bf16.msra.mxu0 0
    %2662 = vmatprep.subr.bf16.mxu0 0
    %2663 = vmatpush2.bf16.msra.mxu0 0
    %2664 = vmatprep.subr.bf16.mxu0 0
    %2665 = vmatpush2.bf16.msra.mxu0 0
    %2666 = vmatprep.subr.bf16.mxu0 0
    %2667 = vmatpush2.bf16.msra.mxu0 0
    %2668 = vmatprep.subr.bf16.mxu0 0
    %2669 = vmatpush2.bf16.msra.mxu0 0
    %2670 = vmatprep.subr.bf16.mxu0 0
    %2671 = vmatpush2.bf16.msra.mxu0 0
    %2672 = vmatprep.mubr.bf16.mxu0 0
    %2673 = vmatmul.mubr.bf16.gmra.mxu0 %v2638
    %v2674 = vpop.f32.mrf.mxu0
    %v2675 = vadd.f32 0.0, %v2674
    %v2676 = vpop.f32.mrf.mxu0
    %v2677 = vpop.f32.mrf.mxu0
    %v2678 = vpop.f32.mrf.mxu0
    %2679 = vdwg.mxu0
    %v2680 = vadd.f32 %v2616, %v2675
    %s2681 = scalar_lea.vmem %s8, 4
    %v2682 = vld [vmem:[%s2681] sm:$0x1]
    %v2684 = vsel %vm162, %v2682, 0
    %2686 = vmatprep.subr.bf16.mxu0 0
    %2687 = vmatpush1.bf16.msra.mxu0 0
    %2688 = vmatprep.subr.bf16.mxu0 0
    %2689 = vmatpush1.bf16.msra.mxu0 0
    %2690 = vmatprep.subr.bf16.mxu0 0
    %2691 = vmatpush1.bf16.msra.mxu0 0
    %2692 = vmatprep.subr.bf16.mxu0 0
    %2693 = vmatpush1.bf16.msra.mxu0 0
    %2694 = vmatprep.subr.bf16.mxu0 0
    %2695 = vmatpush1.bf16.msra.mxu0 0
    %2696 = vmatprep.subr.bf16.mxu0 0
    %2697 = vmatpush1.bf16.msra.mxu0 0
    %2698 = vmatprep.subr.bf16.mxu0 0
    %2699 = vmatpush1.bf16.msra.mxu0 0
    %2700 = vmatprep.subr.bf16.mxu0 0
    %2701 = vmatpush1.bf16.msra.mxu0 %v2424
    %2702 = vmatprep.subr.bf16.mxu0 0
    %2703 = vmatpush2.bf16.msra.mxu0 0
    %2704 = vmatprep.subr.bf16.mxu0 0
    %2705 = vmatpush2.bf16.msra.mxu0 0
    %2706 = vmatprep.subr.bf16.mxu0 0
    %2707 = vmatpush2.bf16.msra.mxu0 0
    %2708 = vmatprep.subr.bf16.mxu0 0
    %2709 = vmatpush2.bf16.msra.mxu0 0
    %2710 = vmatprep.subr.bf16.mxu0 0
    %2711 = vmatpush2.bf16.msra.mxu0 0
    %2712 = vmatprep.subr.bf16.mxu0 0
    %2713 = vmatpush2.bf16.msra.mxu0 0
    %2714 = vmatprep.subr.bf16.mxu0 0
    %2715 = vmatpush2.bf16.msra.mxu0 0
    %2716 = vmatprep.subr.bf16.mxu0 0
    %2717 = vmatpush2.bf16.msra.mxu0 0
    %2718 = vmatprep.mubr.bf16.mxu0 0
    %2719 = vmatmul.mubr.bf16.gmra.mxu0 %v2684
    %v2720 = vpop.f32.mrf.mxu0
    %v2721 = vadd.f32 0.0, %v2720
    %v2722 = vpop.f32.mrf.mxu0
    %v2723 = vpop.f32.mrf.mxu0
    %v2724 = vpop.f32.mrf.mxu0
    %2725 = vdwg.mxu0
    %v2726 = vadd.f32 %v2680, %v2721
    %2727 = vrot.lane.b32.xlu0 %v2424, 127
    %v2728 = vpop.permute.xlu0 %2727
    %v2731 = vsel %vm2423, 1, 0
    %v2732 = vlaneseq
    %v2733 = vshrl.u32 %v2732, 7
    %v2734 = vsub.s32 0, %v2733
    %v2735 = vrot.slane %v2731, %v2734
    %vm2736 = vcmp.eq.s32.totalorder %v2735, 1
    %vm2737 = vmpackc.low %vm2736, %vm2736
    %v2738 = vsel %vm2737, 65537, 0
    %v2739 = vlaneseq
    %v2740 = vshrl.u32 %v2739, 7
    %v2741 = vsub.s32 0, %v2740
    %v2742 = vrot.slane %v2738, %v2741
    %vm2743 = vcmp.ne.s16.totalorder %v2742, 0
    %v2744 = vsel %vm2743, %v2728, 0
    %s2745 = scalar_lea.vmem %s8, 5
    %v2746 = vld [vmem:[%s2745] sm:$0x1]
    %v2748 = vsel %vm162, %v2746, 0
    %2750 = vmatprep.subr.bf16.mxu0 0
    %2751 = vmatpush1.bf16.msra.mxu0 0
    %2752 = vmatprep.subr.bf16.mxu0 0
    %2753 = vmatpush1.bf16.msra.mxu0 0
    %2754 = vmatprep.subr.bf16.mxu0 0
    %2755 = vmatpush1.bf16.msra.mxu0 0
    %2756 = vmatprep.subr.bf16.mxu0 0
    %2757 = vmatpush1.bf16.msra.mxu0 0
    %2758 = vmatprep.subr.bf16.mxu0 0
    %2759 = vmatpush1.bf16.msra.mxu0 0
    %2760 = vmatprep.subr.bf16.mxu0 0
    %2761 = vmatpush1.bf16.msra.mxu0 0
    %2762 = vmatprep.subr.bf16.mxu0 0
    %2763 = vmatpush1.bf16.msra.mxu0 0
    %2764 = vmatprep.subr.bf16.mxu0 0
    %2765 = vmatpush1.bf16.msra.mxu0 %v2744
    %2766 = vmatprep.subr.bf16.mxu0 0
    %2767 = vmatpush2.bf16.msra.mxu0 0
    %2768 = vmatprep.subr.bf16.mxu0 0
    %2769 = vmatpush2.bf16.msra.mxu0 0
    %2770 = vmatprep.subr.bf16.mxu0 0
    %2771 = vmatpush2.bf16.msra.mxu0 0
    %2772 = vmatprep.subr.bf16.mxu0 0
    %2773 = vmatpush2.bf16.msra.mxu0 0
    %2774 = vmatprep.subr.bf16.mxu0 0
    %2775 = vmatpush2.bf16.msra.mxu0 0
    %2776 = vmatprep.subr.bf16.mxu0 0
    %2777 = vmatpush2.bf16.msra.mxu0 0
    %2778 = vmatprep.subr.bf16.mxu0 0
    %2779 = vmatpush2.bf16.msra.mxu0 0
    %2780 = vmatprep.subr.bf16.mxu0 0
    %2781 = vmatpush2.bf16.msra.mxu0 0
    %2782 = vmatprep.mubr.bf16.mxu0 0
    %2783 = vmatmul.mubr.bf16.gmra.mxu0 %v2748
    %v2784 = vpop.f32.mrf.mxu0
    %v2785 = vadd.f32 0.0, %v2784
    %v2786 = vpop.f32.mrf.mxu0
    %v2787 = vpop.f32.mrf.mxu0
    %v2788 = vpop.f32.mrf.mxu0
    %2789 = vdwg.mxu0
    %v2790 = vadd.f32 %v2726, %v2785
    %2791 = vrot.lane.b32.xlu0 %v2424, 121
    %v2792 = vpop.permute.xlu0 %2791
    %vm2795 = vmand %vm2421, %vm2422
    %v2796 = vsel %vm2795, 1, 0
    %v2797 = vlaneseq
    %v2798 = vshrl.u32 %v2797, 7
    %v2799 = vsub.s32 0, %v2798
    %v2800 = vrot.slane %v2796, %v2799
    %vm2801 = vcmp.eq.s32.totalorder %v2800, 1
    %vm2802 = vmpackc.low %vm2801, %vm2801
    %v2803 = vsel %vm2802, 65537, 0
    %v2804 = vlaneseq
    %v2805 = vshrl.u32 %v2804, 7
    %v2806 = vsub.s32 0, %v2805
    %v2807 = vrot.slane %v2803, %v2806
    %vm2808 = vcmp.ne.s16.totalorder %v2807, 0
    %v2809 = vsel %vm2808, %v2792, 0
    %s2810 = scalar_lea.vmem %s8, 6
    %v2811 = vld [vmem:[%s2810] sm:$0x1]
    %v2813 = vsel %vm162, %v2811, 0
    %2815 = vmatprep.subr.bf16.mxu0 0
    %2816 = vmatpush1.bf16.msra.mxu0 0
    %2817 = vmatprep.subr.bf16.mxu0 0
    %2818 = vmatpush1.bf16.msra.mxu0 0
    %2819 = vmatprep.subr.bf16.mxu0 0
    %2820 = vmatpush1.bf16.msra.mxu0 0
    %2821 = vmatprep.subr.bf16.mxu0 0
    %2822 = vmatpush1.bf16.msra.mxu0 0
    %2823 = vmatprep.subr.bf16.mxu0 0
    %2824 = vmatpush1.bf16.msra.mxu0 0
    %2825 = vmatprep.subr.bf16.mxu0 0
    %2826 = vmatpush1.bf16.msra.mxu0 0
    %2827 = vmatprep.subr.bf16.mxu0 0
    %2828 = vmatpush1.bf16.msra.mxu0 0
    %2829 = vmatprep.subr.bf16.mxu0 0
    %2830 = vmatpush1.bf16.msra.mxu0 %v2809
    %2831 = vmatprep.subr.bf16.mxu0 0
    %2832 = vmatpush2.bf16.msra.mxu0 0
    %2833 = vmatprep.subr.bf16.mxu0 0
    %2834 = vmatpush2.bf16.msra.mxu0 0
    %2835 = vmatprep.subr.bf16.mxu0 0
    %2836 = vmatpush2.bf16.msra.mxu0 0
    %2837 = vmatprep.subr.bf16.mxu0 0
    %2838 = vmatpush2.bf16.msra.mxu0 0
    %2839 = vmatprep.subr.bf16.mxu0 0
    %2840 = vmatpush2.bf16.msra.mxu0 0
    %2841 = vmatprep.subr.bf16.mxu0 0
    %2842 = vmatpush2.bf16.msra.mxu0 0
    %2843 = vmatprep.subr.bf16.mxu0 0
    %2844 = vmatpush2.bf16.msra.mxu0 0
    %2845 = vmatprep.subr.bf16.mxu0 0
    %2846 = vmatpush2.bf16.msra.mxu0 0
    %2847 = vmatprep.mubr.bf16.mxu0 0
    %2848 = vmatmul.mubr.bf16.gmra.mxu0 %v2813
    %v2849 = vpop.f32.mrf.mxu0
    %v2850 = vadd.f32 0.0, %v2849
    %v2851 = vpop.f32.mrf.mxu0
    %v2852 = vpop.f32.mrf.mxu0
    %v2853 = vpop.f32.mrf.mxu0
    %2854 = vdwg.mxu0
    %v2855 = vadd.f32 %v2790, %v2850
    %2856 = vrot.lane.b32.xlu0 %v2424, 120
    %v2857 = vpop.permute.xlu0 %2856
    %v2860 = vsel %vm2421, 1, 0
    %v2861 = vlaneseq
    %v2862 = vshrl.u32 %v2861, 7
    %v2863 = vsub.s32 0, %v2862
    %v2864 = vrot.slane %v2860, %v2863
    %vm2865 = vcmp.eq.s32.totalorder %v2864, 1
    %vm2866 = vmpackc.low %vm2865, %vm2865
    %v2867 = vsel %vm2866, 65537, 0
    %v2868 = vlaneseq
    %v2869 = vshrl.u32 %v2868, 7
    %v2870 = vsub.s32 0, %v2869
    %v2871 = vrot.slane %v2867, %v2870
    %vm2872 = vcmp.ne.s16.totalorder %v2871, 0
    %v2873 = vsel %vm2872, %v2857, 0
    %s2874 = scalar_lea.vmem %s8, 7
    %v2875 = vld [vmem:[%s2874] sm:$0x1]
    %v2877 = vsel %vm162, %v2875, 0
    %2879 = vmatprep.subr.bf16.mxu0 0
    %2880 = vmatpush1.bf16.msra.mxu0 0
    %2881 = vmatprep.subr.bf16.mxu0 0
    %2882 = vmatpush1.bf16.msra.mxu0 0
    %2883 = vmatprep.subr.bf16.mxu0 0
    %2884 = vmatpush1.bf16.msra.mxu0 0
    %2885 = vmatprep.subr.bf16.mxu0 0
    %2886 = vmatpush1.bf16.msra.mxu0 0
    %2887 = vmatprep.subr.bf16.mxu0 0
    %2888 = vmatpush1.bf16.msra.mxu0 0
    %2889 = vmatprep.subr.bf16.mxu0 0
    %2890 = vmatpush1.bf16.msra.mxu0 0
    %2891 = vmatprep.subr.bf16.mxu0 0
    %2892 = vmatpush1.bf16.msra.mxu0 0
    %2893 = vmatprep.subr.bf16.mxu0 0
    %2894 = vmatpush1.bf16.msra.mxu0 %v2873
    %2895 = vmatprep.subr.bf16.mxu0 0
    %2896 = vmatpush2.bf16.msra.mxu0 0
    %2897 = vmatprep.subr.bf16.mxu0 0
    %2898 = vmatpush2.bf16.msra.mxu0 0
    %2899 = vmatprep.subr.bf16.mxu0 0
    %2900 = vmatpush2.bf16.msra.mxu0 0
    %2901 = vmatprep.subr.bf16.mxu0 0
    %2902 = vmatpush2.bf16.msra.mxu0 0
    %2903 = vmatprep.subr.bf16.mxu0 0
    %2904 = vmatpush2.bf16.msra.mxu0 0
    %2905 = vmatprep.subr.bf16.mxu0 0
    %2906 = vmatpush2.bf16.msra.mxu0 0
    %2907 = vmatprep.subr.bf16.mxu0 0
    %2908 = vmatpush2.bf16.msra.mxu0 0
    %2909 = vmatprep.subr.bf16.mxu0 0
    %2910 = vmatpush2.bf16.msra.mxu0 0
    %2911 = vmatprep.mubr.bf16.mxu0 0
    %2912 = vmatmul.mubr.bf16.gmra.mxu0 %v2877
    %v2913 = vpop.f32.mrf.mxu0
    %v2914 = vadd.f32 0.0, %v2913
    %v2915 = vpop.f32.mrf.mxu0
    %v2916 = vpop.f32.mrf.mxu0
    %v2917 = vpop.f32.mrf.mxu0
    %2918 = vdwg.mxu0
    %v2919 = vadd.f32 %v2855, %v2914
    %2920 = vrot.lane.b32.xlu0 %v2424, 119
    %v2921 = vpop.permute.xlu0 %2920
    %vm2924 = vmand %vm2421, %vm2423
    %v2925 = vsel %vm2924, 1, 0
    %v2926 = vlaneseq
    %v2927 = vshrl.u32 %v2926, 7
    %v2928 = vsub.s32 0, %v2927
    %v2929 = vrot.slane %v2925, %v2928
    %vm2930 = vcmp.eq.s32.totalorder %v2929, 1
    %vm2931 = vmpackc.low %vm2930, %vm2930
    %v2932 = vsel %vm2931, 65537, 0
    %v2933 = vlaneseq
    %v2934 = vshrl.u32 %v2933, 7
    %v2935 = vsub.s32 0, %v2934
    %v2936 = vrot.slane %v2932, %v2935
    %vm2937 = vcmp.ne.s16.totalorder %v2936, 0
    %v2938 = vsel %vm2937, %v2921, 0
    %s2939 = scalar_lea.vmem %s8, 8
    %v2940 = vld [vmem:[%s2939] sm:$0x1]
    %v2942 = vsel %vm162, %v2940, 0
    %2944 = vmatprep.subr.bf16.mxu0 0
    %2945 = vmatpush1.bf16.msra.mxu0 0
    %2946 = vmatprep.subr.bf16.mxu0 0
    %2947 = vmatpush1.bf16.msra.mxu0 0
    %2948 = vmatprep.subr.bf16.mxu0 0
    %2949 = vmatpush1.bf16.msra.mxu0 0
    %2950 = vmatprep.subr.bf16.mxu0 0
    %2951 = vmatpush1.bf16.msra.mxu0 0
    %2952 = vmatprep.subr.bf16.mxu0 0
    %2953 = vmatpush1.bf16.msra.mxu0 0
    %2954 = vmatprep.subr.bf16.mxu0 0
    %2955 = vmatpush1.bf16.msra.mxu0 0
    %2956 = vmatprep.subr.bf16.mxu0 0
    %2957 = vmatpush1.bf16.msra.mxu0 0
    %2958 = vmatprep.subr.bf16.mxu0 0
    %2959 = vmatpush1.bf16.msra.mxu0 %v2938
    %2960 = vmatprep.subr.bf16.mxu0 0
    %2961 = vmatpush2.bf16.msra.mxu0 0
    %2962 = vmatprep.subr.bf16.mxu0 0
    %2963 = vmatpush2.bf16.msra.mxu0 0
    %2964 = vmatprep.subr.bf16.mxu0 0
    %2965 = vmatpush2.bf16.msra.mxu0 0
    %2966 = vmatprep.subr.bf16.mxu0 0
    %2967 = vmatpush2.bf16.msra.mxu0 0
    %2968 = vmatprep.subr.bf16.mxu0 0
    %2969 = vmatpush2.bf16.msra.mxu0 0
    %2970 = vmatprep.subr.bf16.mxu0 0
    %2971 = vmatpush2.bf16.msra.mxu0 0
    %2972 = vmatprep.subr.bf16.mxu0 0
    %2973 = vmatpush2.bf16.msra.mxu0 0
    %2974 = vmatprep.subr.bf16.mxu0 0
    %2975 = vmatpush2.bf16.msra.mxu0 0
    %2976 = vmatprep.mubr.bf16.mxu0 0
    %2977 = vmatmul.mubr.bf16.gmra.mxu0 %v2942
    %v2978 = vpop.f32.mrf.mxu0
    %v2979 = vadd.f32 0.0, %v2978
    %v2980 = vpop.f32.mrf.mxu0
    %v2981 = vpop.f32.mrf.mxu0
    %v2982 = vpop.f32.mrf.mxu0
    %2983 = vdwg.mxu0
    %v2984 = vadd.f32 %v2919, %v2979
    %v2985 = vld [vmem:[#allocation2] sm:$0x1]
    %2987 = vset.pattern.permute.xlu0 0
    %2988 = vperm.xlu0 %2987, %v2985
    %v2989 = vpop.permute.xlu0 %2988
    %v2991 = vlaneseq
    %v2992 = vshrl.u32 %v2991, 7
    %v2993 = vsub.s32 0, %v2992
    %v2994 = vrot.slane %v2989, %v2993
    %v2995 = vadd.f32 %v2984, %v2994
    %v2996 = vld [vmem:[%s11] sm:$0xff]
    %v2997 = vld [vmem:[%s11 + $0x8] sm:$0xff]
    %v2998 = vld [vmem:[%s11 + $0x10] sm:$0xff]
    %v2999 = vld [vmem:[%s11 + $0x18] sm:$0xff]
    %v3000 = vld [vmem:[%s11 + $0x20] sm:$0xff]
    %v3001 = vld [vmem:[%s11 + $0x28] sm:$0xff]
    %v3002 = vld [vmem:[%s11 + $0x30] sm:$0xff]
    %v3003 = vld [vmem:[%s11 + $0x38] sm:$0xff]
    %v3004 = vld [vmem:[%s12] sm:$0xff]
    %v3005 = vld [vmem:[%s12 + $0x8] sm:$0xff]
    %v3006 = vld [vmem:[%s12 + $0x10] sm:$0xff]
    %v3007 = vld [vmem:[%s12 + $0x18] sm:$0xff]
    %v3008 = vld [vmem:[%s12 + $0x20] sm:$0xff]
    %v3009 = vld [vmem:[%s12 + $0x28] sm:$0xff]
    %v3010 = vld [vmem:[%s12 + $0x30] sm:$0xff]
    %v3011 = vld [vmem:[%s12 + $0x38] sm:$0xff]
    %v3012 = vld [vmem:[%s13] sm:$0xff]
    %v3013 = vlaneseq
    %v3014 = vshrl.u32 %v3013, 7
    %v3015 = vsub.s32 0, %v3014
    %v3016 = vrot.slane %v2995, %v3015
    %v3017 = vmul.f32 %v3012, %v3016
    %v3019 = vsel %vm1782, %v3017, 0
    %3021 = vmatprep.subr.mxu0 0.0
    %3022 = vmatpush1.msra.mxu0 0.0
    %3023 = vmatprep.subr.mxu0 0.0
    %3024 = vmatpush1.msra.mxu0 0.0
    %3025 = vmatprep.subr.mxu0 0.0
    %3026 = vmatpush1.msra.mxu0 0.0
    %3027 = vmatprep.subr.mxu0 0.0
    %3028 = vmatpush1.msra.mxu0 0.0
    %3029 = vmatprep.subr.mxu0 0.0
    %3030 = vmatpush1.msra.mxu0 0.0
    %3031 = vmatprep.subr.mxu0 0.0
    %3032 = vmatpush1.msra.mxu0 0.0
    %3033 = vmatprep.subr.mxu0 0.0
    %3034 = vmatpush1.msra.mxu0 0.0
    %3035 = vmatprep.subr.mxu0 0.0
    %3036 = vmatpush1.msra.mxu0 0.0
    %3037 = vmatprep.subr.mxu0 0.0
    %3038 = vmatpush1.msra.mxu0 %v3011
    %3039 = vmatprep.subr.mxu0 0.0
    %3040 = vmatpush1.msra.mxu0 %v3010
    %3041 = vmatprep.subr.mxu0 0.0
    %3042 = vmatpush1.msra.mxu0 %v3009
    %3043 = vmatprep.subr.mxu0 0.0
    %3044 = vmatpush1.msra.mxu0 %v3008
    %3045 = vmatprep.subr.mxu0 0.0
    %3046 = vmatpush1.msra.mxu0 %v3007
    %3047 = vmatprep.subr.mxu0 0.0
    %3048 = vmatpush1.msra.mxu0 %v3006
    %3049 = vmatprep.subr.mxu0 0.0
    %3050 = vmatpush1.msra.mxu0 %v3005
    %3051 = vmatprep.subr.mxu0 0.0
    %3052 = vmatpush1.msra.mxu0 %v3004
    %3053 = vmatprep.subr.mxu0 0.0
    %3054 = vmatpush2.msra.mxu0 0.0
    %3055 = vmatprep.subr.mxu0 0.0
    %3056 = vmatpush2.msra.mxu0 0.0
    %3057 = vmatprep.subr.mxu0 0.0
    %3058 = vmatpush2.msra.mxu0 0.0
    %3059 = vmatprep.subr.mxu0 0.0
    %3060 = vmatpush2.msra.mxu0 0.0
    %3061 = vmatprep.subr.mxu0 0.0
    %3062 = vmatpush2.msra.mxu0 0.0
    %3063 = vmatprep.subr.mxu0 0.0
    %3064 = vmatpush2.msra.mxu0 0.0
    %3065 = vmatprep.subr.mxu0 0.0
    %3066 = vmatpush2.msra.mxu0 0.0
    %3067 = vmatprep.subr.mxu0 0.0
    %3068 = vmatpush2.msra.mxu0 0.0
    %3069 = vmatprep.subr.mxu0 0.0
    %3070 = vmatpush2.msra.mxu0 0.0
    %3071 = vmatprep.subr.mxu0 0.0
    %3072 = vmatpush2.msra.mxu0 0.0
    %3073 = vmatprep.subr.mxu0 0.0
    %3074 = vmatpush2.msra.mxu0 0.0
    %3075 = vmatprep.subr.mxu0 0.0
    %3076 = vmatpush2.msra.mxu0 0.0
    %3077 = vmatprep.subr.mxu0 0.0
    %3078 = vmatpush2.msra.mxu0 0.0
    %3079 = vmatprep.subr.mxu0 0.0
    %3080 = vmatpush2.msra.mxu0 0.0
    %3081 = vmatprep.subr.mxu0 0.0
    %3082 = vmatpush2.msra.mxu0 0.0
    %3083 = vmatprep.subr.mxu0 0.0
    %3084 = vmatpush2.msra.mxu0 0.0
    %3085 = vmatprep.mubr.f32.mxu0 0.0
    %3086 = vmatmul.mubr.f32.gmra.mxu0 %v3019
    %v3087 = vpop.f32.mrf.mxu0
    %v3088 = vadd.f32 0.0, %v3087
    %v3089 = vpop.f32.mrf.mxu0
    %3090 = vdwg.mxu0
    %v3092 = vsel %vm1809, %v2996, 0
    %v3095 = vsel %vm1809, %v2997, 0
    %v3098 = vsel %vm1809, %v2998, 0
    %v3101 = vsel %vm1809, %v2999, 0
    %v3104 = vsel %vm1809, %v3000, 0
    %v3107 = vsel %vm1809, %v3001, 0
    %v3110 = vsel %vm1809, %v3002, 0
    %v3113 = vsel %vm1809, %v3003, 0
    %3115 = vmatprep.subr.mxu0 0.0
    %3116 = vmatpush1.msra.mxu0 0.0
    %3117 = vmatprep.subr.mxu0 0.0
    %3118 = vmatpush1.msra.mxu0 0.0
    %3119 = vmatprep.subr.mxu0 0.0
    %3120 = vmatpush1.msra.mxu0 0.0
    %3121 = vmatprep.subr.mxu0 0.0
    %3122 = vmatpush1.msra.mxu0 0.0
    %3123 = vmatprep.subr.mxu0 0.0
    %3124 = vmatpush1.msra.mxu0 0.0
    %3125 = vmatprep.subr.mxu0 0.0
    %3126 = vmatpush1.msra.mxu0 0.0
    %3127 = vmatprep.subr.mxu0 0.0
    %3128 = vmatpush1.msra.mxu0 0.0
    %3129 = vmatprep.subr.mxu0 0.0
    %3130 = vmatpush1.msra.mxu0 0.0
    %3131 = vmatprep.subr.mxu0 0.0
    %3132 = vmatpush1.msra.mxu0 0.0
    %3133 = vmatprep.subr.mxu0 0.0
    %3134 = vmatpush1.msra.mxu0 0.0
    %3135 = vmatprep.subr.mxu0 0.0
    %3136 = vmatpush1.msra.mxu0 0.0
    %3137 = vmatprep.subr.mxu0 0.0
    %3138 = vmatpush1.msra.mxu0 0.0
    %3139 = vmatprep.subr.mxu0 0.0
    %3140 = vmatpush1.msra.mxu0 0.0
    %3141 = vmatprep.subr.mxu0 0.0
    %3142 = vmatpush1.msra.mxu0 0.0
    %3143 = vmatprep.subr.mxu0 0.0
    %3144 = vmatpush1.msra.mxu0 0.0
    %3145 = vmatprep.subr.mxu0 0.0
    %3146 = vmatpush1.msra.mxu0 %v3088
    %3147 = vmatprep.subr.mxu0 0.0
    %3148 = vmatpush2.msra.mxu0 0.0
    %3149 = vmatprep.subr.mxu0 0.0
    %3150 = vmatpush2.msra.mxu0 0.0
    %3151 = vmatprep.subr.mxu0 0.0
    %3152 = vmatpush2.msra.mxu0 0.0
    %3153 = vmatprep.subr.mxu0 0.0
    %3154 = vmatpush2.msra.mxu0 0.0
    %3155 = vmatprep.subr.mxu0 0.0
    %3156 = vmatpush2.msra.mxu0 0.0
    %3157 = vmatprep.subr.mxu0 0.0
    %3158 = vmatpush2.msra.mxu0 0.0
    %3159 = vmatprep.subr.mxu0 0.0
    %3160 = vmatpush2.msra.mxu0 0.0
    %3161 = vmatprep.subr.mxu0 0.0
    %3162 = vmatpush2.msra.mxu0 0.0
    %3163 = vmatprep.subr.mxu0 0.0
    %3164 = vmatpush2.msra.mxu0 0.0
    %3165 = vmatprep.subr.mxu0 0.0
    %3166 = vmatpush2.msra.mxu0 0.0
    %3167 = vmatprep.subr.mxu0 0.0
    %3168 = vmatpush2.msra.mxu0 0.0
    %3169 = vmatprep.subr.mxu0 0.0
    %3170 = vmatpush2.msra.mxu0 0.0
    %3171 = vmatprep.subr.mxu0 0.0
    %3172 = vmatpush2.msra.mxu0 0.0
    %3173 = vmatprep.subr.mxu0 0.0
    %3174 = vmatpush2.msra.mxu0 0.0
    %3175 = vmatprep.subr.mxu0 0.0
    %3176 = vmatpush2.msra.mxu0 0.0
    %3177 = vmatprep.subr.mxu0 0.0
    %3178 = vmatpush2.msra.mxu0 0.0
    %3179 = vmatprep.mubr.f32.mxu0 0.0
    %3180 = vmatmul.mubr.f32.gmra.mxu0 %v3092
    %v3181 = vpop.f32.mrf.mxu0
    %v3182 = vadd.f32 0.0, %v3181
    %v3183 = vpop.f32.mrf.mxu0
    %3184 = vmatprep.mubr.f32.mxu0 0.0
    %3185 = vmatmul.mubr.f32.gmra.mxu0 %v3095
    %v3186 = vpop.f32.mrf.mxu0
    %v3187 = vadd.f32 0.0, %v3186
    %v3188 = vpop.f32.mrf.mxu0
    %3189 = vmatprep.mubr.f32.mxu0 0.0
    %3190 = vmatmul.mubr.f32.gmra.mxu0 %v3098
    %v3191 = vpop.f32.mrf.mxu0
    %v3192 = vadd.f32 0.0, %v3191
    %v3193 = vpop.f32.mrf.mxu0
    %3194 = vmatprep.mubr.f32.mxu0 0.0
    %3195 = vmatmul.mubr.f32.gmra.mxu0 %v3101
    %v3196 = vpop.f32.mrf.mxu0
    %v3197 = vadd.f32 0.0, %v3196
    %v3198 = vpop.f32.mrf.mxu0
    %3199 = vmatprep.mubr.f32.mxu0 0.0
    %3200 = vmatmul.mubr.f32.gmra.mxu0 %v3104
    %v3201 = vpop.f32.mrf.mxu0
    %v3202 = vadd.f32 0.0, %v3201
    %v3203 = vpop.f32.mrf.mxu0
    %3204 = vmatprep.mubr.f32.mxu0 0.0
    %3205 = vmatmul.mubr.f32.gmra.mxu0 %v3107
    %v3206 = vpop.f32.mrf.mxu0
    %v3207 = vadd.f32 0.0, %v3206
    %v3208 = vpop.f32.mrf.mxu0
    %3209 = vmatprep.mubr.f32.mxu0 0.0
    %3210 = vmatmul.mubr.f32.gmra.mxu0 %v3110
    %v3211 = vpop.f32.mrf.mxu0
    %v3212 = vadd.f32 0.0, %v3211
    %v3213 = vpop.f32.mrf.mxu0
    %3214 = vmatprep.mubr.f32.mxu0 0.0
    %3215 = vmatmul.mubr.f32.gmra.mxu0 %v3113
    %v3216 = vpop.f32.mrf.mxu0
    %v3217 = vadd.f32 0.0, %v3216
    %v3218 = vpop.f32.mrf.mxu0
    %3219 = vdwg.mxu0
    %3220 = vst.msk [vmem:[#allocation3] sm:$0xff] %vm1782, %v3182
    %3221 = vst.msk [vmem:[#allocation3 + $0x8] sm:$0xff] %vm1782, %v3187
    %3222 = vst.msk [vmem:[#allocation3 + $0x10] sm:$0xff] %vm1782, %v3192
    %3223 = vst.msk [vmem:[#allocation3 + $0x18] sm:$0xff] %vm1782, %v3197
    %3224 = vst.msk [vmem:[#allocation3 + $0x20] sm:$0xff] %vm1782, %v3202
    %3225 = vst.msk [vmem:[#allocation3 + $0x28] sm:$0xff] %vm1782, %v3207
    %3226 = vst.msk [vmem:[#allocation3 + $0x30] sm:$0xff] %vm1782, %v3212
    %3227 = vst.msk [vmem:[#allocation3 + $0x38] sm:$0xff] %vm1782, %v3217
    %3229 = vrot.lane.b32.xlu0 %v3016, 64
    %v3230 = vpop.permute.xlu0 %3229
    %v3232 = vmul.f32 %v3012, %v3230
    %v3234 = vsel %vm1782, %v3232, 0
    %3236 = vmatprep.subr.mxu0 0.0
    %3237 = vmatpush1.msra.mxu0 0.0
    %3238 = vmatprep.subr.mxu0 0.0
    %3239 = vmatpush1.msra.mxu0 0.0
    %3240 = vmatprep.subr.mxu0 0.0
    %3241 = vmatpush1.msra.mxu0 0.0
    %3242 = vmatprep.subr.mxu0 0.0
    %3243 = vmatpush1.msra.mxu0 0.0
    %3244 = vmatprep.subr.mxu0 0.0
    %3245 = vmatpush1.msra.mxu0 0.0
    %3246 = vmatprep.subr.mxu0 0.0
    %3247 = vmatpush1.msra.mxu0 0.0
    %3248 = vmatprep.subr.mxu0 0.0
    %3249 = vmatpush1.msra.mxu0 0.0
    %3250 = vmatprep.subr.mxu0 0.0
    %3251 = vmatpush1.msra.mxu0 0.0
    %3252 = vmatprep.subr.mxu0 0.0
    %3253 = vmatpush1.msra.mxu0 %v3011
    %3254 = vmatprep.subr.mxu0 0.0
    %3255 = vmatpush1.msra.mxu0 %v3010
    %3256 = vmatprep.subr.mxu0 0.0
    %3257 = vmatpush1.msra.mxu0 %v3009
    %3258 = vmatprep.subr.mxu0 0.0
    %3259 = vmatpush1.msra.mxu0 %v3008
    %3260 = vmatprep.subr.mxu0 0.0
    %3261 = vmatpush1.msra.mxu0 %v3007
    %3262 = vmatprep.subr.mxu0 0.0
    %3263 = vmatpush1.msra.mxu0 %v3006
    %3264 = vmatprep.subr.mxu0 0.0
    %3265 = vmatpush1.msra.mxu0 %v3005
    %3266 = vmatprep.subr.mxu0 0.0
    %3267 = vmatpush1.msra.mxu0 %v3004
    %3268 = vmatprep.subr.mxu0 0.0
    %3269 = vmatpush2.msra.mxu0 0.0
    %3270 = vmatprep.subr.mxu0 0.0
    %3271 = vmatpush2.msra.mxu0 0.0
    %3272 = vmatprep.subr.mxu0 0.0
    %3273 = vmatpush2.msra.mxu0 0.0
    %3274 = vmatprep.subr.mxu0 0.0
    %3275 = vmatpush2.msra.mxu0 0.0
    %3276 = vmatprep.subr.mxu0 0.0
    %3277 = vmatpush2.msra.mxu0 0.0
    %3278 = vmatprep.subr.mxu0 0.0
    %3279 = vmatpush2.msra.mxu0 0.0
    %3280 = vmatprep.subr.mxu0 0.0
    %3281 = vmatpush2.msra.mxu0 0.0
    %3282 = vmatprep.subr.mxu0 0.0
    %3283 = vmatpush2.msra.mxu0 0.0
    %3284 = vmatprep.subr.mxu0 0.0
    %3285 = vmatpush2.msra.mxu0 0.0
    %3286 = vmatprep.subr.mxu0 0.0
    %3287 = vmatpush2.msra.mxu0 0.0
    %3288 = vmatprep.subr.mxu0 0.0
    %3289 = vmatpush2.msra.mxu0 0.0
    %3290 = vmatprep.subr.mxu0 0.0
    %3291 = vmatpush2.msra.mxu0 0.0
    %3292 = vmatprep.subr.mxu0 0.0
    %3293 = vmatpush2.msra.mxu0 0.0
    %3294 = vmatprep.subr.mxu0 0.0
    %3295 = vmatpush2.msra.mxu0 0.0
    %3296 = vmatprep.subr.mxu0 0.0
    %3297 = vmatpush2.msra.mxu0 0.0
    %3298 = vmatprep.subr.mxu0 0.0
    %3299 = vmatpush2.msra.mxu0 0.0
    %3300 = vmatprep.mubr.f32.mxu0 0.0
    %3301 = vmatmul.mubr.f32.gmra.mxu0 %v3234
    %v3302 = vpop.f32.mrf.mxu0
    %v3303 = vadd.f32 0.0, %v3302
    %v3304 = vpop.f32.mrf.mxu0
    %3305 = vdwg.mxu0
    %3306 = vmatprep.subr.mxu0 0.0
    %3307 = vmatpush1.msra.mxu0 0.0
    %3308 = vmatprep.subr.mxu0 0.0
    %3309 = vmatpush1.msra.mxu0 0.0
    %3310 = vmatprep.subr.mxu0 0.0
    %3311 = vmatpush1.msra.mxu0 0.0
    %3312 = vmatprep.subr.mxu0 0.0
    %3313 = vmatpush1.msra.mxu0 0.0
    %3314 = vmatprep.subr.mxu0 0.0
    %3315 = vmatpush1.msra.mxu0 0.0
    %3316 = vmatprep.subr.mxu0 0.0
    %3317 = vmatpush1.msra.mxu0 0.0
    %3318 = vmatprep.subr.mxu0 0.0
    %3319 = vmatpush1.msra.mxu0 0.0
    %3320 = vmatprep.subr.mxu0 0.0
    %3321 = vmatpush1.msra.mxu0 0.0
    %3322 = vmatprep.subr.mxu0 0.0
    %3323 = vmatpush1.msra.mxu0 0.0
    %3324 = vmatprep.subr.mxu0 0.0
    %3325 = vmatpush1.msra.mxu0 0.0
    %3326 = vmatprep.subr.mxu0 0.0
    %3327 = vmatpush1.msra.mxu0 0.0
    %3328 = vmatprep.subr.mxu0 0.0
    %3329 = vmatpush1.msra.mxu0 0.0
    %3330 = vmatprep.subr.mxu0 0.0
    %3331 = vmatpush1.msra.mxu0 0.0
    %3332 = vmatprep.subr.mxu0 0.0
    %3333 = vmatpush1.msra.mxu0 0.0
    %3334 = vmatprep.subr.mxu0 0.0
    %3335 = vmatpush1.msra.mxu0 0.0
    %3336 = vmatprep.subr.mxu0 0.0
    %3337 = vmatpush1.msra.mxu0 %v3303
    %3338 = vmatprep.subr.mxu0 0.0
    %3339 = vmatpush2.msra.mxu0 0.0
    %3340 = vmatprep.subr.mxu0 0.0
    %3341 = vmatpush2.msra.mxu0 0.0
    %3342 = vmatprep.subr.mxu0 0.0
    %3343 = vmatpush2.msra.mxu0 0.0
    %3344 = vmatprep.subr.mxu0 0.0
    %3345 = vmatpush2.msra.mxu0 0.0
    %3346 = vmatprep.subr.mxu0 0.0
    %3347 = vmatpush2.msra.mxu0 0.0
    %3348 = vmatprep.subr.mxu0 0.0
    %3349 = vmatpush2.msra.mxu0 0.0
    %3350 = vmatprep.subr.mxu0 0.0
    %3351 = vmatpush2.msra.mxu0 0.0
    %3352 = vmatprep.subr.mxu0 0.0
    %3353 = vmatpush2.msra.mxu0 0.0
    %3354 = vmatprep.subr.mxu0 0.0
    %3355 = vmatpush2.msra.mxu0 0.0
    %3356 = vmatprep.subr.mxu0 0.0
    %3357 = vmatpush2.msra.mxu0 0.0
    %3358 = vmatprep.subr.mxu0 0.0
    %3359 = vmatpush2.msra.mxu0 0.0
    %3360 = vmatprep.subr.mxu0 0.0
    %3361 = vmatpush2.msra.mxu0 0.0
    %3362 = vmatprep.subr.mxu0 0.0
    %3363 = vmatpush2.msra.mxu0 0.0
    %3364 = vmatprep.subr.mxu0 0.0
    %3365 = vmatpush2.msra.mxu0 0.0
    %3366 = vmatprep.subr.mxu0 0.0
    %3367 = vmatpush2.msra.mxu0 0.0
    %3368 = vmatprep.subr.mxu0 0.0
    %3369 = vmatpush2.msra.mxu0 0.0
    %3370 = vmatprep.mubr.f32.mxu0 0.0
    %3371 = vmatmul.mubr.f32.gmra.mxu0 %v3092
    %v3372 = vpop.f32.mrf.mxu0
    %v3373 = vadd.f32 0.0, %v3372
    %v3374 = vpop.f32.mrf.mxu0
    %3375 = vmatprep.mubr.f32.mxu0 0.0
    %3376 = vmatmul.mubr.f32.gmra.mxu0 %v3095
    %v3377 = vpop.f32.mrf.mxu0
    %v3378 = vadd.f32 0.0, %v3377
    %v3379 = vpop.f32.mrf.mxu0
    %3380 = vmatprep.mubr.f32.mxu0 0.0
    %3381 = vmatmul.mubr.f32.gmra.mxu0 %v3098
    %v3382 = vpop.f32.mrf.mxu0
    %v3383 = vadd.f32 0.0, %v3382
    %v3384 = vpop.f32.mrf.mxu0
    %3385 = vmatprep.mubr.f32.mxu0 0.0
    %3386 = vmatmul.mubr.f32.gmra.mxu0 %v3101
    %v3387 = vpop.f32.mrf.mxu0
    %v3388 = vadd.f32 0.0, %v3387
    %v3389 = vpop.f32.mrf.mxu0
    %3390 = vmatprep.mubr.f32.mxu0 0.0
    %3391 = vmatmul.mubr.f32.gmra.mxu0 %v3104
    %v3392 = vpop.f32.mrf.mxu0
    %v3393 = vadd.f32 0.0, %v3392
    %v3394 = vpop.f32.mrf.mxu0
    %3395 = vmatprep.mubr.f32.mxu0 0.0
    %3396 = vmatmul.mubr.f32.gmra.mxu0 %v3107
    %v3397 = vpop.f32.mrf.mxu0
    %v3398 = vadd.f32 0.0, %v3397
    %v3399 = vpop.f32.mrf.mxu0
    %3400 = vmatprep.mubr.f32.mxu0 0.0
    %3401 = vmatmul.mubr.f32.gmra.mxu0 %v3110
    %v3402 = vpop.f32.mrf.mxu0
    %v3403 = vadd.f32 0.0, %v3402
    %v3404 = vpop.f32.mrf.mxu0
    %3405 = vmatprep.mubr.f32.mxu0 0.0
    %3406 = vmatmul.mubr.f32.gmra.mxu0 %v3113
    %v3407 = vpop.f32.mrf.mxu0
    %v3408 = vadd.f32 0.0, %v3407
    %v3409 = vpop.f32.mrf.mxu0
    %3410 = vdwg.mxu0
    %s3411 = scalar_lea.vmem [#allocation3], 64
    %3412 = vst.msk [vmem:[%s3411] sm:$0xff] %vm1782, %v3373
    %3413 = vst.msk [vmem:[%s3411 + $0x8] sm:$0xff] %vm1782, %v3378
    %3414 = vst.msk [vmem:[%s3411 + $0x10] sm:$0xff] %vm1782, %v3383
    %3415 = vst.msk [vmem:[%s3411 + $0x18] sm:$0xff] %vm1782, %v3388
    %3416 = vst.msk [vmem:[%s3411 + $0x20] sm:$0xff] %vm1782, %v3393
    %3417 = vst.msk [vmem:[%s3411 + $0x28] sm:$0xff] %vm1782, %v3398
    %3418 = vst.msk [vmem:[%s3411 + $0x30] sm:$0xff] %vm1782, %v3403
    %3419 = vst.msk [vmem:[%s3411 + $0x38] sm:$0xff] %vm1782, %v3408
    // Predicated region
    $region58: #{tpu_custom_call.1} parent=1 // pred_check
      _
    $region59: #{tpu_custom_call.1} parent=1 // pred_check_branch
      %3421 = sbr.rel (0) target = $region61
    $region60: #{tpu_custom_call.1} parent=1 // pred_region
      %s3423 = ssub.s32 2048, 2048
      %3424 = vsyncadd [#allocation4], %s3423
      %s3425 = sshll.u32 [#allocation3], 4
      %s3426 = int_to_ptr.vmem [resolvable:$true] %s3425
      %3431 = dma.vmem_to_hbm [thread:$0]  %s3426, 2048, %s14, [#allocation4], 128, 128, 8
    $region61: #{tpu_custom_call.1} parent=1 // pred_fallthru
      _
    // Predicated region
    $region62: #{tpu_custom_call.1} parent=1 // pred_check
      _
    $region63: #{tpu_custom_call.1} parent=1 // pred_check_branch
      %3433 = sbr.rel (0) target = $region65
    $region64: #{tpu_custom_call.1} parent=1 // pred_region
      %3434 = dma.done [#allocation4], 2048
    $region65: #{tpu_custom_call.1} parent=1 // pred_fallthru
      _
    %3435 = vsyncpa [#allocation4], 1

</llo_original>
